<compile_context>
chip_gen: v7x
topology: tpu7x:2x2x1
jax: 0.10.0
libtpu: 0.0.40
codegen_flags: <defaults>
</compile_context>

<pallas_src>
import functools

import numpy as np
import jax
import jax.numpy as jnp
from jax import lax
from jax.experimental import pallas as pl
from jax.experimental.pallas import tpu as pltpu

KERNEL_SIZE = 15
RADIUS = KERNEL_SIZE // 2          # 7
THRESHOLD = 0.6
HALO = 8                           # row halo per side (>= RADIUS, multiple of 8)
ROW_OFF = HALO - RADIUS            # window-local row of tap ky=0 for output row 0
MAX_TILE_H = 256                   # fills the 256-wide MXU rows on v6e/v7x
MAX_TILE_W = 256                   # output lane tile


def _round_up(a, b):
    return (a + b - 1) // b * b


def _make_soft_erosion_weight(kernel_size=KERNEL_SIZE):
    """Deterministic weight, identical to the torch __init__ construction."""
    r = kernel_size // 2
    idx = np.arange(kernel_size, dtype=np.float32)
    y_idx, x_idx = np.meshgrid(idx, idx, indexing="ij")   # torch.meshgrid default
    dist = np.sqrt((x_idx - r) ** 2 + (y_idx - r) ** 2).astype(np.float32)
    kernel = dist.max() - dist
    return (kernel / kernel.sum()).astype(np.float32)     # (K, K)


WEIGHT = _make_soft_erosion_weight()


@functools.lru_cache(maxsize=None)
def _toeplitz_band(tile_w, wpt):
    """Shared banded Toeplitz: T[ky, d, w] = WEIGHT[ky, d - w] for 0 <= d-w < K."""
    T = np.zeros((KERNEL_SIZE, wpt, tile_w), np.float32)
    for w in range(tile_w):
        T[:, w:w + KERNEL_SIZE, w] = WEIGHT
    return T


# ---------------------------------------------------------------------------
# Conv kernel: manual halo-window DMA (double buffered over W tiles) +
# 15 per-ky MXU matmuls against the shared W-tiled Toeplitz band +
# per-tile masked max.
# ---------------------------------------------------------------------------
def _conv_kernel(xpad_hbm, topl_ref, xconv_ref, tmax_ref, win_buf, sem, *,
                 tile_h, tile_w, wpt, n_wt, valid_h, valid_w):
    b = pl.program_id(0)
    ht = pl.program_id(1)
    wt = pl.program_id(2)
    win_rows = tile_h + 2 * HALO

    def window_copy(wt_idx, slot):
        src = xpad_hbm.at[b, pl.ds(ht * tile_h, win_rows),
                          pl.ds(wt_idx * tile_w, wpt)]
        return pltpu.make_async_copy(src, win_buf.at[slot], sem.at[slot])

    # Prime the first window of this row-stripe.  wt runs 0..n_wt-1 in order on
    # a single core (the innermost axis is "arbitrary", never megacore-split).
    @pl.when(wt == 0)
    def _():
        window_copy(wt, 0).start()

    slot = wt & 1
    window_copy(wt, slot).wait()

    # Prefetch the next W-tile's window while computing on the current one.
    @pl.when(wt + 1 < n_wt)
    def _():
        window_copy(wt + 1, 1 - slot).start()

    cur = win_buf.at[slot]

    # 15x15 conv = 15 MXU matmuls: vertical taps are cheap sublane-offset reads,
    # horizontal taps are folded into the banded-Toeplitz contraction.
    # Accumulate as a value (single store), reuse the value for the tile max.
    acc = jnp.dot(cur[pl.ds(ROW_OFF, tile_h), :], topl_ref[0],
                  preferred_element_type=jnp.float32)
    for ky in range(1, KERNEL_SIZE):
        acc = acc + jnp.dot(cur[pl.ds(ky + ROW_OFF, tile_h), :], topl_ref[ky],
                            preferred_element_type=jnp.float32)
    xconv_ref[0, :, :] = acc

    # Per-tile max over valid (non-padded), non-masked (< threshold) elements.
    rows = lax.broadcasted_iota(jnp.int32, acc.shape, 0)
    cols = lax.broadcasted_iota(jnp.int32, acc.shape, 1)
    keep = ((rows < valid_h - ht * tile_h) & (cols < valid_w - wt * tile_w)
            & (acc < jnp.float32(THRESHOLD)))
    m = jnp.max(jnp.where(keep, acc, -jnp.inf), keepdims=True)       # (1, 1)
    tmax_ref[0, 0] = jnp.broadcast_to(m, (1, 128))                   # lane-dense store


def _conv_pass(x3, *, tile_h, n_ht, tile_w, n_wt, wpt):
    B, H, W = x3.shape
    h_al = n_ht * tile_h
    wp_full = (n_wt - 1) * tile_w + wpt
    win_rows = tile_h + 2 * HALO

    # Zero-pad once; overlapping (row, lane) halo windows are DMA'd straight
    # from this HBM array inside the kernel (no wrapper-side window stacking).
    xpad = jnp.pad(x3, ((0, 0),
                        (HALO, h_al - H + HALO),
                        (RADIUS, wp_full - RADIUS - W)))
    topl = jnp.asarray(_toeplitz_band(tile_w, wpt))                  # (K, wpt, tile_w)

    flops = 2 * KERNEL_SIZE * B * n_ht * n_wt * tile_h * wpt * tile_w
    bytes_accessed = 4 * (B * n_ht * n_wt * win_rows * wpt
                          + KERNEL_SIZE * wpt * tile_w
                          + B * h_al * n_wt * tile_w
                          + B * n_ht * n_wt * 128)
    vmem_bytes = 4 * (2 * KERNEL_SIZE * wpt * tile_w    # Toeplitz (double-buffered)
                      + 2 * win_rows * wpt              # window scratch (2 slots)
                      + 2 * tile_h * tile_w             # output block (double-buffered)
                      + 2 * tile_h * wpt                # lhs / acc temporaries
                      + 2 * 128)
    vmem_limit = int(min(64 << 20, max(32 << 20, 2 * vmem_bytes)))

    kernel = functools.partial(_conv_kernel, tile_h=tile_h, tile_w=tile_w,
                               wpt=wpt, n_wt=n_wt, valid_h=H, valid_w=W)
    xconv, tmax = pl.pallas_call(
        kernel,
        grid=(B, n_ht, n_wt),
        in_specs=[
            pl.BlockSpec(memory_space=pl.ANY),           # padded input stays in HBM
            pl.BlockSpec((KERNEL_SIZE, wpt, tile_w), lambda b, ht, wt: (0, 0, 0)),
        ],
        out_specs=(
            pl.BlockSpec((1, tile_h, tile_w), lambda b, ht, wt: (b, ht, wt)),
            pl.BlockSpec((1, 1, 1, 128), lambda b, ht, wt: (b, ht * n_wt + wt, 0, 0)),
        ),
        out_shape=(
            jax.ShapeDtypeStruct((B, h_al, n_wt * tile_w), jnp.float32),
            jax.ShapeDtypeStruct((B, n_ht * n_wt, 1, 128), jnp.float32),
        ),
        scratch_shapes=[
            pltpu.VMEM((2, win_rows, wpt), jnp.float32),
            pltpu.SemaphoreType.DMA((2,)),
        ],
        compiler_params=pltpu.CompilerParams(
            dimension_semantics=("parallel", "parallel", "arbitrary"),
            vmem_limit_bytes=vmem_limit),
        cost_estimate=pl.CostEstimate(flops=flops, transcendentals=0,
                                      bytes_accessed=bytes_accessed),
    )(xpad, topl)
    return xconv, tmax


# ---------------------------------------------------------------------------
# Public wrapper: SoftErosion(kernel_size=15, threshold=0.6, iterations).forward
# ---------------------------------------------------------------------------
@functools.partial(jax.jit, static_argnames=("iterations",))
def soft_erosion(x_nchw, *, iterations=1):
    x = x_nchw.astype(jnp.float32)
    B, C, H, W = x.shape
    assert C == 1, "grouped conv with weight (1,1,K,K) requires a single channel"

    # Balanced row tiles (multiple of 8, <= MAX_TILE_H) and lane tiles (mult of 128).
    n_ht = -(-H // MAX_TILE_H)
    tile_h = _round_up(-(-H // n_ht), 8)
    n_ht = -(-H // tile_h)
    tile_w = min(MAX_TILE_W, _round_up(W, 128))
    n_wt = -(-W // tile_w)
    wpt = _round_up(tile_w + 2 * RADIUS, 128)             # lane-aligned contraction

    cur = x[:, 0]                                          # (B, H, W)
    xconv = tmax = None
    for it in range(iterations):
        xconv, tmax = _conv_pass(cur, tile_h=tile_h, n_ht=n_ht,
                                 tile_w=tile_w, n_wt=n_wt, wpt=wpt)
        if it < iterations - 1:
            cur = jnp.minimum(cur, xconv[:, :H, :W])

    # Tiny global max over per-tile maxima (+ all-masked guard).
    gmax = jnp.max(tmax)
    gmax = jnp.where(jnp.isfinite(gmax), gmax, jnp.float32(1.0))

    # Finalize fused in XLA: one read of xconv, unpadded writes of out/mask.
    conv = xconv[:, :H, :W]
    mask = conv >= jnp.float32(THRESHOLD)
    out = jnp.where(mask, jnp.float32(1.0), conv / gmax)
    return out[:, None], mask[:, None]                     # (B,1,H,W) f32 / bool


# ---------------------------------------------------------------------------
# Verification helpers
# ---------------------------------------------------------------------------
def _reference(x_nchw, iterations=1):
    """Pure-JAX reference of the torch forward pass."""
    x = x_nchw.astype(jnp.float32)
    w = jnp.asarray(WEIGHT).reshape(1, 1, KERNEL_SIZE, KERNEL_SIZE)

    def conv(z):
        return lax.conv_general_dilated(
            z, w, (1, 1), [(RADIUS, RADIUS), (RADIUS, RADIUS)],
            dimension_numbers=("NCHW", "OIHW", "NCHW"))

    for _ in range(iterations - 1):
        x = jnp.minimum(x, conv(x))
    x = conv(x)
    mask = x >= THRESHOLD
    nm_max = jnp.max(jnp.where(mask, -jnp.inf, x))
    nm_max = jnp.where(jnp.isfinite(nm_max), nm_max, 1.0)
    out = jnp.where(mask, 1.0, x / nm_max)
    return out, mask, x


def _check(x, out, mask, iterations=1):
    ref_out, ref_mask, ref_conv = _reference(x, iterations)
    out_np, mask_np = np.asarray(out), np.asarray(mask)
    ref_out_np, ref_mask_np = np.asarray(ref_out), np.asarray(ref_mask)
    # Ignore elements whose conv value sits exactly on the threshold boundary
    # (sum-order differences between the MXU matmul and the library conv).
    safe = np.abs(np.asarray(ref_conv) - THRESHOLD) > 1e-3
    np.testing.assert_allclose(out_np[safe], ref_out_np[safe], rtol=1e-4, atol=1e-4)
    assert np.array_equal(mask_np[safe], ref_mask_np[safe])
    assert out_np.shape == x.shape and mask_np.dtype == np.bool_


if __name__ == "__main__":
    # Case 1: module-like small shape (single tile each way, W padded 16 -> 128).
    x1 = jax.random.uniform(jax.random.PRNGKey(0), (2, 1, 16, 16), dtype=jnp.float32)
    out1, mask1 = soft_erosion(x1)
    jax.block_until_ready((out1, mask1))
    _check(x1, out1, mask1)

    # Case 2: multi-tile path in both H and W (2x2 tiles, exercises the
    # in-kernel window DMA double buffering / prefetch across W tiles).
    x2 = jax.random.uniform(jax.random.PRNGKey(1), (1, 1, 300, 260), dtype=jnp.float32)
    out2, mask2 = soft_erosion(x2)
    jax.block_until_ready((out2, mask2))
    _check(x2, out2, mask2)

    # Case 3: iterations > 1 (conv pass re-run from the wrapper).
    x3 = jax.random.uniform(jax.random.PRNGKey(2), (1, 1, 24, 16), dtype=jnp.float32)
    out3, mask3 = soft_erosion(x3, iterations=2)
    jax.block_until_ready((out3, mask3))
    _check(x3, out3, mask3, iterations=2)

    print("KERNEL_OK")
</pallas_src>

<mosaic_0001>
module attributes {stable_mosaic.version = 11 : i64} {
  func.func @_conv_kernel(%arg0: i32, %arg1: i32, %arg2: i32, %arg3: memref<2x32x256xf32, #tpu.memory_space<any>>, %arg4: memref<15x256x128xf32, #tpu.memory_space<vmem>>, %arg5: memref<1x16x128xf32, #tpu.memory_space<vmem>>, %arg6: memref<1x1x1x128xf32, #tpu.memory_space<vmem>>, %arg7: memref<2x32x256xf32, #tpu.memory_space<vmem>>, %arg8: memref<2x!tpu.dma_semaphore, #tpu.memory_space<semaphore_mem>>) attributes {dimension_semantics = [#tpu.dimension_semantics<parallel>, #tpu.dimension_semantics<parallel>, #tpu.dimension_semantics<arbitrary>], iteration_bounds = array<i64: 2, 1, 1>, scalar_prefetch = 0 : i64, scratch_operands = 2 : i64, tpu.core_type = #tpu.core_type<tc>, window_params = [{}, {pipeline_mode = #tpu.pipeline_mode<synchronous>, transform_indices = @transform_1, window_bounds = array<i64: 15, 256, 128>}, {transform_indices = @transform_2, window_bounds = array<i64: 1, 16, 128>}, {transform_indices = @transform_3, window_bounds = array<i64: 1, 1, 1, 128>}]} {
    %c0_i32 = arith.constant 0 : i32
    %0 = arith.cmpi eq, %arg2, %c0_i32 : i32
    %1 = arith.extui %0 : i1 to i32
    %c0_i32_0 = arith.constant 0 : i32
    %2 = arith.cmpi ne, %1, %c0_i32_0 : i32
    scf.if %2 {
      %c16_i32_123 = arith.constant 16 : i32
      %149 = arith.muli %arg1, %c16_i32_123 : i32
      %c128_i32_124 = arith.constant 128 : i32
      %150 = arith.muli %arg2, %c128_i32_124 : i32
      %c0_i32_125 = arith.constant 0 : i32
      %c0_i32_126 = arith.constant 0 : i32
      %151 = tpu.memref_slice %arg3[%arg0, %149, %150] : memref<2x32x256xf32, #tpu.memory_space<any>> -> memref<1x32x256xf32, #tpu.memory_space<any>>
      %152 = tpu.memref_squeeze %151 : memref<1x32x256xf32, #tpu.memory_space<any>> -> memref<32x256xf32, #tpu.memory_space<any>>
      %c0_i32_127 = arith.constant 0 : i32
      %c0_i32_128 = arith.constant 0 : i32
      %153 = tpu.memref_slice %arg7[%c0_i32_125, %c0_i32_127, %c0_i32_128] : memref<2x32x256xf32, #tpu.memory_space<vmem>> -> memref<1x32x256xf32, #tpu.memory_space<vmem>>
      %154 = tpu.memref_squeeze %153 : memref<1x32x256xf32, #tpu.memory_space<vmem>> -> memref<32x256xf32, #tpu.memory_space<vmem>>
      %155 = tpu.memref_slice %arg8[%c0_i32_126] : memref<2x!tpu.dma_semaphore, #tpu.memory_space<semaphore_mem>> -> memref<1x!tpu.dma_semaphore, #tpu.memory_space<semaphore_mem>>
      %156 = tpu.memref_squeeze %155 : memref<1x!tpu.dma_semaphore, #tpu.memory_space<semaphore_mem>> -> memref<!tpu.dma_semaphore, #tpu.memory_space<semaphore_mem>>
      tpu.enqueue_dma source(%152 : memref<32x256xf32, #tpu.memory_space<any>>) target(%154 : memref<32x256xf32, #tpu.memory_space<vmem>>) target_semaphore(%156 : memref<!tpu.dma_semaphore, #tpu.memory_space<semaphore_mem>>)
    } else {
    }
    %c1_i32 = arith.constant 1 : i32
    %3 = arith.andi %arg2, %c1_i32 : i32
    %c16_i32 = arith.constant 16 : i32
    %4 = arith.muli %arg1, %c16_i32 : i32
    %c128_i32 = arith.constant 128 : i32
    %5 = arith.muli %arg2, %c128_i32 : i32
    %6 = tpu.memref_slice %arg3[%arg0, %4, %5] : memref<2x32x256xf32, #tpu.memory_space<any>> -> memref<1x32x256xf32, #tpu.memory_space<any>>
    %7 = tpu.memref_squeeze %6 : memref<1x32x256xf32, #tpu.memory_space<any>> -> memref<32x256xf32, #tpu.memory_space<any>>
    %c0_i32_1 = arith.constant 0 : i32
    %c0_i32_2 = arith.constant 0 : i32
    %8 = tpu.memref_slice %arg7[%3, %c0_i32_1, %c0_i32_2] : memref<2x32x256xf32, #tpu.memory_space<vmem>> -> memref<1x32x256xf32, #tpu.memory_space<vmem>>
    %9 = tpu.memref_squeeze %8 : memref<1x32x256xf32, #tpu.memory_space<vmem>> -> memref<32x256xf32, #tpu.memory_space<vmem>>
    %10 = tpu.memref_slice %arg8[%3] : memref<2x!tpu.dma_semaphore, #tpu.memory_space<semaphore_mem>> -> memref<1x!tpu.dma_semaphore, #tpu.memory_space<semaphore_mem>>
    %11 = tpu.memref_squeeze %10 : memref<1x!tpu.dma_semaphore, #tpu.memory_space<semaphore_mem>> -> memref<!tpu.dma_semaphore, #tpu.memory_space<semaphore_mem>>
    tpu.wait_dma2 semaphore(%11 : memref<!tpu.dma_semaphore, #tpu.memory_space<semaphore_mem>>) src(%7 : memref<32x256xf32, #tpu.memory_space<any>>) dst(%9 : memref<32x256xf32, #tpu.memory_space<vmem>>)
    %c1_i32_3 = arith.constant 1 : i32
    %12 = arith.addi %arg2, %c1_i32_3 : i32
    %c1_i32_4 = arith.constant 1 : i32
    %13 = arith.cmpi slt, %12, %c1_i32_4 : i32
    %14 = arith.extui %13 : i1 to i32
    %c0_i32_5 = arith.constant 0 : i32
    %15 = arith.cmpi ne, %14, %c0_i32_5 : i32
    scf.if %15 {
      %c1_i32_123 = arith.constant 1 : i32
      %149 = arith.addi %arg2, %c1_i32_123 : i32
      %c1_i32_124 = arith.constant 1 : i32
      %150 = arith.subi %c1_i32_124, %3 : i32
      %c16_i32_125 = arith.constant 16 : i32
      %151 = arith.muli %arg1, %c16_i32_125 : i32
      %c128_i32_126 = arith.constant 128 : i32
      %152 = arith.muli %149, %c128_i32_126 : i32
      %153 = tpu.memref_slice %arg3[%arg0, %151, %152] : memref<2x32x256xf32, #tpu.memory_space<any>> -> memref<1x32x256xf32, #tpu.memory_space<any>>
      %154 = tpu.memref_squeeze %153 : memref<1x32x256xf32, #tpu.memory_space<any>> -> memref<32x256xf32, #tpu.memory_space<any>>
      %c0_i32_127 = arith.constant 0 : i32
      %c0_i32_128 = arith.constant 0 : i32
      %155 = tpu.memref_slice %arg7[%150, %c0_i32_127, %c0_i32_128] : memref<2x32x256xf32, #tpu.memory_space<vmem>> -> memref<1x32x256xf32, #tpu.memory_space<vmem>>
      %156 = tpu.memref_squeeze %155 : memref<1x32x256xf32, #tpu.memory_space<vmem>> -> memref<32x256xf32, #tpu.memory_space<vmem>>
      %157 = tpu.memref_slice %arg8[%150] : memref<2x!tpu.dma_semaphore, #tpu.memory_space<semaphore_mem>> -> memref<1x!tpu.dma_semaphore, #tpu.memory_space<semaphore_mem>>
      %158 = tpu.memref_squeeze %157 : memref<1x!tpu.dma_semaphore, #tpu.memory_space<semaphore_mem>> -> memref<!tpu.dma_semaphore, #tpu.memory_space<semaphore_mem>>
      tpu.enqueue_dma source(%154 : memref<32x256xf32, #tpu.memory_space<any>>) target(%156 : memref<32x256xf32, #tpu.memory_space<vmem>>) target_semaphore(%158 : memref<!tpu.dma_semaphore, #tpu.memory_space<semaphore_mem>>)
    } else {
    }
    %c0_i32_6 = arith.constant 0 : i32
    %c0_i32_7 = arith.constant 0 : i32
    %16 = tpu.memref_slice %arg7[%3, %c0_i32_6, %c0_i32_7] : memref<2x32x256xf32, #tpu.memory_space<vmem>> -> memref<1x32x256xf32, #tpu.memory_space<vmem>>
    %17 = tpu.memref_squeeze %16 : memref<1x32x256xf32, #tpu.memory_space<vmem>> -> memref<32x256xf32, #tpu.memory_space<vmem>>
    %c1 = arith.constant 1 : index
    %c0 = arith.constant 0 : index
    %18 = vector.load %17[%c1, %c0] : memref<32x256xf32, #tpu.memory_space<vmem>>, vector<16x256xf32>
    %c0_8 = arith.constant 0 : index
    %c0_9 = arith.constant 0 : index
    %c0_10 = arith.constant 0 : index
    %19 = vector.load %arg4[%c0_8, %c0_9, %c0_10] : memref<15x256x128xf32, #tpu.memory_space<vmem>>, vector<1x256x128xf32>
    %20 = vector.shape_cast %19 : vector<1x256x128xf32> to vector<256x128xf32>
    %cst = arith.constant dense<0.000000e+00> : vector<16x128xf32>
    %21 = tpu.matmul %18, %20, %cst {dimension_numbers = #tpu.dot_dimension_numbers<[1], [0], [0], [1], [0, 0, 1, 1], [], []>} : vector<16x256xf32>, vector<256x128xf32>, vector<16x128xf32> -> vector<16x128xf32>
    %c0_i32_11 = arith.constant 0 : i32
    %c0_i32_12 = arith.constant 0 : i32
    %22 = tpu.memref_slice %arg7[%3, %c0_i32_11, %c0_i32_12] : memref<2x32x256xf32, #tpu.memory_space<vmem>> -> memref<1x32x256xf32, #tpu.memory_space<vmem>>
    %23 = tpu.memref_squeeze %22 : memref<1x32x256xf32, #tpu.memory_space<vmem>> -> memref<32x256xf32, #tpu.memory_space<vmem>>
    %c2 = arith.constant 2 : index
    %c0_13 = arith.constant 0 : index
    %24 = vector.load %23[%c2, %c0_13] : memref<32x256xf32, #tpu.memory_space<vmem>>, vector<16x256xf32>
    %c1_14 = arith.constant 1 : index
    %c0_15 = arith.constant 0 : index
    %c0_16 = arith.constant 0 : index
    %25 = vector.load %arg4[%c1_14, %c0_15, %c0_16] : memref<15x256x128xf32, #tpu.memory_space<vmem>>, vector<1x256x128xf32>
    %26 = vector.shape_cast %25 : vector<1x256x128xf32> to vector<256x128xf32>
    %cst_17 = arith.constant dense<0.000000e+00> : vector<16x128xf32>
    %27 = tpu.matmul %24, %26, %cst_17 {dimension_numbers = #tpu.dot_dimension_numbers<[1], [0], [0], [1], [0, 0, 1, 1], [], []>} : vector<16x256xf32>, vector<256x128xf32>, vector<16x128xf32> -> vector<16x128xf32>
    %28 = arith.addf %21, %27 : vector<16x128xf32>
    %c0_i32_18 = arith.constant 0 : i32
    %c0_i32_19 = arith.constant 0 : i32
    %29 = tpu.memref_slice %arg7[%3, %c0_i32_18, %c0_i32_19] : memref<2x32x256xf32, #tpu.memory_space<vmem>> -> memref<1x32x256xf32, #tpu.memory_space<vmem>>
    %30 = tpu.memref_squeeze %29 : memref<1x32x256xf32, #tpu.memory_space<vmem>> -> memref<32x256xf32, #tpu.memory_space<vmem>>
    %c3 = arith.constant 3 : index
    %c0_20 = arith.constant 0 : index
    %31 = vector.load %30[%c3, %c0_20] : memref<32x256xf32, #tpu.memory_space<vmem>>, vector<16x256xf32>
    %c2_21 = arith.constant 2 : index
    %c0_22 = arith.constant 0 : index
    %c0_23 = arith.constant 0 : index
    %32 = vector.load %arg4[%c2_21, %c0_22, %c0_23] : memref<15x256x128xf32, #tpu.memory_space<vmem>>, vector<1x256x128xf32>
    %33 = vector.shape_cast %32 : vector<1x256x128xf32> to vector<256x128xf32>
    %cst_24 = arith.constant dense<0.000000e+00> : vector<16x128xf32>
    %34 = tpu.matmul %31, %33, %cst_24 {dimension_numbers = #tpu.dot_dimension_numbers<[1], [0], [0], [1], [0, 0, 1, 1], [], []>} : vector<16x256xf32>, vector<256x128xf32>, vector<16x128xf32> -> vector<16x128xf32>
    %35 = arith.addf %28, %34 : vector<16x128xf32>
    %c0_i32_25 = arith.constant 0 : i32
    %c0_i32_26 = arith.constant 0 : i32
    %36 = tpu.memref_slice %arg7[%3, %c0_i32_25, %c0_i32_26] : memref<2x32x256xf32, #tpu.memory_space<vmem>> -> memref<1x32x256xf32, #tpu.memory_space<vmem>>
    %37 = tpu.memref_squeeze %36 : memref<1x32x256xf32, #tpu.memory_space<vmem>> -> memref<32x256xf32, #tpu.memory_space<vmem>>
    %c4 = arith.constant 4 : index
    %c0_27 = arith.constant 0 : index
    %38 = vector.load %37[%c4, %c0_27] : memref<32x256xf32, #tpu.memory_space<vmem>>, vector<16x256xf32>
    %c3_28 = arith.constant 3 : index
    %c0_29 = arith.constant 0 : index
    %c0_30 = arith.constant 0 : index
    %39 = vector.load %arg4[%c3_28, %c0_29, %c0_30] : memref<15x256x128xf32, #tpu.memory_space<vmem>>, vector<1x256x128xf32>
    %40 = vector.shape_cast %39 : vector<1x256x128xf32> to vector<256x128xf32>
    %cst_31 = arith.constant dense<0.000000e+00> : vector<16x128xf32>
    %41 = tpu.matmul %38, %40, %cst_31 {dimension_numbers = #tpu.dot_dimension_numbers<[1], [0], [0], [1], [0, 0, 1, 1], [], []>} : vector<16x256xf32>, vector<256x128xf32>, vector<16x128xf32> -> vector<16x128xf32>
    %42 = arith.addf %35, %41 : vector<16x128xf32>
    %c0_i32_32 = arith.constant 0 : i32
    %c0_i32_33 = arith.constant 0 : i32
    %43 = tpu.memref_slice %arg7[%3, %c0_i32_32, %c0_i32_33] : memref<2x32x256xf32, #tpu.memory_space<vmem>> -> memref<1x32x256xf32, #tpu.memory_space<vmem>>
    %44 = tpu.memref_squeeze %43 : memref<1x32x256xf32, #tpu.memory_space<vmem>> -> memref<32x256xf32, #tpu.memory_space<vmem>>
    %c5 = arith.constant 5 : index
    %c0_34 = arith.constant 0 : index
    %45 = vector.load %44[%c5, %c0_34] : memref<32x256xf32, #tpu.memory_space<vmem>>, vector<16x256xf32>
    %c4_35 = arith.constant 4 : index
    %c0_36 = arith.constant 0 : index
    %c0_37 = arith.constant 0 : index
    %46 = vector.load %arg4[%c4_35, %c0_36, %c0_37] : memref<15x256x128xf32, #tpu.memory_space<vmem>>, vector<1x256x128xf32>
    %47 = vector.shape_cast %46 : vector<1x256x128xf32> to vector<256x128xf32>
    %cst_38 = arith.constant dense<0.000000e+00> : vector<16x128xf32>
    %48 = tpu.matmul %45, %47, %cst_38 {dimension_numbers = #tpu.dot_dimension_numbers<[1], [0], [0], [1], [0, 0, 1, 1], [], []>} : vector<16x256xf32>, vector<256x128xf32>, vector<16x128xf32> -> vector<16x128xf32>
    %49 = arith.addf %42, %48 : vector<16x128xf32>
    %c0_i32_39 = arith.constant 0 : i32
    %c0_i32_40 = arith.constant 0 : i32
    %50 = tpu.memref_slice %arg7[%3, %c0_i32_39, %c0_i32_40] : memref<2x32x256xf32, #tpu.memory_space<vmem>> -> memref<1x32x256xf32, #tpu.memory_space<vmem>>
    %51 = tpu.memref_squeeze %50 : memref<1x32x256xf32, #tpu.memory_space<vmem>> -> memref<32x256xf32, #tpu.memory_space<vmem>>
    %c6 = arith.constant 6 : index
    %c0_41 = arith.constant 0 : index
    %52 = vector.load %51[%c6, %c0_41] : memref<32x256xf32, #tpu.memory_space<vmem>>, vector<16x256xf32>
    %c5_42 = arith.constant 5 : index
    %c0_43 = arith.constant 0 : index
    %c0_44 = arith.constant 0 : index
    %53 = vector.load %arg4[%c5_42, %c0_43, %c0_44] : memref<15x256x128xf32, #tpu.memory_space<vmem>>, vector<1x256x128xf32>
    %54 = vector.shape_cast %53 : vector<1x256x128xf32> to vector<256x128xf32>
    %cst_45 = arith.constant dense<0.000000e+00> : vector<16x128xf32>
    %55 = tpu.matmul %52, %54, %cst_45 {dimension_numbers = #tpu.dot_dimension_numbers<[1], [0], [0], [1], [0, 0, 1, 1], [], []>} : vector<16x256xf32>, vector<256x128xf32>, vector<16x128xf32> -> vector<16x128xf32>
    %56 = arith.addf %49, %55 : vector<16x128xf32>
    %c0_i32_46 = arith.constant 0 : i32
    %c0_i32_47 = arith.constant 0 : i32
    %57 = tpu.memref_slice %arg7[%3, %c0_i32_46, %c0_i32_47] : memref<2x32x256xf32, #tpu.memory_space<vmem>> -> memref<1x32x256xf32, #tpu.memory_space<vmem>>
    %58 = tpu.memref_squeeze %57 : memref<1x32x256xf32, #tpu.memory_space<vmem>> -> memref<32x256xf32, #tpu.memory_space<vmem>>
    %c7 = arith.constant 7 : index
    %c0_48 = arith.constant 0 : index
    %59 = vector.load %58[%c7, %c0_48] : memref<32x256xf32, #tpu.memory_space<vmem>>, vector<16x256xf32>
    %c6_49 = arith.constant 6 : index
    %c0_50 = arith.constant 0 : index
    %c0_51 = arith.constant 0 : index
    %60 = vector.load %arg4[%c6_49, %c0_50, %c0_51] : memref<15x256x128xf32, #tpu.memory_space<vmem>>, vector<1x256x128xf32>
    %61 = vector.shape_cast %60 : vector<1x256x128xf32> to vector<256x128xf32>
    %cst_52 = arith.constant dense<0.000000e+00> : vector<16x128xf32>
    %62 = tpu.matmul %59, %61, %cst_52 {dimension_numbers = #tpu.dot_dimension_numbers<[1], [0], [0], [1], [0, 0, 1, 1], [], []>} : vector<16x256xf32>, vector<256x128xf32>, vector<16x128xf32> -> vector<16x128xf32>
    %63 = arith.addf %56, %62 : vector<16x128xf32>
    %c0_i32_53 = arith.constant 0 : i32
    %c0_i32_54 = arith.constant 0 : i32
    %64 = tpu.memref_slice %arg7[%3, %c0_i32_53, %c0_i32_54] : memref<2x32x256xf32, #tpu.memory_space<vmem>> -> memref<1x32x256xf32, #tpu.memory_space<vmem>>
    %65 = tpu.memref_squeeze %64 : memref<1x32x256xf32, #tpu.memory_space<vmem>> -> memref<32x256xf32, #tpu.memory_space<vmem>>
    %c8 = arith.constant 8 : index
    %c0_55 = arith.constant 0 : index
    %66 = vector.load %65[%c8, %c0_55] : memref<32x256xf32, #tpu.memory_space<vmem>>, vector<16x256xf32>
    %c7_56 = arith.constant 7 : index
    %c0_57 = arith.constant 0 : index
    %c0_58 = arith.constant 0 : index
    %67 = vector.load %arg4[%c7_56, %c0_57, %c0_58] : memref<15x256x128xf32, #tpu.memory_space<vmem>>, vector<1x256x128xf32>
    %68 = vector.shape_cast %67 : vector<1x256x128xf32> to vector<256x128xf32>
    %cst_59 = arith.constant dense<0.000000e+00> : vector<16x128xf32>
    %69 = tpu.matmul %66, %68, %cst_59 {dimension_numbers = #tpu.dot_dimension_numbers<[1], [0], [0], [1], [0, 0, 1, 1], [], []>} : vector<16x256xf32>, vector<256x128xf32>, vector<16x128xf32> -> vector<16x128xf32>
    %70 = arith.addf %63, %69 : vector<16x128xf32>
    %c0_i32_60 = arith.constant 0 : i32
    %c0_i32_61 = arith.constant 0 : i32
    %71 = tpu.memref_slice %arg7[%3, %c0_i32_60, %c0_i32_61] : memref<2x32x256xf32, #tpu.memory_space<vmem>> -> memref<1x32x256xf32, #tpu.memory_space<vmem>>
    %72 = tpu.memref_squeeze %71 : memref<1x32x256xf32, #tpu.memory_space<vmem>> -> memref<32x256xf32, #tpu.memory_space<vmem>>
    %c9 = arith.constant 9 : index
    %c0_62 = arith.constant 0 : index
    %73 = vector.load %72[%c9, %c0_62] : memref<32x256xf32, #tpu.memory_space<vmem>>, vector<16x256xf32>
    %c8_63 = arith.constant 8 : index
    %c0_64 = arith.constant 0 : index
    %c0_65 = arith.constant 0 : index
    %74 = vector.load %arg4[%c8_63, %c0_64, %c0_65] : memref<15x256x128xf32, #tpu.memory_space<vmem>>, vector<1x256x128xf32>
    %75 = vector.shape_cast %74 : vector<1x256x128xf32> to vector<256x128xf32>
    %cst_66 = arith.constant dense<0.000000e+00> : vector<16x128xf32>
    %76 = tpu.matmul %73, %75, %cst_66 {dimension_numbers = #tpu.dot_dimension_numbers<[1], [0], [0], [1], [0, 0, 1, 1], [], []>} : vector<16x256xf32>, vector<256x128xf32>, vector<16x128xf32> -> vector<16x128xf32>
    %77 = arith.addf %70, %76 : vector<16x128xf32>
    %c0_i32_67 = arith.constant 0 : i32
    %c0_i32_68 = arith.constant 0 : i32
    %78 = tpu.memref_slice %arg7[%3, %c0_i32_67, %c0_i32_68] : memref<2x32x256xf32, #tpu.memory_space<vmem>> -> memref<1x32x256xf32, #tpu.memory_space<vmem>>
    %79 = tpu.memref_squeeze %78 : memref<1x32x256xf32, #tpu.memory_space<vmem>> -> memref<32x256xf32, #tpu.memory_space<vmem>>
    %c10 = arith.constant 10 : index
    %c0_69 = arith.constant 0 : index
    %80 = vector.load %79[%c10, %c0_69] : memref<32x256xf32, #tpu.memory_space<vmem>>, vector<16x256xf32>
    %c9_70 = arith.constant 9 : index
    %c0_71 = arith.constant 0 : index
    %c0_72 = arith.constant 0 : index
    %81 = vector.load %arg4[%c9_70, %c0_71, %c0_72] : memref<15x256x128xf32, #tpu.memory_space<vmem>>, vector<1x256x128xf32>
    %82 = vector.shape_cast %81 : vector<1x256x128xf32> to vector<256x128xf32>
    %cst_73 = arith.constant dense<0.000000e+00> : vector<16x128xf32>
    %83 = tpu.matmul %80, %82, %cst_73 {dimension_numbers = #tpu.dot_dimension_numbers<[1], [0], [0], [1], [0, 0, 1, 1], [], []>} : vector<16x256xf32>, vector<256x128xf32>, vector<16x128xf32> -> vector<16x128xf32>
    %84 = arith.addf %77, %83 : vector<16x128xf32>
    %c0_i32_74 = arith.constant 0 : i32
    %c0_i32_75 = arith.constant 0 : i32
    %85 = tpu.memref_slice %arg7[%3, %c0_i32_74, %c0_i32_75] : memref<2x32x256xf32, #tpu.memory_space<vmem>> -> memref<1x32x256xf32, #tpu.memory_space<vmem>>
    %86 = tpu.memref_squeeze %85 : memref<1x32x256xf32, #tpu.memory_space<vmem>> -> memref<32x256xf32, #tpu.memory_space<vmem>>
    %c11 = arith.constant 11 : index
    %c0_76 = arith.constant 0 : index
    %87 = vector.load %86[%c11, %c0_76] : memref<32x256xf32, #tpu.memory_space<vmem>>, vector<16x256xf32>
    %c10_77 = arith.constant 10 : index
    %c0_78 = arith.constant 0 : index
    %c0_79 = arith.constant 0 : index
    %88 = vector.load %arg4[%c10_77, %c0_78, %c0_79] : memref<15x256x128xf32, #tpu.memory_space<vmem>>, vector<1x256x128xf32>
    %89 = vector.shape_cast %88 : vector<1x256x128xf32> to vector<256x128xf32>
    %cst_80 = arith.constant dense<0.000000e+00> : vector<16x128xf32>
    %90 = tpu.matmul %87, %89, %cst_80 {dimension_numbers = #tpu.dot_dimension_numbers<[1], [0], [0], [1], [0, 0, 1, 1], [], []>} : vector<16x256xf32>, vector<256x128xf32>, vector<16x128xf32> -> vector<16x128xf32>
    %91 = arith.addf %84, %90 : vector<16x128xf32>
    %c0_i32_81 = arith.constant 0 : i32
    %c0_i32_82 = arith.constant 0 : i32
    %92 = tpu.memref_slice %arg7[%3, %c0_i32_81, %c0_i32_82] : memref<2x32x256xf32, #tpu.memory_space<vmem>> -> memref<1x32x256xf32, #tpu.memory_space<vmem>>
    %93 = tpu.memref_squeeze %92 : memref<1x32x256xf32, #tpu.memory_space<vmem>> -> memref<32x256xf32, #tpu.memory_space<vmem>>
    %c12 = arith.constant 12 : index
    %c0_83 = arith.constant 0 : index
    %94 = vector.load %93[%c12, %c0_83] : memref<32x256xf32, #tpu.memory_space<vmem>>, vector<16x256xf32>
    %c11_84 = arith.constant 11 : index
    %c0_85 = arith.constant 0 : index
    %c0_86 = arith.constant 0 : index
    %95 = vector.load %arg4[%c11_84, %c0_85, %c0_86] : memref<15x256x128xf32, #tpu.memory_space<vmem>>, vector<1x256x128xf32>
    %96 = vector.shape_cast %95 : vector<1x256x128xf32> to vector<256x128xf32>
    %cst_87 = arith.constant dense<0.000000e+00> : vector<16x128xf32>
    %97 = tpu.matmul %94, %96, %cst_87 {dimension_numbers = #tpu.dot_dimension_numbers<[1], [0], [0], [1], [0, 0, 1, 1], [], []>} : vector<16x256xf32>, vector<256x128xf32>, vector<16x128xf32> -> vector<16x128xf32>
    %98 = arith.addf %91, %97 : vector<16x128xf32>
    %c0_i32_88 = arith.constant 0 : i32
    %c0_i32_89 = arith.constant 0 : i32
    %99 = tpu.memref_slice %arg7[%3, %c0_i32_88, %c0_i32_89] : memref<2x32x256xf32, #tpu.memory_space<vmem>> -> memref<1x32x256xf32, #tpu.memory_space<vmem>>
    %100 = tpu.memref_squeeze %99 : memref<1x32x256xf32, #tpu.memory_space<vmem>> -> memref<32x256xf32, #tpu.memory_space<vmem>>
    %c13 = arith.constant 13 : index
    %c0_90 = arith.constant 0 : index
    %101 = vector.load %100[%c13, %c0_90] : memref<32x256xf32, #tpu.memory_space<vmem>>, vector<16x256xf32>
    %c12_91 = arith.constant 12 : index
    %c0_92 = arith.constant 0 : index
    %c0_93 = arith.constant 0 : index
    %102 = vector.load %arg4[%c12_91, %c0_92, %c0_93] : memref<15x256x128xf32, #tpu.memory_space<vmem>>, vector<1x256x128xf32>
    %103 = vector.shape_cast %102 : vector<1x256x128xf32> to vector<256x128xf32>
    %cst_94 = arith.constant dense<0.000000e+00> : vector<16x128xf32>
    %104 = tpu.matmul %101, %103, %cst_94 {dimension_numbers = #tpu.dot_dimension_numbers<[1], [0], [0], [1], [0, 0, 1, 1], [], []>} : vector<16x256xf32>, vector<256x128xf32>, vector<16x128xf32> -> vector<16x128xf32>
    %105 = arith.addf %98, %104 : vector<16x128xf32>
    %c0_i32_95 = arith.constant 0 : i32
    %c0_i32_96 = arith.constant 0 : i32
    %106 = tpu.memref_slice %arg7[%3, %c0_i32_95, %c0_i32_96] : memref<2x32x256xf32, #tpu.memory_space<vmem>> -> memref<1x32x256xf32, #tpu.memory_space<vmem>>
    %107 = tpu.memref_squeeze %106 : memref<1x32x256xf32, #tpu.memory_space<vmem>> -> memref<32x256xf32, #tpu.memory_space<vmem>>
    %c14 = arith.constant 14 : index
    %c0_97 = arith.constant 0 : index
    %108 = vector.load %107[%c14, %c0_97] : memref<32x256xf32, #tpu.memory_space<vmem>>, vector<16x256xf32>
    %c13_98 = arith.constant 13 : index
    %c0_99 = arith.constant 0 : index
    %c0_100 = arith.constant 0 : index
    %109 = vector.load %arg4[%c13_98, %c0_99, %c0_100] : memref<15x256x128xf32, #tpu.memory_space<vmem>>, vector<1x256x128xf32>
    %110 = vector.shape_cast %109 : vector<1x256x128xf32> to vector<256x128xf32>
    %cst_101 = arith.constant dense<0.000000e+00> : vector<16x128xf32>
    %111 = tpu.matmul %108, %110, %cst_101 {dimension_numbers = #tpu.dot_dimension_numbers<[1], [0], [0], [1], [0, 0, 1, 1], [], []>} : vector<16x256xf32>, vector<256x128xf32>, vector<16x128xf32> -> vector<16x128xf32>
    %112 = arith.addf %105, %111 : vector<16x128xf32>
    %c0_i32_102 = arith.constant 0 : i32
    %c0_i32_103 = arith.constant 0 : i32
    %113 = tpu.memref_slice %arg7[%3, %c0_i32_102, %c0_i32_103] : memref<2x32x256xf32, #tpu.memory_space<vmem>> -> memref<1x32x256xf32, #tpu.memory_space<vmem>>
    %114 = tpu.memref_squeeze %113 : memref<1x32x256xf32, #tpu.memory_space<vmem>> -> memref<32x256xf32, #tpu.memory_space<vmem>>
    %c15 = arith.constant 15 : index
    %c0_104 = arith.constant 0 : index
    %115 = vector.load %114[%c15, %c0_104] : memref<32x256xf32, #tpu.memory_space<vmem>>, vector<16x256xf32>
    %c14_105 = arith.constant 14 : index
    %c0_106 = arith.constant 0 : index
    %c0_107 = arith.constant 0 : index
    %116 = vector.load %arg4[%c14_105, %c0_106, %c0_107] : memref<15x256x128xf32, #tpu.memory_space<vmem>>, vector<1x256x128xf32>
    %117 = vector.shape_cast %116 : vector<1x256x128xf32> to vector<256x128xf32>
    %cst_108 = arith.constant dense<0.000000e+00> : vector<16x128xf32>
    %118 = tpu.matmul %115, %117, %cst_108 {dimension_numbers = #tpu.dot_dimension_numbers<[1], [0], [0], [1], [0, 0, 1, 1], [], []>} : vector<16x256xf32>, vector<256x128xf32>, vector<16x128xf32> -> vector<16x128xf32>
    %119 = arith.addf %112, %118 : vector<16x128xf32>
    %c0_109 = arith.constant 0 : index
    %c0_110 = arith.constant 0 : index
    %c0_111 = arith.constant 0 : index
    %120 = vector.load %arg5[%c0_109, %c0_110, %c0_111] : memref<1x16x128xf32, #tpu.memory_space<vmem>>, vector<1x16x128xf32>
    %121 = vector.shape_cast %120 : vector<1x16x128xf32> to vector<16x128xf32>
    %122 = vector.shape_cast %119 : vector<16x128xf32> to vector<1x16x128xf32>
    tpu.vector_store %arg5[%c0_109, %c0_110, %c0_111], %122 {strides = array<i32>} : memref<1x16x128xf32, #tpu.memory_space<vmem>>, vector<1x16x128xf32>,
    %123 = tpu.iota {dimensions = array<i32: 0>} : vector<16x128xi32>
    %124 = tpu.iota {dimensions = array<i32: 1>} : vector<16x128xi32>
    %c16_i32_112 = arith.constant 16 : i32
    %125 = arith.muli %arg1, %c16_i32_112 : i32
    %c16_i32_113 = arith.constant 16 : i32
    %126 = arith.subi %c16_i32_113, %125 : i32
    %127 = vector.broadcast %126 : i32 to vector<16x128xi32>
    %128 = arith.cmpi slt, %123, %127 : vector<16x128xi32>
    %c128_i32_114 = arith.constant 128 : i32
    %129 = arith.muli %arg2, %c128_i32_114 : i32
    %c16_i32_115 = arith.constant 16 : i32
    %130 = arith.subi %c16_i32_115, %129 : i32
    %131 = vector.broadcast %130 : i32 to vector<16x128xi32>
    %132 = arith.cmpi slt, %124, %131 : vector<16x128xi32>
    %133 = arith.andi %128, %132 : vector<16x128xi1>
    %cst_116 = arith.constant 6.000000e-01 : f32
    %134 = vector.broadcast %cst_116 : f32 to vector<16x128xf32>
    %135 = arith.cmpf olt, %119, %134 : vector<16x128xf32>
    %136 = arith.andi %133, %135 : vector<16x128xi1>
    %cst_117 = arith.constant 0xFF800000 : f32
    %137 = vector.broadcast %cst_117 : f32 to vector<16x128xf32>
    %138 = arith.select %136, %119, %137 : vector<16x128xi1>, vector<16x128xf32>
    %139 = vector.shape_cast %138 : vector<16x128xf32> to vector<1x16x128xf32>
    %cst_118 = arith.constant dense<0xFF800000> : vector<1xf32>
    %140 = vector.multi_reduction <maximumf>, %139, %cst_118 [1, 2] : vector<1x16x128xf32> to vector<1xf32>
    %141 = vector.shape_cast %140 : vector<1xf32> to vector<1x1x1xf32>
    %142 = vector.extract %141[0, 0, 0] : f32 from vector<1x1x1xf32>
    %143 = vector.broadcast %142 : f32 to vector<1x1xf32>
    %144 = vector.shape_cast %143 : vector<1x1xf32> to vector<1x1xf32>
    %145 = vector.broadcast %144 : vector<1x1xf32> to vector<1x128xf32>
    %c0_119 = arith.constant 0 : index
    %c0_120 = arith.constant 0 : index
    %c0_121 = arith.constant 0 : index
    %c0_122 = arith.constant 0 : index
    %146 = vector.load %arg6[%c0_119, %c0_120, %c0_121, %c0_122] : memref<1x1x1x128xf32, #tpu.memory_space<vmem>>, vector<1x1x1x128xf32>
    %147 = vector.shape_cast %146 : vector<1x1x1x128xf32> to vector<1x128xf32>
    %148 = vector.shape_cast %145 : vector<1x128xf32> to vector<1x1x1x128xf32>
    tpu.vector_store %arg6[%c0_119, %c0_120, %c0_121, %c0_122], %148 {strides = array<i32>} : memref<1x1x1x128xf32, #tpu.memory_space<vmem>>, vector<1x1x1x128xf32>,
    return
  }
  func.func @transform_1(%arg0: i32, %arg1: i32, %arg2: i32) -> (i32, i32, i32) {
    %c0_i32 = arith.constant 0 : i32
    %c0_i32_0 = arith.constant 0 : i32
    %c0_i32_1 = arith.constant 0 : i32
    %c0_i32_2 = arith.constant 0 : i32
    return %c0_i32, %c0_i32_0, %c0_i32_1 : i32, i32, i32
  }
  func.func @transform_2(%arg0: i32, %arg1: i32, %arg2: i32) -> (i32, i32, i32) {
    %c0_i32 = arith.constant 0 : i32
    return %arg0, %arg1, %arg2 : i32, i32, i32
  }
  func.func @transform_3(%arg0: i32, %arg1: i32, %arg2: i32) -> (i32, i32, i32, i32) {
    %c1_i32 = arith.constant 1 : i32
    %0 = arith.muli %arg1, %c1_i32 : i32
    %1 = arith.addi %0, %arg2 : i32
    %c0_i32 = arith.constant 0 : i32
    %c0_i32_0 = arith.constant 0 : i32
    %c0_i32_1 = arith.constant 0 : i32
    return %arg0, %1, %c0_i32, %c0_i32_0 : i32, i32, i32, i32
  }
}

</mosaic_0001>

<llo_original>
// kernel: soft_erosion.1
$region0: #{soft_erosion.1}
  #allocation0 [shape = 'u32[]', space=smem, size = 0x4, offset = 0x4, fixed_abs, tag = 'smem constant byte address 0x4 - core index']
  #allocation1 [shape = 'u32[144,128]{1,0:T(1,128)}', space=vmem, size = 0x12000, scoped, tag = 'internal scratch']
  #allocation2 [shape = 'f32[2,32,256]{2,1,0:T(8,128)}', space=vmem, size = 0x10000, scoped, tag = 'scratch operand']
  #allocation3 [shape = 's32[2]{0}', space=sflag, size = 0x8, scoped, tag = 'scratch operand']
  #allocation6 [shape = 's32[]', space=sflag, size = 0x4, offset = 0, fixed_abs, tag = 'sflag constant byte address 0x0 - dummy sync flag']
  #allocation7 [shape = 's32[]', space=sflag, size = 0x4, offset = 0, fixed_abs, tag = 'sflag constant byte address 0x0 - dummy sync flag']
  %s0 = inlined_call_operand.vmem [shape: f32[2,32,256], index: 0, kind: input, shape index: {}]
  %s1 = inlined_call_operand.hbm [shape: f32[15,256,128], index: 1, kind: input, shape index: {}]
  %s2 = inlined_call_operand.vmem [shape: f32[2,16,128], index: 2, kind: output, shape index: {0}]
  %s3 = inlined_call_operand.vmem [shape: f32[2,1,1,128], index: 3, kind: output, shape index: {1}]
  %4 = xla_tuple %s2, %s3
  %s5 = sld [smem:[#allocation0]]
  $region125: #{soft_erosion.1} parent=0
    _
  %s7 = ssub.s32 1, %s5
  %s8 = scalar_select 0, %s7, %s5
  $region1: #{soft_erosion.1} parent=0
    #allocation4 [shape = 'u8[1966080]{0}', space=vmem, size = 0x1e0000, scoped, tag = 'input window, operand 1, single buffered']
    #allocation5 [shape = 's32[2]{0}', space=sflag, size = 0x8, scoped, tag = 'scoped memory for soft_erosion.1']
    %9 = vsyncpa [#allocation5], 0
    loop: start=0, step=1, limit=4
    $region2: #{soft_erosion.1} parent=1 // loop_pre_header
      _
    $region3: #{soft_erosion.1} parent=1 // loop_header
      %s11 = sphi 0, %s15
      %p12 = scmp.ge.s32.totalorder %s11, 4
      %s18 = sphi 0, %s37
      %s19 = sphi 0, %s33
      %s20 = sphi 0, %s29
      %s21 = sphi 0, %s18
      %s22 = sphi 0, %s19
      %s23 = sphi 0, %s20
      %s24 = sphi 0, %s21
      %s25 = sphi 0, %s22
      %s26 = sphi 0, %s23
      %s38 = sphi 0, %s38
      %s40 = sphi 0, %s38
      %s41 = sphi 0, %s40
      %s55 = sphi 0, %s41
      %s65 = sphi 0, %s67
      %s68 = sphi 0, %s65
      %s69 = sphi 0, %s68
      %s85 = sphi 0, %s69
      %s95 = sphi 0, %s97
      %s98 = sphi 0, %s95
      %s99 = sphi 0, %s98
      %s115 = sphi 0, %s99
    $region4: #{soft_erosion.1} parent=1 // loop_header_branch
      %14 = sbr.rel (%p12) target = $region8
    $region5: #{soft_erosion.1} parent=1 // loop_body
      %s16 = ssub.s32 %s11, 1
      %s17 = ssub.s32 %s11, 2
      %s27 = sadd.s32 1, %s20
      %p28 = scmp.ge.s32.totalorder %s27, 1
      %s29 = scalar_select %p28, 0, %s27
      %s30 = sadd.s32 1, %s19
      %s31 = scalar_select %p28, %s30, %s19
      %p32 = scmp.ge.s32.totalorder %s31, 1
      %s33 = scalar_select %p32, 0, %s31
      %s34 = sadd.s32 1, %s18
      %s35 = scalar_select %p32, %s34, %s18
      %p36 = scmp.ge.s32.totalorder %s35, 2
      %s37 = scalar_select %p36, 0, %s35
      %s39 = sadd.s32 %s38, 1
      %p42 = scmp.eq.s32.totalorder %s11, 1
      %p43 = scmp.ne.s32.totalorder %s38, %s40
      %p44 = scmp.eq.s32.totalorder %s11, 0
      %p45 = por %p43, %p44
      %p46 = scmp.ne.s32.totalorder %s38, %s40
      %p47 = scmp.eq.s32.totalorder %s16, 1
      %p48 = por %p46, %p47
      %p49 = scmp.ne.s32.totalorder %s40, %s41
      %p50 = scmp.eq.s32.totalorder %s16, 0
      %p51 = por %p49, %p50
      %p52 = scmp.ne.s32.totalorder %s40, %s41
      %p53 = scmp.eq.s32.totalorder %s17, 1
      %p54 = por %p52, %p53
      %p56 = scmp.ne.s32.totalorder %s41, %s55
      %p57 = scmp.eq.s32.totalorder %s17, 0
      %p58 = por %p56, %p57
      %s59 = ssub.s32 %s18, %s37
      %s60 = ssub.s32 %s19, %s33
      %s61 = sor.u32 %s59, %s60
      %s62 = ssub.s32 %s20, %s29
      %s63 = sor.u32 %s61, %s62
      %p64 = scmp.eq.s32.totalorder %s63, 0
      %s66 = sadd.s32 %s65, 1
      %s67 = scalar_select %p64, %s65, %s66
      %p70 = pneg %p64
      %p71 = scmp.eq.s32.totalorder %s11, 1
      %p72 = por %p70, %p71
      %p73 = scmp.ne.s32.totalorder %s65, %s68
      %p74 = scmp.eq.s32.totalorder %s11, 0
      %p75 = por %p73, %p74
      %p76 = scmp.ne.s32.totalorder %s65, %s68
      %p77 = scmp.eq.s32.totalorder %s16, 1
      %p78 = por %p76, %p77
      %p79 = scmp.ne.s32.totalorder %s68, %s69
      %p80 = scmp.eq.s32.totalorder %s16, 0
      %p81 = por %p79, %p80
      %p82 = scmp.ne.s32.totalorder %s68, %s69
      %p83 = scmp.eq.s32.totalorder %s17, 1
      %p84 = por %p82, %p83
      %p86 = scmp.ne.s32.totalorder %s69, %s85
      %p87 = scmp.eq.s32.totalorder %s17, 0
      %p88 = por %p86, %p87
      %s89 = sadd.s32 %s19, %s20
      %s90 = sadd.s32 %s33, %s29
      %s91 = ssub.s32 %s18, %s37
      %s92 = ssub.s32 %s89, %s90
      %s93 = sor.u32 %s91, %s92
      %p94 = scmp.eq.s32.totalorder %s93, 0
      %s96 = sadd.s32 %s95, 1
      %s97 = scalar_select %p94, %s95, %s96
      %p100 = pneg %p94
      %p101 = scmp.eq.s32.totalorder %s11, 1
      %p102 = por %p100, %p101
      %p103 = scmp.ne.s32.totalorder %s95, %s98
      %p104 = scmp.eq.s32.totalorder %s11, 0
      %p105 = por %p103, %p104
      %p106 = scmp.ne.s32.totalorder %s95, %s98
      %p107 = scmp.eq.s32.totalorder %s16, 1
      %p108 = por %p106, %p107
      %p109 = scmp.ne.s32.totalorder %s98, %s99
      %p110 = scmp.eq.s32.totalorder %s16, 0
      %p111 = por %p109, %p110
      %p112 = scmp.ne.s32.totalorder %s98, %s99
      %p113 = scmp.eq.s32.totalorder %s17, 1
      %p114 = por %p112, %p113
      %p116 = scmp.ne.s32.totalorder %s99, %s115
      %p117 = scmp.eq.s32.totalorder %s17, 0
      %p118 = por %p116, %p117
      %p119 = scmp.le.s32.totalorder 1, %s11
      %p120 = scmp.lt.s32.totalorder %s11, 3
      %p121 = pnand %p119, %p120
      %p122 = pneg %p121
      // Predicated region
      $region9: #{soft_erosion.1} parent=5 // pred_check
        _
      $region10: #{soft_erosion.1} parent=5 // pred_check_branch
        %124 = sbr.rel (%p121) target = $region12
      $region11: #{soft_erosion.1} parent=5 // pred_region
        %s125 = ssub.s32 %s11, 1
        // Predicated region
        $region13: #{soft_erosion.1} parent=11 // pred_check
          %p126 = pneg %p51
        $region14: #{soft_erosion.1} parent=11 // pred_check_branch
          %128 = sbr.rel (%p126) target = $region16
        $region15: #{soft_erosion.1} parent=11 // pred_region
          %s130 = ssub.s32 61440, 61440
          %131 = vsyncadd [#allocation5], %s130
          %s132 = sshll.u32 [#allocation4], 4
          %s133 = int_to_ptr.vmem [resolvable:$true] %s132
          %138 = dma.hbm_to_vmem [thread:$0]  %s1, 61440, %s133, [#allocation5], 128, 128, 8
        $region16: #{soft_erosion.1} parent=11 // pred_fallthru
          _
      $region12: #{soft_erosion.1} parent=5 // pred_fallthru
        _
      %p139 = scmp.lt.s32.totalorder %s11, 2
      // Predicated region
      $region17: #{soft_erosion.1} parent=5 // pred_check
        %p140 = pneg %p139
      $region18: #{soft_erosion.1} parent=5 // pred_check_branch
        %142 = sbr.rel (%p140) target = $region20
      $region19: #{soft_erosion.1} parent=5 // pred_region
        _
      $region20: #{soft_erosion.1} parent=5 // pred_fallthru
        _
      %p143 = scmp.le.s32.totalorder 1, %s11
      %p144 = scmp.lt.s32.totalorder %s11, 3
      %p145 = pnand %p143, %p144
      %p146 = pneg %p145
      // Predicated region
      $region21: #{soft_erosion.1} parent=5 // pred_check
        _
      $region22: #{soft_erosion.1} parent=5 // pred_check_branch
        %148 = sbr.rel (%p145) target = $region24
      $region23: #{soft_erosion.1} parent=5 // pred_region
        %s149 = ssub.s32 %s11, 1
        // Predicated region
        $region25: #{soft_erosion.1} parent=23 // pred_check
          %p150 = pneg %p51
        $region26: #{soft_erosion.1} parent=23 // pred_check_branch
          %152 = sbr.rel (%p150) target = $region28
        $region27: #{soft_erosion.1} parent=23 // pred_region
          %153 = dma.done [#allocation5], 61440
        $region28: #{soft_erosion.1} parent=23 // pred_fallthru
          _
        %p154 = pneg %p51
        %p155 = pneg %p48
        %p156 = pneg %p81
        %p157 = pneg %p78
        %s158 = smul.u32 2, %s22
        %p159 = scmp.lt.s32.totalorder %s21, 1
        %s160 = scalar_select %p159, %s21, 1
        %p161 = scmp.lt.s32.totalorder %s158, 1
        %s162 = scalar_select %p161, %s158, 1
        %p163 = scmp.lt.s32.totalorder %s23, 0
        %s164 = scalar_select %p163, %s23, 0
        %s165 = sadd.s32 %s164, %s162
        %s166 = smul.addr %s160, 2
        %s167 = sadd.s32 %s165, %s166
        %s168 = smul.addr %s167, 8
        %s169 = scalar_lea.vmem %s2, %s168
        %p170 = pneg %p111
        %p171 = pneg %p108
        %s172 = sadd.s32 %s22, %s23
        %p173 = scmp.lt.s32.totalorder %s21, 1
        %s174 = scalar_select %p173, %s21, 1
        %p175 = scmp.lt.s32.totalorder %s172, 0
        %s176 = scalar_select %p175, %s172, 0
        %s177 = sadd.s32 %s176, %s174
        %s178 = scalar_lea.vmem %s3, %s177
        %s179 = smul.u32 2, %s22
        %p180 = scmp.lt.s32.totalorder %s21, 1
        %s181 = scalar_select %p180, %s21, 1
        %p182 = scmp.lt.s32.totalorder %s179, 1
        %s183 = scalar_select %p182, %s179, 1
        %p184 = scmp.lt.s32.totalorder %s23, 0
        %s185 = scalar_select %p184, %s23, 0
        %s186 = sadd.s32 %s185, %s183
        %s187 = smul.addr %s181, 2
        %s188 = sadd.s32 %s186, %s187
        %s189 = smul.addr %s188, 8
        %s190 = scalar_lea.vmem %s2, %s189
        %s191 = smul.u32 2, %s22
        %s192 = sadd.s32 %s22, %s23
        %p193 = scmp.lt.s32.totalorder %s21, 1
        %s194 = scalar_select %p193, %s21, 1
        %p195 = scmp.lt.s32.totalorder %s192, 0
        %s196 = scalar_select %p195, %s192, 0
        %s197 = sadd.s32 %s196, %s194
        %s198 = scalar_lea.vmem %s3, %s197
        %s199 = sadd.s32 %s22, %s23
        %p200 = scmp.eq.s32.totalorder %s23, 0
        // Predicated region
        $region29: #{soft_erosion.1} parent=23 // pred_check
          %p201 = pneg %p200
        $region30: #{soft_erosion.1} parent=23 // pred_check_branch
          %203 = sbr.rel (%p201) target = $region32
        $region31: #{soft_erosion.1} parent=23 // pred_region
          %s204 = smul.u32 %s22, 16
          %s205 = smul.u32 %s23, 128
          %s206 = sshra.s32 %s205, 7
          %s207 = sand.u32 %s205, 127
          %s208 = sshra.s32 %s204, 3
          %s209 = sand.u32 %s204, 7
          %s210 = smul.u32 %s208, 2
          %s211 = sadd.s32 %s206, %s210
          %s212 = smul.u32 %s21, 8
          %s213 = sadd.s32 %s211, %s212
          %s214 = smul.addr %s213, 8
          %s215 = scalar_lea.vmem %s0, %s214
          %p217 = scmp.lt.u32.totalorder 64, 8
          %p218 = pneg %p217
          // Predicated region
          $region33: #{soft_erosion.1} parent=31 // pred_check
            _
          $region34: #{soft_erosion.1} parent=31 // pred_check_branch
            %220 = sbr.rel (%p217) target = $region36
          $region35: #{soft_erosion.1} parent=31 // pred_region
            %s235 = sand.u32 64, 7
            %p236 = scmp.eq.s32.totalorder %s235, 0
            // Predicated region
            $region48: #{soft_erosion.1} parent=35 // pred_check
              %p237 = pneg %p236
            $region49: #{soft_erosion.1} parent=35 // pred_check_branch
              %239 = sbr.rel (%p237) target = $region51
            $region50: #{soft_erosion.1} parent=35 // pred_region
              loop: start=0, step=1, limit=1
              $region52: #{soft_erosion.1} parent=50 // loop_pre_header
                _
              $region53: #{soft_erosion.1} parent=50 // loop_header
                %s241 = sphi 0, %s245
                %p242 = scmp.ge.s32.totalorder %s241, 1
                %s246 = sphi %s215, %s215
                %s247 = sphi [#allocation2], [#allocation2]
              $region54: #{soft_erosion.1} parent=50 // loop_header_branch
                %244 = sbr.rel (%p242) target = $region58
              $region55: #{soft_erosion.1} parent=50 // loop_body
                %v248 = vld [vmem:[%s246] sm:$0xff]
                %249 = vst [vmem:[%s247] sm:$0xff] %v248
                %v250 = vld [vmem:[%s246 + $0x8] sm:$0xff]
                %251 = vst [vmem:[%s247 + $0x8] sm:$0xff] %v250
                %v252 = vld [vmem:[%s246 + $0x10] sm:$0xff]
                %253 = vst [vmem:[%s247 + $0x10] sm:$0xff] %v252
                %v254 = vld [vmem:[%s246 + $0x18] sm:$0xff]
                %255 = vst [vmem:[%s247 + $0x18] sm:$0xff] %v254
                %v256 = vld [vmem:[%s246 + $0x20] sm:$0xff]
                %257 = vst [vmem:[%s247 + $0x20] sm:$0xff] %v256
                %v258 = vld [vmem:[%s246 + $0x28] sm:$0xff]
                %259 = vst [vmem:[%s247 + $0x28] sm:$0xff] %v258
                %v260 = vld [vmem:[%s246 + $0x30] sm:$0xff]
                %261 = vst [vmem:[%s247 + $0x30] sm:$0xff] %v260
                %v262 = vld [vmem:[%s246 + $0x38] sm:$0xff]
                %263 = vst [vmem:[%s247 + $0x38] sm:$0xff] %v262
              $region56: #{soft_erosion.1} parent=50 // loop_footer
                %s245 = sadd.s32 1, %s241
              $region57: #{soft_erosion.1} parent=50 // loop_footer_branch
                %240 = sbr.rel target = $region53
              $region58: #{soft_erosion.1} parent=50 // loop_exit
                _
            $region51: #{soft_erosion.1} parent=35 // pred_fallthru
              _
            %p264 = pneg %p236
            // Predicated region
            $region59: #{soft_erosion.1} parent=35 // pred_check
              _
            $region60: #{soft_erosion.1} parent=35 // pred_check_branch
              %266 = sbr.rel (%p236) target = $region62
            $region61: #{soft_erosion.1} parent=35 // pred_region
              %s267 = sand.u32 64, 7
            $region62: #{soft_erosion.1} parent=35 // pred_fallthru
              _
          $region36: #{soft_erosion.1} parent=31 // pred_fallthru
            _
          // Predicated region
          $region37: #{soft_erosion.1} parent=31 // pred_check
            %p221 = pneg %p217
          $region38: #{soft_erosion.1} parent=31 // pred_check_branch
            %223 = sbr.rel (%p221) target = $region40
          $region39: #{soft_erosion.1} parent=31 // pred_region
            %s224 = sshllo.u32 0, 64
            loop: start=0, step=1, limit=1
            $region41: #{soft_erosion.1} parent=39 // loop_pre_header
              _
            $region42: #{soft_erosion.1} parent=39 // loop_header
              %s226 = sphi 0, %s230
              %p227 = scmp.ge.s32.totalorder %s226, 1
              %s231 = sphi %s215, %s215
              %s232 = sphi [#allocation2], [#allocation2]
            $region43: #{soft_erosion.1} parent=39 // loop_header_branch
              %229 = sbr.rel (%p227) target = $region47
            $region44: #{soft_erosion.1} parent=39 // loop_body
              %v233 = vld [vmem:[%s231] sm:%s224]
              %234 = vst [vmem:[%s232] sm:%s224] %v233
            $region45: #{soft_erosion.1} parent=39 // loop_footer
              %s230 = sadd.s32 1, %s226
            $region46: #{soft_erosion.1} parent=39 // loop_footer_branch
              %225 = sbr.rel target = $region42
            $region47: #{soft_erosion.1} parent=39 // loop_exit
              _
          $region40: #{soft_erosion.1} parent=31 // pred_fallthru
            _
          // Predicated region
          $region63: #{soft_erosion.1} parent=31 // pred_check
            _
          $region64: #{soft_erosion.1} parent=31 // pred_check_branch
            %270 = sbr.rel (0) target = $region66
          $region65: #{soft_erosion.1} parent=31 // pred_region
            %271 = vsyncadd [#allocation3], 1024
          $region66: #{soft_erosion.1} parent=31 // pred_fallthru
            _
        $region32: #{soft_erosion.1} parent=23 // pred_fallthru
          _
        %s272 = sand.u32 %s23, 1
        %s273 = smul.u32 %s22, 16
        %s274 = smul.u32 %s23, 128
        %s275 = smul.u32 %s272, 8
        %s276 = smul.addr %s275, 8
        %s277 = scalar_lea.vmem [#allocation2], %s276
        %s278 = scalar_lea.sflag [#allocation3], %s272
        %s279 = smul.u32 8, 4
        %s280 = smul.u32 %s279, 2
        %s281 = sshll.u32 %s280, 4
        %282 = dma.done %s278, %s281
        %s283 = sadd.s32 %s23, 1
        %p284 = scmp.lt.s32.totalorder %s283, 1
        // Predicated region
        $region67: #{soft_erosion.1} parent=23 // pred_check
          %p285 = pneg %p284
        $region68: #{soft_erosion.1} parent=23 // pred_check_branch
          %287 = sbr.rel (%p285) target = $region70
        $region69: #{soft_erosion.1} parent=23 // pred_region
          %s288 = ssub.s32 1, %s272
          %s289 = smul.u32 %s283, 128
          %s290 = sshra.s32 %s289, 7
          %s291 = sand.u32 %s289, 127
          %s292 = sshra.s32 %s273, 3
          %s293 = sand.u32 %s273, 7
          %s294 = smul.u32 %s292, 2
          %s295 = sadd.s32 %s290, %s294
          %s296 = smul.u32 %s21, 8
          %s297 = sadd.s32 %s295, %s296
          %s298 = smul.addr %s297, 8
          %s299 = scalar_lea.vmem %s0, %s298
          %s300 = smul.u32 %s288, 8
          %s301 = smul.addr %s300, 8
          %s302 = scalar_lea.vmem [#allocation2], %s301
          %s303 = scalar_lea.sflag [#allocation3], %s288
          %p305 = scmp.lt.u32.totalorder 64, 8
          %p306 = pneg %p305
          // Predicated region
          $region71: #{soft_erosion.1} parent=69 // pred_check
            _
          $region72: #{soft_erosion.1} parent=69 // pred_check_branch
            %308 = sbr.rel (%p305) target = $region74
          $region73: #{soft_erosion.1} parent=69 // pred_region
            %s323 = sand.u32 64, 7
            %p324 = scmp.eq.s32.totalorder %s323, 0
            // Predicated region
            $region86: #{soft_erosion.1} parent=73 // pred_check
              %p325 = pneg %p324
            $region87: #{soft_erosion.1} parent=73 // pred_check_branch
              %327 = sbr.rel (%p325) target = $region89
            $region88: #{soft_erosion.1} parent=73 // pred_region
              loop: start=0, step=1, limit=1
              $region90: #{soft_erosion.1} parent=88 // loop_pre_header
                _
              $region91: #{soft_erosion.1} parent=88 // loop_header
                %s329 = sphi 0, %s333
                %p330 = scmp.ge.s32.totalorder %s329, 1
                %s334 = sphi %s299, %s299
                %s335 = sphi %s302, %s302
              $region92: #{soft_erosion.1} parent=88 // loop_header_branch
                %332 = sbr.rel (%p330) target = $region96
              $region93: #{soft_erosion.1} parent=88 // loop_body
                %v336 = vld [vmem:[%s334] sm:$0xff]
                %337 = vst [vmem:[%s335] sm:$0xff] %v336
                %v338 = vld [vmem:[%s334 + $0x8] sm:$0xff]
                %339 = vst [vmem:[%s335 + $0x8] sm:$0xff] %v338
                %v340 = vld [vmem:[%s334 + $0x10] sm:$0xff]
                %341 = vst [vmem:[%s335 + $0x10] sm:$0xff] %v340
                %v342 = vld [vmem:[%s334 + $0x18] sm:$0xff]
                %343 = vst [vmem:[%s335 + $0x18] sm:$0xff] %v342
                %v344 = vld [vmem:[%s334 + $0x20] sm:$0xff]
                %345 = vst [vmem:[%s335 + $0x20] sm:$0xff] %v344
                %v346 = vld [vmem:[%s334 + $0x28] sm:$0xff]
                %347 = vst [vmem:[%s335 + $0x28] sm:$0xff] %v346
                %v348 = vld [vmem:[%s334 + $0x30] sm:$0xff]
                %349 = vst [vmem:[%s335 + $0x30] sm:$0xff] %v348
                %v350 = vld [vmem:[%s334 + $0x38] sm:$0xff]
                %351 = vst [vmem:[%s335 + $0x38] sm:$0xff] %v350
              $region94: #{soft_erosion.1} parent=88 // loop_footer
                %s333 = sadd.s32 1, %s329
              $region95: #{soft_erosion.1} parent=88 // loop_footer_branch
                %328 = sbr.rel target = $region91
              $region96: #{soft_erosion.1} parent=88 // loop_exit
                _
            $region89: #{soft_erosion.1} parent=73 // pred_fallthru
              _
            %p352 = pneg %p324
            // Predicated region
            $region97: #{soft_erosion.1} parent=73 // pred_check
              _
            $region98: #{soft_erosion.1} parent=73 // pred_check_branch
              %354 = sbr.rel (%p324) target = $region100
            $region99: #{soft_erosion.1} parent=73 // pred_region
              %s355 = sand.u32 64, 7
            $region100: #{soft_erosion.1} parent=73 // pred_fallthru
              _
          $region74: #{soft_erosion.1} parent=69 // pred_fallthru
            _
          // Predicated region
          $region75: #{soft_erosion.1} parent=69 // pred_check
            %p309 = pneg %p305
          $region76: #{soft_erosion.1} parent=69 // pred_check_branch
            %311 = sbr.rel (%p309) target = $region78
          $region77: #{soft_erosion.1} parent=69 // pred_region
            %s312 = sshllo.u32 0, 64
            loop: start=0, step=1, limit=1
            $region79: #{soft_erosion.1} parent=77 // loop_pre_header
              _
            $region80: #{soft_erosion.1} parent=77 // loop_header
              %s314 = sphi 0, %s318
              %p315 = scmp.ge.s32.totalorder %s314, 1
              %s319 = sphi %s299, %s299
              %s320 = sphi %s302, %s302
            $region81: #{soft_erosion.1} parent=77 // loop_header_branch
              %317 = sbr.rel (%p315) target = $region85
            $region82: #{soft_erosion.1} parent=77 // loop_body
              %v321 = vld [vmem:[%s319] sm:%s312]
              %322 = vst [vmem:[%s320] sm:%s312] %v321
            $region83: #{soft_erosion.1} parent=77 // loop_footer
              %s318 = sadd.s32 1, %s314
            $region84: #{soft_erosion.1} parent=77 // loop_footer_branch
              %313 = sbr.rel target = $region80
            $region85: #{soft_erosion.1} parent=77 // loop_exit
              _
          $region78: #{soft_erosion.1} parent=69 // pred_fallthru
            _
          // Predicated region
          $region101: #{soft_erosion.1} parent=69 // pred_check
            _
          $region102: #{soft_erosion.1} parent=69 // pred_check_branch
            %358 = sbr.rel (0) target = $region104
          $region103: #{soft_erosion.1} parent=69 // pred_region
            %359 = vsyncadd %s303, 1024
          $region104: #{soft_erosion.1} parent=69 // pred_fallthru
            _
        $region70: #{soft_erosion.1} parent=23 // pred_fallthru
          _
        %v360 = vld [vmem:[%s277] sm:$0xfe]
        %v361 = vld [vmem:[%s277 + $0x8] sm:$0xfe]
        %v362 = vld [vmem:[%s277 + $0x10] sm:$0xff]
        %v363 = vld [vmem:[%s277 + $0x18] sm:$0xff]
        %v364 = vld [vmem:[%s277 + $0x20] sm:$0x1]
        %v365 = vld [vmem:[%s277 + $0x28] sm:$0x1]
        %v366 = vld [vmem:[#allocation4] sm:$0xff]
        %v367 = vld [vmem:[#allocation4 + $0x8] sm:$0xff]
        %v368 = vld [vmem:[#allocation4 + $0x10] sm:$0xff]
        %v369 = vld [vmem:[#allocation4 + $0x18] sm:$0xff]
        %v370 = vld [vmem:[#allocation4 + $0x20] sm:$0xff]
        %v371 = vld [vmem:[#allocation4 + $0x28] sm:$0xff]
        %v372 = vld [vmem:[#allocation4 + $0x30] sm:$0xff]
        %v373 = vld [vmem:[#allocation4 + $0x38] sm:$0xff]
        %v374 = vld [vmem:[#allocation4 + $0x40] sm:$0xff]
        %v375 = vld [vmem:[#allocation4 + $0x48] sm:$0xff]
        %v376 = vld [vmem:[#allocation4 + $0x50] sm:$0xff]
        %v377 = vld [vmem:[#allocation4 + $0x58] sm:$0xff]
        %v378 = vld [vmem:[#allocation4 + $0x60] sm:$0xff]
        %v379 = vld [vmem:[#allocation4 + $0x68] sm:$0xff]
        %v380 = vld [vmem:[#allocation4 + $0x70] sm:$0xff]
        %v381 = vld [vmem:[#allocation4 + $0x78] sm:$0xff]
        %v382 = vld [vmem:[#allocation4 + $0x80] sm:$0xff]
        %v383 = vld [vmem:[#allocation4 + $0x88] sm:$0xff]
        %v384 = vld [vmem:[#allocation4 + $0x90] sm:$0xff]
        %v385 = vld [vmem:[#allocation4 + $0x98] sm:$0xff]
        %v386 = vld [vmem:[#allocation4 + $0xa0] sm:$0xff]
        %v387 = vld [vmem:[#allocation4 + $0xa8] sm:$0xff]
        %v388 = vld [vmem:[#allocation4 + $0xb0] sm:$0xff]
        %v389 = vld [vmem:[#allocation4 + $0xb8] sm:$0xff]
        %v390 = vld [vmem:[#allocation4 + $0xc0] sm:$0xff]
        %v391 = vld [vmem:[#allocation4 + $0xc8] sm:$0xff]
        %v392 = vld [vmem:[#allocation4 + $0xd0] sm:$0xff]
        %v393 = vld [vmem:[#allocation4 + $0xd8] sm:$0xff]
        %v394 = vld [vmem:[#allocation4 + $0xe0] sm:$0xff]
        %v395 = vld [vmem:[#allocation4 + $0xe8] sm:$0xff]
        %v396 = vld [vmem:[#allocation4 + $0xf0] sm:$0xff]
        %v397 = vld [vmem:[#allocation4 + $0xf8] sm:$0xff]
        %v398 = vld [vmem:[%s277] sm:$0xfc]
        %v399 = vld [vmem:[%s277 + $0x8] sm:$0xfc]
        %v400 = vld [vmem:[%s277 + $0x20] sm:$0x3]
        %v401 = vld [vmem:[%s277 + $0x28] sm:$0x3]
        %s402 = scalar_lea.vmem [#allocation4], 256
        %v403 = vld [vmem:[%s402] sm:$0xff]
        %v404 = vld [vmem:[%s402 + $0x8] sm:$0xff]
        %v405 = vld [vmem:[%s402 + $0x10] sm:$0xff]
        %v406 = vld [vmem:[%s402 + $0x18] sm:$0xff]
        %v407 = vld [vmem:[%s402 + $0x20] sm:$0xff]
        %v408 = vld [vmem:[%s402 + $0x28] sm:$0xff]
        %v409 = vld [vmem:[%s402 + $0x30] sm:$0xff]
        %v410 = vld [vmem:[%s402 + $0x38] sm:$0xff]
        %v411 = vld [vmem:[%s402 + $0x40] sm:$0xff]
        %v412 = vld [vmem:[%s402 + $0x48] sm:$0xff]
        %v413 = vld [vmem:[%s402 + $0x50] sm:$0xff]
        %v414 = vld [vmem:[%s402 + $0x58] sm:$0xff]
        %v415 = vld [vmem:[%s402 + $0x60] sm:$0xff]
        %v416 = vld [vmem:[%s402 + $0x68] sm:$0xff]
        %v417 = vld [vmem:[%s402 + $0x70] sm:$0xff]
        %v418 = vld [vmem:[%s402 + $0x78] sm:$0xff]
        %v419 = vld [vmem:[%s402 + $0x80] sm:$0xff]
        %v420 = vld [vmem:[%s402 + $0x88] sm:$0xff]
        %v421 = vld [vmem:[%s402 + $0x90] sm:$0xff]
        %v422 = vld [vmem:[%s402 + $0x98] sm:$0xff]
        %v423 = vld [vmem:[%s402 + $0xa0] sm:$0xff]
        %v424 = vld [vmem:[%s402 + $0xa8] sm:$0xff]
        %v425 = vld [vmem:[%s402 + $0xb0] sm:$0xff]
        %v426 = vld [vmem:[%s402 + $0xb8] sm:$0xff]
        %v427 = vld [vmem:[%s402 + $0xc0] sm:$0xff]
        %v428 = vld [vmem:[%s402 + $0xc8] sm:$0xff]
        %v429 = vld [vmem:[%s402 + $0xd0] sm:$0xff]
        %v430 = vld [vmem:[%s402 + $0xd8] sm:$0xff]
        %v431 = vld [vmem:[%s402 + $0xe0] sm:$0xff]
        %v432 = vld [vmem:[%s402 + $0xe8] sm:$0xff]
        %v433 = vld [vmem:[%s402 + $0xf0] sm:$0xff]
        %v434 = vld [vmem:[%s402 + $0xf8] sm:$0xff]
        %vm441 = vcmask 1045504
        %v442 = vrot.slane %v398, 2
        %v443 = vrot.slane %v362, 2
        %v444 = vsel %vm441, %v442, %v443
        %v445 = vrot.slane %v399, 2
        %v446 = vrot.slane %v363, 2
        %v447 = vsel %vm441, %v445, %v446
        %v448 = vrot.slane %v400, 2
        %v449 = vsel %vm441, %v443, %v448
        %v450 = vrot.slane %v401, 2
        %v451 = vsel %vm441, %v446, %v450
        %456 = vmatprep.subr.mxu0 0.0
        %457 = vmatpush1.msra.mxu0 %v403
        %458 = vmatprep.subr.mxu0 0.0
        %459 = vmatpush1.msra.mxu0 %v404
        %460 = vmatprep.subr.mxu0 0.0
        %461 = vmatpush1.msra.mxu0 %v405
        %462 = vmatprep.subr.mxu0 0.0
        %463 = vmatpush1.msra.mxu0 %v406
        %464 = vmatprep.subr.mxu0 0.0
        %465 = vmatpush1.msra.mxu0 %v407
        %466 = vmatprep.subr.mxu0 0.0
        %467 = vmatpush1.msra.mxu0 %v408
        %468 = vmatprep.subr.mxu0 0.0
        %469 = vmatpush1.msra.mxu0 %v409
        %470 = vmatprep.subr.mxu0 0.0
        %471 = vmatpush1.msra.mxu0 %v410
        %472 = vmatprep.subr.mxu0 0.0
        %473 = vmatpush1.msra.mxu0 %v411
        %474 = vmatprep.subr.mxu0 0.0
        %475 = vmatpush1.msra.mxu0 %v412
        %476 = vmatprep.subr.mxu0 0.0
        %477 = vmatpush1.msra.mxu0 %v413
        %478 = vmatprep.subr.mxu0 0.0
        %479 = vmatpush1.msra.mxu0 %v414
        %480 = vmatprep.subr.mxu0 0.0
        %481 = vmatpush1.msra.mxu0 %v415
        %482 = vmatprep.subr.mxu0 0.0
        %483 = vmatpush1.msra.mxu0 %v416
        %484 = vmatprep.subr.mxu0 0.0
        %485 = vmatpush1.msra.mxu0 %v417
        %486 = vmatprep.subr.mxu0 0.0
        %487 = vmatpush1.msra.mxu0 %v418
        %488 = vmatprep.subr.mxu0 0.0
        %489 = vmatpush1.msra.mxu0 %v419
        %490 = vmatprep.subr.mxu0 0.0
        %491 = vmatpush1.msra.mxu0 %v420
        %492 = vmatprep.subr.mxu0 0.0
        %493 = vmatpush1.msra.mxu0 %v421
        %494 = vmatprep.subr.mxu0 0.0
        %495 = vmatpush1.msra.mxu0 %v422
        %496 = vmatprep.subr.mxu0 0.0
        %497 = vmatpush1.msra.mxu0 %v423
        %498 = vmatprep.subr.mxu0 0.0
        %499 = vmatpush1.msra.mxu0 %v424
        %500 = vmatprep.subr.mxu0 0.0
        %501 = vmatpush1.msra.mxu0 %v425
        %502 = vmatprep.subr.mxu0 0.0
        %503 = vmatpush1.msra.mxu0 %v426
        %504 = vmatprep.subr.mxu0 0.0
        %505 = vmatpush1.msra.mxu0 %v427
        %506 = vmatprep.subr.mxu0 0.0
        %507 = vmatpush1.msra.mxu0 %v428
        %508 = vmatprep.subr.mxu0 0.0
        %509 = vmatpush1.msra.mxu0 %v429
        %510 = vmatprep.subr.mxu0 0.0
        %511 = vmatpush1.msra.mxu0 %v430
        %512 = vmatprep.subr.mxu0 0.0
        %513 = vmatpush1.msra.mxu0 %v431
        %514 = vmatprep.subr.mxu0 0.0
        %515 = vmatpush1.msra.mxu0 %v432
        %516 = vmatprep.subr.mxu0 0.0
        %517 = vmatpush1.msra.mxu0 %v433
        %518 = vmatprep.subr.mxu0 0.0
        %519 = vmatpush1.msra.mxu0 %v434
        %520 = vmatprep.mubr.f32.mxu0 %v447
        %521 = vmatmul.mubr.f32.gmra.mrb[0].mxu0 %v444
        %v522 = vpop.f32.mrb[0].mxu0
        %v523 = vadd.f32 0.0, %v522
        %v524 = vpop.f32.mrb[0].mxu0
        %525 = vmatprep.mubr.f32.mxu0 %v451
        %526 = vmatmul.mubr.f32.gmra.mrb[0].mxu0 %v449
        %v527 = vpop.f32.mrb[0].mxu0
        %v528 = vadd.f32 0.0, %v527
        %v529 = vpop.f32.mrb[0].mxu0
        %530 = vdwg.mxu0
        %vm535 = vcmask 1046528
        %v536 = vrot.slane %v360, 1
        %v537 = vrot.slane %v362, 1
        %v538 = vsel %vm535, %v536, %v537
        %v539 = vrot.slane %v361, 1
        %v540 = vrot.slane %v363, 1
        %v541 = vsel %vm535, %v539, %v540
        %v542 = vrot.slane %v364, 1
        %v543 = vsel %vm535, %v537, %v542
        %v544 = vrot.slane %v365, 1
        %v545 = vsel %vm535, %v540, %v544
        %550 = vmatprep.subr.mxu0 0.0
        %551 = vmatpush1.msra.mxu0 %v366
        %552 = vmatprep.subr.mxu0 0.0
        %553 = vmatpush1.msra.mxu0 %v367
        %554 = vmatprep.subr.mxu0 0.0
        %555 = vmatpush1.msra.mxu0 %v368
        %556 = vmatprep.subr.mxu0 0.0
        %557 = vmatpush1.msra.mxu0 %v369
        %558 = vmatprep.subr.mxu0 0.0
        %559 = vmatpush1.msra.mxu0 %v370
        %560 = vmatprep.subr.mxu0 0.0
        %561 = vmatpush1.msra.mxu0 %v371
        %562 = vmatprep.subr.mxu0 0.0
        %563 = vmatpush1.msra.mxu0 %v372
        %564 = vmatprep.subr.mxu0 0.0
        %565 = vmatpush1.msra.mxu0 %v373
        %566 = vmatprep.subr.mxu0 0.0
        %567 = vmatpush1.msra.mxu0 %v374
        %568 = vmatprep.subr.mxu0 0.0
        %569 = vmatpush1.msra.mxu0 %v375
        %570 = vmatprep.subr.mxu0 0.0
        %571 = vmatpush1.msra.mxu0 %v376
        %572 = vmatprep.subr.mxu0 0.0
        %573 = vmatpush1.msra.mxu0 %v377
        %574 = vmatprep.subr.mxu0 0.0
        %575 = vmatpush1.msra.mxu0 %v378
        %576 = vmatprep.subr.mxu0 0.0
        %577 = vmatpush1.msra.mxu0 %v379
        %578 = vmatprep.subr.mxu0 0.0
        %579 = vmatpush1.msra.mxu0 %v380
        %580 = vmatprep.subr.mxu0 0.0
        %581 = vmatpush1.msra.mxu0 %v381
        %582 = vmatprep.subr.mxu0 0.0
        %583 = vmatpush1.msra.mxu0 %v382
        %584 = vmatprep.subr.mxu0 0.0
        %585 = vmatpush1.msra.mxu0 %v383
        %586 = vmatprep.subr.mxu0 0.0
        %587 = vmatpush1.msra.mxu0 %v384
        %588 = vmatprep.subr.mxu0 0.0
        %589 = vmatpush1.msra.mxu0 %v385
        %590 = vmatprep.subr.mxu0 0.0
        %591 = vmatpush1.msra.mxu0 %v386
        %592 = vmatprep.subr.mxu0 0.0
        %593 = vmatpush1.msra.mxu0 %v387
        %594 = vmatprep.subr.mxu0 0.0
        %595 = vmatpush1.msra.mxu0 %v388
        %596 = vmatprep.subr.mxu0 0.0
        %597 = vmatpush1.msra.mxu0 %v389
        %598 = vmatprep.subr.mxu0 0.0
        %599 = vmatpush1.msra.mxu0 %v390
        %600 = vmatprep.subr.mxu0 0.0
        %601 = vmatpush1.msra.mxu0 %v391
        %602 = vmatprep.subr.mxu0 0.0
        %603 = vmatpush1.msra.mxu0 %v392
        %604 = vmatprep.subr.mxu0 0.0
        %605 = vmatpush1.msra.mxu0 %v393
        %606 = vmatprep.subr.mxu0 0.0
        %607 = vmatpush1.msra.mxu0 %v394
        %608 = vmatprep.subr.mxu0 0.0
        %609 = vmatpush1.msra.mxu0 %v395
        %610 = vmatprep.subr.mxu0 0.0
        %611 = vmatpush1.msra.mxu0 %v396
        %612 = vmatprep.subr.mxu0 0.0
        %613 = vmatpush1.msra.mxu0 %v397
        %614 = vmatprep.mubr.f32.mxu0 %v541
        %615 = vmatmul.mubr.f32.gmra.mrb[0].mxu0 %v538
        %v616 = vpop.f32.mrb[0].mxu0
        %v617 = vadd.f32 %v523, %v616
        %v618 = vpop.f32.mrb[0].mxu0
        %619 = vmatprep.mubr.f32.mxu0 %v545
        %620 = vmatmul.mubr.f32.gmra.mrb[0].mxu0 %v543
        %v621 = vpop.f32.mrb[0].mxu0
        %v622 = vadd.f32 %v528, %v621
        %v623 = vpop.f32.mrb[0].mxu0
        %624 = vdwg.mxu0
        %v625 = vld [vmem:[%s277] sm:$0xf8]
        %v626 = vld [vmem:[%s277 + $0x8] sm:$0xf8]
        %v627 = vld [vmem:[%s277 + $0x20] sm:$0x7]
        %v628 = vld [vmem:[%s277 + $0x28] sm:$0x7]
        %s629 = scalar_lea.vmem [#allocation4], 512
        %v630 = vld [vmem:[%s629] sm:$0xff]
        %v631 = vld [vmem:[%s629 + $0x8] sm:$0xff]
        %v632 = vld [vmem:[%s629 + $0x10] sm:$0xff]
        %v633 = vld [vmem:[%s629 + $0x18] sm:$0xff]
        %v634 = vld [vmem:[%s629 + $0x20] sm:$0xff]
        %v635 = vld [vmem:[%s629 + $0x28] sm:$0xff]
        %v636 = vld [vmem:[%s629 + $0x30] sm:$0xff]
        %v637 = vld [vmem:[%s629 + $0x38] sm:$0xff]
        %v638 = vld [vmem:[%s629 + $0x40] sm:$0xff]
        %v639 = vld [vmem:[%s629 + $0x48] sm:$0xff]
        %v640 = vld [vmem:[%s629 + $0x50] sm:$0xff]
        %v641 = vld [vmem:[%s629 + $0x58] sm:$0xff]
        %v642 = vld [vmem:[%s629 + $0x60] sm:$0xff]
        %v643 = vld [vmem:[%s629 + $0x68] sm:$0xff]
        %v644 = vld [vmem:[%s629 + $0x70] sm:$0xff]
        %v645 = vld [vmem:[%s629 + $0x78] sm:$0xff]
        %v646 = vld [vmem:[%s629 + $0x80] sm:$0xff]
        %v647 = vld [vmem:[%s629 + $0x88] sm:$0xff]
        %v648 = vld [vmem:[%s629 + $0x90] sm:$0xff]
        %v649 = vld [vmem:[%s629 + $0x98] sm:$0xff]
        %v650 = vld [vmem:[%s629 + $0xa0] sm:$0xff]
        %v651 = vld [vmem:[%s629 + $0xa8] sm:$0xff]
        %v652 = vld [vmem:[%s629 + $0xb0] sm:$0xff]
        %v653 = vld [vmem:[%s629 + $0xb8] sm:$0xff]
        %v654 = vld [vmem:[%s629 + $0xc0] sm:$0xff]
        %v655 = vld [vmem:[%s629 + $0xc8] sm:$0xff]
        %v656 = vld [vmem:[%s629 + $0xd0] sm:$0xff]
        %v657 = vld [vmem:[%s629 + $0xd8] sm:$0xff]
        %v658 = vld [vmem:[%s629 + $0xe0] sm:$0xff]
        %v659 = vld [vmem:[%s629 + $0xe8] sm:$0xff]
        %v660 = vld [vmem:[%s629 + $0xf0] sm:$0xff]
        %v661 = vld [vmem:[%s629 + $0xf8] sm:$0xff]
        %vm666 = vcmask 1044480
        %v667 = vrot.slane %v625, 3
        %v668 = vrot.slane %v362, 3
        %v669 = vsel %vm666, %v667, %v668
        %v670 = vrot.slane %v626, 3
        %v671 = vrot.slane %v363, 3
        %v672 = vsel %vm666, %v670, %v671
        %v673 = vrot.slane %v627, 3
        %v674 = vsel %vm666, %v668, %v673
        %v675 = vrot.slane %v628, 3
        %v676 = vsel %vm666, %v671, %v675
        %681 = vmatprep.subr.mxu0 0.0
        %682 = vmatpush1.msra.mxu0 %v630
        %683 = vmatprep.subr.mxu0 0.0
        %684 = vmatpush1.msra.mxu0 %v631
        %685 = vmatprep.subr.mxu0 0.0
        %686 = vmatpush1.msra.mxu0 %v632
        %687 = vmatprep.subr.mxu0 0.0
        %688 = vmatpush1.msra.mxu0 %v633
        %689 = vmatprep.subr.mxu0 0.0
        %690 = vmatpush1.msra.mxu0 %v634
        %691 = vmatprep.subr.mxu0 0.0
        %692 = vmatpush1.msra.mxu0 %v635
        %693 = vmatprep.subr.mxu0 0.0
        %694 = vmatpush1.msra.mxu0 %v636
        %695 = vmatprep.subr.mxu0 0.0
        %696 = vmatpush1.msra.mxu0 %v637
        %697 = vmatprep.subr.mxu0 0.0
        %698 = vmatpush1.msra.mxu0 %v638
        %699 = vmatprep.subr.mxu0 0.0
        %700 = vmatpush1.msra.mxu0 %v639
        %701 = vmatprep.subr.mxu0 0.0
        %702 = vmatpush1.msra.mxu0 %v640
        %703 = vmatprep.subr.mxu0 0.0
        %704 = vmatpush1.msra.mxu0 %v641
        %705 = vmatprep.subr.mxu0 0.0
        %706 = vmatpush1.msra.mxu0 %v642
        %707 = vmatprep.subr.mxu0 0.0
        %708 = vmatpush1.msra.mxu0 %v643
        %709 = vmatprep.subr.mxu0 0.0
        %710 = vmatpush1.msra.mxu0 %v644
        %711 = vmatprep.subr.mxu0 0.0
        %712 = vmatpush1.msra.mxu0 %v645
        %713 = vmatprep.subr.mxu0 0.0
        %714 = vmatpush1.msra.mxu0 %v646
        %715 = vmatprep.subr.mxu0 0.0
        %716 = vmatpush1.msra.mxu0 %v647
        %717 = vmatprep.subr.mxu0 0.0
        %718 = vmatpush1.msra.mxu0 %v648
        %719 = vmatprep.subr.mxu0 0.0
        %720 = vmatpush1.msra.mxu0 %v649
        %721 = vmatprep.subr.mxu0 0.0
        %722 = vmatpush1.msra.mxu0 %v650
        %723 = vmatprep.subr.mxu0 0.0
        %724 = vmatpush1.msra.mxu0 %v651
        %725 = vmatprep.subr.mxu0 0.0
        %726 = vmatpush1.msra.mxu0 %v652
        %727 = vmatprep.subr.mxu0 0.0
        %728 = vmatpush1.msra.mxu0 %v653
        %729 = vmatprep.subr.mxu0 0.0
        %730 = vmatpush1.msra.mxu0 %v654
        %731 = vmatprep.subr.mxu0 0.0
        %732 = vmatpush1.msra.mxu0 %v655
        %733 = vmatprep.subr.mxu0 0.0
        %734 = vmatpush1.msra.mxu0 %v656
        %735 = vmatprep.subr.mxu0 0.0
        %736 = vmatpush1.msra.mxu0 %v657
        %737 = vmatprep.subr.mxu0 0.0
        %738 = vmatpush1.msra.mxu0 %v658
        %739 = vmatprep.subr.mxu0 0.0
        %740 = vmatpush1.msra.mxu0 %v659
        %741 = vmatprep.subr.mxu0 0.0
        %742 = vmatpush1.msra.mxu0 %v660
        %743 = vmatprep.subr.mxu0 0.0
        %744 = vmatpush1.msra.mxu0 %v661
        %745 = vmatprep.mubr.f32.mxu0 %v672
        %746 = vmatmul.mubr.f32.gmra.mrb[0].mxu0 %v669
        %v747 = vpop.f32.mrb[0].mxu0
        %v748 = vadd.f32 0.0, %v747
        %v749 = vpop.f32.mrb[0].mxu0
        %750 = vmatprep.mubr.f32.mxu0 %v676
        %751 = vmatmul.mubr.f32.gmra.mrb[0].mxu0 %v674
        %v752 = vpop.f32.mrb[0].mxu0
        %v753 = vadd.f32 0.0, %v752
        %v754 = vpop.f32.mrb[0].mxu0
        %755 = vdwg.mxu0
        %v756 = vadd.f32 %v617, %v748
        %v757 = vadd.f32 %v622, %v753
        %v758 = vld [vmem:[%s277] sm:$0xf0]
        %v759 = vld [vmem:[%s277 + $0x8] sm:$0xf0]
        %v760 = vld [vmem:[%s277 + $0x20] sm:$0xf]
        %v761 = vld [vmem:[%s277 + $0x28] sm:$0xf]
        %s762 = scalar_lea.vmem [#allocation4], 768
        %v763 = vld [vmem:[%s762] sm:$0xff]
        %v764 = vld [vmem:[%s762 + $0x8] sm:$0xff]
        %v765 = vld [vmem:[%s762 + $0x10] sm:$0xff]
        %v766 = vld [vmem:[%s762 + $0x18] sm:$0xff]
        %v767 = vld [vmem:[%s762 + $0x20] sm:$0xff]
        %v768 = vld [vmem:[%s762 + $0x28] sm:$0xff]
        %v769 = vld [vmem:[%s762 + $0x30] sm:$0xff]
        %v770 = vld [vmem:[%s762 + $0x38] sm:$0xff]
        %v771 = vld [vmem:[%s762 + $0x40] sm:$0xff]
        %v772 = vld [vmem:[%s762 + $0x48] sm:$0xff]
        %v773 = vld [vmem:[%s762 + $0x50] sm:$0xff]
        %v774 = vld [vmem:[%s762 + $0x58] sm:$0xff]
        %v775 = vld [vmem:[%s762 + $0x60] sm:$0xff]
        %v776 = vld [vmem:[%s762 + $0x68] sm:$0xff]
        %v777 = vld [vmem:[%s762 + $0x70] sm:$0xff]
        %v778 = vld [vmem:[%s762 + $0x78] sm:$0xff]
        %v779 = vld [vmem:[%s762 + $0x80] sm:$0xff]
        %v780 = vld [vmem:[%s762 + $0x88] sm:$0xff]
        %v781 = vld [vmem:[%s762 + $0x90] sm:$0xff]
        %v782 = vld [vmem:[%s762 + $0x98] sm:$0xff]
        %v783 = vld [vmem:[%s762 + $0xa0] sm:$0xff]
        %v784 = vld [vmem:[%s762 + $0xa8] sm:$0xff]
        %v785 = vld [vmem:[%s762 + $0xb0] sm:$0xff]
        %v786 = vld [vmem:[%s762 + $0xb8] sm:$0xff]
        %v787 = vld [vmem:[%s762 + $0xc0] sm:$0xff]
        %v788 = vld [vmem:[%s762 + $0xc8] sm:$0xff]
        %v789 = vld [vmem:[%s762 + $0xd0] sm:$0xff]
        %v790 = vld [vmem:[%s762 + $0xd8] sm:$0xff]
        %v791 = vld [vmem:[%s762 + $0xe0] sm:$0xff]
        %v792 = vld [vmem:[%s762 + $0xe8] sm:$0xff]
        %v793 = vld [vmem:[%s762 + $0xf0] sm:$0xff]
        %v794 = vld [vmem:[%s762 + $0xf8] sm:$0xff]
        %vm799 = vcmask 1043456
        %v800 = vrot.slane %v758, 4
        %v801 = vrot.slane %v362, 4
        %v802 = vsel %vm799, %v800, %v801
        %v803 = vrot.slane %v759, 4
        %v804 = vrot.slane %v363, 4
        %v805 = vsel %vm799, %v803, %v804
        %v806 = vrot.slane %v760, 4
        %v807 = vsel %vm799, %v801, %v806
        %v808 = vrot.slane %v761, 4
        %v809 = vsel %vm799, %v804, %v808
        %814 = vmatprep.subr.mxu0 0.0
        %815 = vmatpush1.msra.mxu0 %v763
        %816 = vmatprep.subr.mxu0 0.0
        %817 = vmatpush1.msra.mxu0 %v764
        %818 = vmatprep.subr.mxu0 0.0
        %819 = vmatpush1.msra.mxu0 %v765
        %820 = vmatprep.subr.mxu0 0.0
        %821 = vmatpush1.msra.mxu0 %v766
        %822 = vmatprep.subr.mxu0 0.0
        %823 = vmatpush1.msra.mxu0 %v767
        %824 = vmatprep.subr.mxu0 0.0
        %825 = vmatpush1.msra.mxu0 %v768
        %826 = vmatprep.subr.mxu0 0.0
        %827 = vmatpush1.msra.mxu0 %v769
        %828 = vmatprep.subr.mxu0 0.0
        %829 = vmatpush1.msra.mxu0 %v770
        %830 = vmatprep.subr.mxu0 0.0
        %831 = vmatpush1.msra.mxu0 %v771
        %832 = vmatprep.subr.mxu0 0.0
        %833 = vmatpush1.msra.mxu0 %v772
        %834 = vmatprep.subr.mxu0 0.0
        %835 = vmatpush1.msra.mxu0 %v773
        %836 = vmatprep.subr.mxu0 0.0
        %837 = vmatpush1.msra.mxu0 %v774
        %838 = vmatprep.subr.mxu0 0.0
        %839 = vmatpush1.msra.mxu0 %v775
        %840 = vmatprep.subr.mxu0 0.0
        %841 = vmatpush1.msra.mxu0 %v776
        %842 = vmatprep.subr.mxu0 0.0
        %843 = vmatpush1.msra.mxu0 %v777
        %844 = vmatprep.subr.mxu0 0.0
        %845 = vmatpush1.msra.mxu0 %v778
        %846 = vmatprep.subr.mxu0 0.0
        %847 = vmatpush1.msra.mxu0 %v779
        %848 = vmatprep.subr.mxu0 0.0
        %849 = vmatpush1.msra.mxu0 %v780
        %850 = vmatprep.subr.mxu0 0.0
        %851 = vmatpush1.msra.mxu0 %v781
        %852 = vmatprep.subr.mxu0 0.0
        %853 = vmatpush1.msra.mxu0 %v782
        %854 = vmatprep.subr.mxu0 0.0
        %855 = vmatpush1.msra.mxu0 %v783
        %856 = vmatprep.subr.mxu0 0.0
        %857 = vmatpush1.msra.mxu0 %v784
        %858 = vmatprep.subr.mxu0 0.0
        %859 = vmatpush1.msra.mxu0 %v785
        %860 = vmatprep.subr.mxu0 0.0
        %861 = vmatpush1.msra.mxu0 %v786
        %862 = vmatprep.subr.mxu0 0.0
        %863 = vmatpush1.msra.mxu0 %v787
        %864 = vmatprep.subr.mxu0 0.0
        %865 = vmatpush1.msra.mxu0 %v788
        %866 = vmatprep.subr.mxu0 0.0
        %867 = vmatpush1.msra.mxu0 %v789
        %868 = vmatprep.subr.mxu0 0.0
        %869 = vmatpush1.msra.mxu0 %v790
        %870 = vmatprep.subr.mxu0 0.0
        %871 = vmatpush1.msra.mxu0 %v791
        %872 = vmatprep.subr.mxu0 0.0
        %873 = vmatpush1.msra.mxu0 %v792
        %874 = vmatprep.subr.mxu0 0.0
        %875 = vmatpush1.msra.mxu0 %v793
        %876 = vmatprep.subr.mxu0 0.0
        %877 = vmatpush1.msra.mxu0 %v794
        %878 = vmatprep.mubr.f32.mxu0 %v805
        %879 = vmatmul.mubr.f32.gmra.mrb[0].mxu0 %v802
        %v880 = vpop.f32.mrb[0].mxu0
        %v881 = vadd.f32 0.0, %v880
        %v882 = vpop.f32.mrb[0].mxu0
        %883 = vmatprep.mubr.f32.mxu0 %v809
        %884 = vmatmul.mubr.f32.gmra.mrb[0].mxu0 %v807
        %v885 = vpop.f32.mrb[0].mxu0
        %v886 = vadd.f32 0.0, %v885
        %v887 = vpop.f32.mrb[0].mxu0
        %888 = vdwg.mxu0
        %v889 = vadd.f32 %v756, %v881
        %v890 = vadd.f32 %v757, %v886
        %v891 = vld [vmem:[%s277] sm:$0xe0]
        %v892 = vld [vmem:[%s277 + $0x8] sm:$0xe0]
        %v893 = vld [vmem:[%s277 + $0x20] sm:$0x1f]
        %v894 = vld [vmem:[%s277 + $0x28] sm:$0x1f]
        %s895 = scalar_lea.vmem [#allocation4], 1024
        %v896 = vld [vmem:[%s895] sm:$0xff]
        %v897 = vld [vmem:[%s895 + $0x8] sm:$0xff]
        %v898 = vld [vmem:[%s895 + $0x10] sm:$0xff]
        %v899 = vld [vmem:[%s895 + $0x18] sm:$0xff]
        %v900 = vld [vmem:[%s895 + $0x20] sm:$0xff]
        %v901 = vld [vmem:[%s895 + $0x28] sm:$0xff]
        %v902 = vld [vmem:[%s895 + $0x30] sm:$0xff]
        %v903 = vld [vmem:[%s895 + $0x38] sm:$0xff]
        %v904 = vld [vmem:[%s895 + $0x40] sm:$0xff]
        %v905 = vld [vmem:[%s895 + $0x48] sm:$0xff]
        %v906 = vld [vmem:[%s895 + $0x50] sm:$0xff]
        %v907 = vld [vmem:[%s895 + $0x58] sm:$0xff]
        %v908 = vld [vmem:[%s895 + $0x60] sm:$0xff]
        %v909 = vld [vmem:[%s895 + $0x68] sm:$0xff]
        %v910 = vld [vmem:[%s895 + $0x70] sm:$0xff]
        %v911 = vld [vmem:[%s895 + $0x78] sm:$0xff]
        %v912 = vld [vmem:[%s895 + $0x80] sm:$0xff]
        %v913 = vld [vmem:[%s895 + $0x88] sm:$0xff]
        %v914 = vld [vmem:[%s895 + $0x90] sm:$0xff]
        %v915 = vld [vmem:[%s895 + $0x98] sm:$0xff]
        %v916 = vld [vmem:[%s895 + $0xa0] sm:$0xff]
        %v917 = vld [vmem:[%s895 + $0xa8] sm:$0xff]
        %v918 = vld [vmem:[%s895 + $0xb0] sm:$0xff]
        %v919 = vld [vmem:[%s895 + $0xb8] sm:$0xff]
        %v920 = vld [vmem:[%s895 + $0xc0] sm:$0xff]
        %v921 = vld [vmem:[%s895 + $0xc8] sm:$0xff]
        %v922 = vld [vmem:[%s895 + $0xd0] sm:$0xff]
        %v923 = vld [vmem:[%s895 + $0xd8] sm:$0xff]
        %v924 = vld [vmem:[%s895 + $0xe0] sm:$0xff]
        %v925 = vld [vmem:[%s895 + $0xe8] sm:$0xff]
        %v926 = vld [vmem:[%s895 + $0xf0] sm:$0xff]
        %v927 = vld [vmem:[%s895 + $0xf8] sm:$0xff]
        %vm932 = vcmask 1042432
        %v933 = vrot.slane %v891, 5
        %v934 = vrot.slane %v362, 5
        %v935 = vsel %vm932, %v933, %v934
        %v936 = vrot.slane %v892, 5
        %v937 = vrot.slane %v363, 5
        %v938 = vsel %vm932, %v936, %v937
        %v939 = vrot.slane %v893, 5
        %v940 = vsel %vm932, %v934, %v939
        %v941 = vrot.slane %v894, 5
        %v942 = vsel %vm932, %v937, %v941
        %947 = vmatprep.subr.mxu0 0.0
        %948 = vmatpush1.msra.mxu0 %v896
        %949 = vmatprep.subr.mxu0 0.0
        %950 = vmatpush1.msra.mxu0 %v897
        %951 = vmatprep.subr.mxu0 0.0
        %952 = vmatpush1.msra.mxu0 %v898
        %953 = vmatprep.subr.mxu0 0.0
        %954 = vmatpush1.msra.mxu0 %v899
        %955 = vmatprep.subr.mxu0 0.0
        %956 = vmatpush1.msra.mxu0 %v900
        %957 = vmatprep.subr.mxu0 0.0
        %958 = vmatpush1.msra.mxu0 %v901
        %959 = vmatprep.subr.mxu0 0.0
        %960 = vmatpush1.msra.mxu0 %v902
        %961 = vmatprep.subr.mxu0 0.0
        %962 = vmatpush1.msra.mxu0 %v903
        %963 = vmatprep.subr.mxu0 0.0
        %964 = vmatpush1.msra.mxu0 %v904
        %965 = vmatprep.subr.mxu0 0.0
        %966 = vmatpush1.msra.mxu0 %v905
        %967 = vmatprep.subr.mxu0 0.0
        %968 = vmatpush1.msra.mxu0 %v906
        %969 = vmatprep.subr.mxu0 0.0
        %970 = vmatpush1.msra.mxu0 %v907
        %971 = vmatprep.subr.mxu0 0.0
        %972 = vmatpush1.msra.mxu0 %v908
        %973 = vmatprep.subr.mxu0 0.0
        %974 = vmatpush1.msra.mxu0 %v909
        %975 = vmatprep.subr.mxu0 0.0
        %976 = vmatpush1.msra.mxu0 %v910
        %977 = vmatprep.subr.mxu0 0.0
        %978 = vmatpush1.msra.mxu0 %v911
        %979 = vmatprep.subr.mxu0 0.0
        %980 = vmatpush1.msra.mxu0 %v912
        %981 = vmatprep.subr.mxu0 0.0
        %982 = vmatpush1.msra.mxu0 %v913
        %983 = vmatprep.subr.mxu0 0.0
        %984 = vmatpush1.msra.mxu0 %v914
        %985 = vmatprep.subr.mxu0 0.0
        %986 = vmatpush1.msra.mxu0 %v915
        %987 = vmatprep.subr.mxu0 0.0
        %988 = vmatpush1.msra.mxu0 %v916
        %989 = vmatprep.subr.mxu0 0.0
        %990 = vmatpush1.msra.mxu0 %v917
        %991 = vmatprep.subr.mxu0 0.0
        %992 = vmatpush1.msra.mxu0 %v918
        %993 = vmatprep.subr.mxu0 0.0
        %994 = vmatpush1.msra.mxu0 %v919
        %995 = vmatprep.subr.mxu0 0.0
        %996 = vmatpush1.msra.mxu0 %v920
        %997 = vmatprep.subr.mxu0 0.0
        %998 = vmatpush1.msra.mxu0 %v921
        %999 = vmatprep.subr.mxu0 0.0
        %1000 = vmatpush1.msra.mxu0 %v922
        %1001 = vmatprep.subr.mxu0 0.0
        %1002 = vmatpush1.msra.mxu0 %v923
        %1003 = vmatprep.subr.mxu0 0.0
        %1004 = vmatpush1.msra.mxu0 %v924
        %1005 = vmatprep.subr.mxu0 0.0
        %1006 = vmatpush1.msra.mxu0 %v925
        %1007 = vmatprep.subr.mxu0 0.0
        %1008 = vmatpush1.msra.mxu0 %v926
        %1009 = vmatprep.subr.mxu0 0.0
        %1010 = vmatpush1.msra.mxu0 %v927
        %1011 = vmatprep.mubr.f32.mxu0 %v938
        %1012 = vmatmul.mubr.f32.gmra.mrb[0].mxu0 %v935
        %v1013 = vpop.f32.mrb[0].mxu0
        %v1014 = vadd.f32 0.0, %v1013
        %v1015 = vpop.f32.mrb[0].mxu0
        %1016 = vmatprep.mubr.f32.mxu0 %v942
        %1017 = vmatmul.mubr.f32.gmra.mrb[0].mxu0 %v940
        %v1018 = vpop.f32.mrb[0].mxu0
        %v1019 = vadd.f32 0.0, %v1018
        %v1020 = vpop.f32.mrb[0].mxu0
        %1021 = vdwg.mxu0
        %v1022 = vadd.f32 %v889, %v1014
        %v1023 = vadd.f32 %v890, %v1019
        %v1024 = vld [vmem:[%s277] sm:$0xc0]
        %v1025 = vld [vmem:[%s277 + $0x8] sm:$0xc0]
        %v1026 = vld [vmem:[%s277 + $0x20] sm:$0x3f]
        %v1027 = vld [vmem:[%s277 + $0x28] sm:$0x3f]
        %s1028 = scalar_lea.vmem [#allocation4], 1280
        %v1029 = vld [vmem:[%s1028] sm:$0xff]
        %v1030 = vld [vmem:[%s1028 + $0x8] sm:$0xff]
        %v1031 = vld [vmem:[%s1028 + $0x10] sm:$0xff]
        %v1032 = vld [vmem:[%s1028 + $0x18] sm:$0xff]
        %v1033 = vld [vmem:[%s1028 + $0x20] sm:$0xff]
        %v1034 = vld [vmem:[%s1028 + $0x28] sm:$0xff]
        %v1035 = vld [vmem:[%s1028 + $0x30] sm:$0xff]
        %v1036 = vld [vmem:[%s1028 + $0x38] sm:$0xff]
        %v1037 = vld [vmem:[%s1028 + $0x40] sm:$0xff]
        %v1038 = vld [vmem:[%s1028 + $0x48] sm:$0xff]
        %v1039 = vld [vmem:[%s1028 + $0x50] sm:$0xff]
        %v1040 = vld [vmem:[%s1028 + $0x58] sm:$0xff]
        %v1041 = vld [vmem:[%s1028 + $0x60] sm:$0xff]
        %v1042 = vld [vmem:[%s1028 + $0x68] sm:$0xff]
        %v1043 = vld [vmem:[%s1028 + $0x70] sm:$0xff]
        %v1044 = vld [vmem:[%s1028 + $0x78] sm:$0xff]
        %v1045 = vld [vmem:[%s1028 + $0x80] sm:$0xff]
        %v1046 = vld [vmem:[%s1028 + $0x88] sm:$0xff]
        %v1047 = vld [vmem:[%s1028 + $0x90] sm:$0xff]
        %v1048 = vld [vmem:[%s1028 + $0x98] sm:$0xff]
        %v1049 = vld [vmem:[%s1028 + $0xa0] sm:$0xff]
        %v1050 = vld [vmem:[%s1028 + $0xa8] sm:$0xff]
        %v1051 = vld [vmem:[%s1028 + $0xb0] sm:$0xff]
        %v1052 = vld [vmem:[%s1028 + $0xb8] sm:$0xff]
        %v1053 = vld [vmem:[%s1028 + $0xc0] sm:$0xff]
        %v1054 = vld [vmem:[%s1028 + $0xc8] sm:$0xff]
        %v1055 = vld [vmem:[%s1028 + $0xd0] sm:$0xff]
        %v1056 = vld [vmem:[%s1028 + $0xd8] sm:$0xff]
        %v1057 = vld [vmem:[%s1028 + $0xe0] sm:$0xff]
        %v1058 = vld [vmem:[%s1028 + $0xe8] sm:$0xff]
        %v1059 = vld [vmem:[%s1028 + $0xf0] sm:$0xff]
        %v1060 = vld [vmem:[%s1028 + $0xf8] sm:$0xff]
        %vm1065 = vcmask 1041408
        %v1066 = vrot.slane %v1024, 6
        %v1067 = vrot.slane %v362, 6
        %v1068 = vsel %vm1065, %v1066, %v1067
        %v1069 = vrot.slane %v1025, 6
        %v1070 = vrot.slane %v363, 6
        %v1071 = vsel %vm1065, %v1069, %v1070
        %v1072 = vrot.slane %v1026, 6
        %v1073 = vsel %vm1065, %v1067, %v1072
        %v1074 = vrot.slane %v1027, 6
        %v1075 = vsel %vm1065, %v1070, %v1074
        %1080 = vmatprep.subr.mxu0 0.0
        %1081 = vmatpush1.msra.mxu0 %v1029
        %1082 = vmatprep.subr.mxu0 0.0
        %1083 = vmatpush1.msra.mxu0 %v1030
        %1084 = vmatprep.subr.mxu0 0.0
        %1085 = vmatpush1.msra.mxu0 %v1031
        %1086 = vmatprep.subr.mxu0 0.0
        %1087 = vmatpush1.msra.mxu0 %v1032
        %1088 = vmatprep.subr.mxu0 0.0
        %1089 = vmatpush1.msra.mxu0 %v1033
        %1090 = vmatprep.subr.mxu0 0.0
        %1091 = vmatpush1.msra.mxu0 %v1034
        %1092 = vmatprep.subr.mxu0 0.0
        %1093 = vmatpush1.msra.mxu0 %v1035
        %1094 = vmatprep.subr.mxu0 0.0
        %1095 = vmatpush1.msra.mxu0 %v1036
        %1096 = vmatprep.subr.mxu0 0.0
        %1097 = vmatpush1.msra.mxu0 %v1037
        %1098 = vmatprep.subr.mxu0 0.0
        %1099 = vmatpush1.msra.mxu0 %v1038
        %1100 = vmatprep.subr.mxu0 0.0
        %1101 = vmatpush1.msra.mxu0 %v1039
        %1102 = vmatprep.subr.mxu0 0.0
        %1103 = vmatpush1.msra.mxu0 %v1040
        %1104 = vmatprep.subr.mxu0 0.0
        %1105 = vmatpush1.msra.mxu0 %v1041
        %1106 = vmatprep.subr.mxu0 0.0
        %1107 = vmatpush1.msra.mxu0 %v1042
        %1108 = vmatprep.subr.mxu0 0.0
        %1109 = vmatpush1.msra.mxu0 %v1043
        %1110 = vmatprep.subr.mxu0 0.0
        %1111 = vmatpush1.msra.mxu0 %v1044
        %1112 = vmatprep.subr.mxu0 0.0
        %1113 = vmatpush1.msra.mxu0 %v1045
        %1114 = vmatprep.subr.mxu0 0.0
        %1115 = vmatpush1.msra.mxu0 %v1046
        %1116 = vmatprep.subr.mxu0 0.0
        %1117 = vmatpush1.msra.mxu0 %v1047
        %1118 = vmatprep.subr.mxu0 0.0
        %1119 = vmatpush1.msra.mxu0 %v1048
        %1120 = vmatprep.subr.mxu0 0.0
        %1121 = vmatpush1.msra.mxu0 %v1049
        %1122 = vmatprep.subr.mxu0 0.0
        %1123 = vmatpush1.msra.mxu0 %v1050
        %1124 = vmatprep.subr.mxu0 0.0
        %1125 = vmatpush1.msra.mxu0 %v1051
        %1126 = vmatprep.subr.mxu0 0.0
        %1127 = vmatpush1.msra.mxu0 %v1052
        %1128 = vmatprep.subr.mxu0 0.0
        %1129 = vmatpush1.msra.mxu0 %v1053
        %1130 = vmatprep.subr.mxu0 0.0
        %1131 = vmatpush1.msra.mxu0 %v1054
        %1132 = vmatprep.subr.mxu0 0.0
        %1133 = vmatpush1.msra.mxu0 %v1055
        %1134 = vmatprep.subr.mxu0 0.0
        %1135 = vmatpush1.msra.mxu0 %v1056
        %1136 = vmatprep.subr.mxu0 0.0
        %1137 = vmatpush1.msra.mxu0 %v1057
        %1138 = vmatprep.subr.mxu0 0.0
        %1139 = vmatpush1.msra.mxu0 %v1058
        %1140 = vmatprep.subr.mxu0 0.0
        %1141 = vmatpush1.msra.mxu0 %v1059
        %1142 = vmatprep.subr.mxu0 0.0
        %1143 = vmatpush1.msra.mxu0 %v1060
        %1144 = vmatprep.mubr.f32.mxu0 %v1071
        %1145 = vmatmul.mubr.f32.gmra.mrb[0].mxu0 %v1068
        %v1146 = vpop.f32.mrb[0].mxu0
        %v1147 = vadd.f32 0.0, %v1146
        %v1148 = vpop.f32.mrb[0].mxu0
        %1149 = vmatprep.mubr.f32.mxu0 %v1075
        %1150 = vmatmul.mubr.f32.gmra.mrb[0].mxu0 %v1073
        %v1151 = vpop.f32.mrb[0].mxu0
        %v1152 = vadd.f32 0.0, %v1151
        %v1153 = vpop.f32.mrb[0].mxu0
        %1154 = vdwg.mxu0
        %v1155 = vadd.f32 %v1022, %v1147
        %v1156 = vadd.f32 %v1023, %v1152
        %v1157 = vld [vmem:[%s277] sm:$0x80]
        %v1158 = vld [vmem:[%s277 + $0x8] sm:$0x80]
        %v1159 = vld [vmem:[%s277 + $0x20] sm:$0x7f]
        %v1160 = vld [vmem:[%s277 + $0x28] sm:$0x7f]
        %s1161 = scalar_lea.vmem [#allocation4], 1536
        %v1162 = vld [vmem:[%s1161] sm:$0xff]
        %v1163 = vld [vmem:[%s1161 + $0x8] sm:$0xff]
        %v1164 = vld [vmem:[%s1161 + $0x10] sm:$0xff]
        %v1165 = vld [vmem:[%s1161 + $0x18] sm:$0xff]
        %v1166 = vld [vmem:[%s1161 + $0x20] sm:$0xff]
        %v1167 = vld [vmem:[%s1161 + $0x28] sm:$0xff]
        %v1168 = vld [vmem:[%s1161 + $0x30] sm:$0xff]
        %v1169 = vld [vmem:[%s1161 + $0x38] sm:$0xff]
        %v1170 = vld [vmem:[%s1161 + $0x40] sm:$0xff]
        %v1171 = vld [vmem:[%s1161 + $0x48] sm:$0xff]
        %v1172 = vld [vmem:[%s1161 + $0x50] sm:$0xff]
        %v1173 = vld [vmem:[%s1161 + $0x58] sm:$0xff]
        %v1174 = vld [vmem:[%s1161 + $0x60] sm:$0xff]
        %v1175 = vld [vmem:[%s1161 + $0x68] sm:$0xff]
        %v1176 = vld [vmem:[%s1161 + $0x70] sm:$0xff]
        %v1177 = vld [vmem:[%s1161 + $0x78] sm:$0xff]
        %v1178 = vld [vmem:[%s1161 + $0x80] sm:$0xff]
        %v1179 = vld [vmem:[%s1161 + $0x88] sm:$0xff]
        %v1180 = vld [vmem:[%s1161 + $0x90] sm:$0xff]
        %v1181 = vld [vmem:[%s1161 + $0x98] sm:$0xff]
        %v1182 = vld [vmem:[%s1161 + $0xa0] sm:$0xff]
        %v1183 = vld [vmem:[%s1161 + $0xa8] sm:$0xff]
        %v1184 = vld [vmem:[%s1161 + $0xb0] sm:$0xff]
        %v1185 = vld [vmem:[%s1161 + $0xb8] sm:$0xff]
        %v1186 = vld [vmem:[%s1161 + $0xc0] sm:$0xff]
        %v1187 = vld [vmem:[%s1161 + $0xc8] sm:$0xff]
        %v1188 = vld [vmem:[%s1161 + $0xd0] sm:$0xff]
        %v1189 = vld [vmem:[%s1161 + $0xd8] sm:$0xff]
        %v1190 = vld [vmem:[%s1161 + $0xe0] sm:$0xff]
        %v1191 = vld [vmem:[%s1161 + $0xe8] sm:$0xff]
        %v1192 = vld [vmem:[%s1161 + $0xf0] sm:$0xff]
        %v1193 = vld [vmem:[%s1161 + $0xf8] sm:$0xff]
        %vm1198 = vcmask 1040384
        %v1199 = vrot.slane %v1157, 7
        %v1200 = vrot.slane %v362, 7
        %v1201 = vsel %vm1198, %v1199, %v1200
        %v1202 = vrot.slane %v1158, 7
        %v1203 = vrot.slane %v363, 7
        %v1204 = vsel %vm1198, %v1202, %v1203
        %v1205 = vrot.slane %v1159, 7
        %v1206 = vsel %vm1198, %v1200, %v1205
        %v1207 = vrot.slane %v1160, 7
        %v1208 = vsel %vm1198, %v1203, %v1207
        %1213 = vmatprep.subr.mxu0 0.0
        %1214 = vmatpush1.msra.mxu0 %v1162
        %1215 = vmatprep.subr.mxu0 0.0
        %1216 = vmatpush1.msra.mxu0 %v1163
        %1217 = vmatprep.subr.mxu0 0.0
        %1218 = vmatpush1.msra.mxu0 %v1164
        %1219 = vmatprep.subr.mxu0 0.0
        %1220 = vmatpush1.msra.mxu0 %v1165
        %1221 = vmatprep.subr.mxu0 0.0
        %1222 = vmatpush1.msra.mxu0 %v1166
        %1223 = vmatprep.subr.mxu0 0.0
        %1224 = vmatpush1.msra.mxu0 %v1167
        %1225 = vmatprep.subr.mxu0 0.0
        %1226 = vmatpush1.msra.mxu0 %v1168
        %1227 = vmatprep.subr.mxu0 0.0
        %1228 = vmatpush1.msra.mxu0 %v1169
        %1229 = vmatprep.subr.mxu0 0.0
        %1230 = vmatpush1.msra.mxu0 %v1170
        %1231 = vmatprep.subr.mxu0 0.0
        %1232 = vmatpush1.msra.mxu0 %v1171
        %1233 = vmatprep.subr.mxu0 0.0
        %1234 = vmatpush1.msra.mxu0 %v1172
        %1235 = vmatprep.subr.mxu0 0.0
        %1236 = vmatpush1.msra.mxu0 %v1173
        %1237 = vmatprep.subr.mxu0 0.0
        %1238 = vmatpush1.msra.mxu0 %v1174
        %1239 = vmatprep.subr.mxu0 0.0
        %1240 = vmatpush1.msra.mxu0 %v1175
        %1241 = vmatprep.subr.mxu0 0.0
        %1242 = vmatpush1.msra.mxu0 %v1176
        %1243 = vmatprep.subr.mxu0 0.0
        %1244 = vmatpush1.msra.mxu0 %v1177
        %1245 = vmatprep.subr.mxu0 0.0
        %1246 = vmatpush1.msra.mxu0 %v1178
        %1247 = vmatprep.subr.mxu0 0.0
        %1248 = vmatpush1.msra.mxu0 %v1179
        %1249 = vmatprep.subr.mxu0 0.0
        %1250 = vmatpush1.msra.mxu0 %v1180
        %1251 = vmatprep.subr.mxu0 0.0
        %1252 = vmatpush1.msra.mxu0 %v1181
        %1253 = vmatprep.subr.mxu0 0.0
        %1254 = vmatpush1.msra.mxu0 %v1182
        %1255 = vmatprep.subr.mxu0 0.0
        %1256 = vmatpush1.msra.mxu0 %v1183
        %1257 = vmatprep.subr.mxu0 0.0
        %1258 = vmatpush1.msra.mxu0 %v1184
        %1259 = vmatprep.subr.mxu0 0.0
        %1260 = vmatpush1.msra.mxu0 %v1185
        %1261 = vmatprep.subr.mxu0 0.0
        %1262 = vmatpush1.msra.mxu0 %v1186
        %1263 = vmatprep.subr.mxu0 0.0
        %1264 = vmatpush1.msra.mxu0 %v1187
        %1265 = vmatprep.subr.mxu0 0.0
        %1266 = vmatpush1.msra.mxu0 %v1188
        %1267 = vmatprep.subr.mxu0 0.0
        %1268 = vmatpush1.msra.mxu0 %v1189
        %1269 = vmatprep.subr.mxu0 0.0
        %1270 = vmatpush1.msra.mxu0 %v1190
        %1271 = vmatprep.subr.mxu0 0.0
        %1272 = vmatpush1.msra.mxu0 %v1191
        %1273 = vmatprep.subr.mxu0 0.0
        %1274 = vmatpush1.msra.mxu0 %v1192
        %1275 = vmatprep.subr.mxu0 0.0
        %1276 = vmatpush1.msra.mxu0 %v1193
        %1277 = vmatprep.mubr.f32.mxu0 %v1204
        %1278 = vmatmul.mubr.f32.gmra.mrb[0].mxu0 %v1201
        %v1279 = vpop.f32.mrb[0].mxu0
        %v1280 = vadd.f32 0.0, %v1279
        %v1281 = vpop.f32.mrb[0].mxu0
        %1282 = vmatprep.mubr.f32.mxu0 %v1208
        %1283 = vmatmul.mubr.f32.gmra.mrb[0].mxu0 %v1206
        %v1284 = vpop.f32.mrb[0].mxu0
        %v1285 = vadd.f32 0.0, %v1284
        %v1286 = vpop.f32.mrb[0].mxu0
        %1287 = vdwg.mxu0
        %v1288 = vadd.f32 %v1155, %v1280
        %v1289 = vadd.f32 %v1156, %v1285
        %v1290 = vld [vmem:[%s277 + $0x20] sm:$0xff]
        %v1291 = vld [vmem:[%s277 + $0x28] sm:$0xff]
        %s1292 = scalar_lea.vmem [#allocation4], 1792
        %v1293 = vld [vmem:[%s1292] sm:$0xff]
        %v1294 = vld [vmem:[%s1292 + $0x8] sm:$0xff]
        %v1295 = vld [vmem:[%s1292 + $0x10] sm:$0xff]
        %v1296 = vld [vmem:[%s1292 + $0x18] sm:$0xff]
        %v1297 = vld [vmem:[%s1292 + $0x20] sm:$0xff]
        %v1298 = vld [vmem:[%s1292 + $0x28] sm:$0xff]
        %v1299 = vld [vmem:[%s1292 + $0x30] sm:$0xff]
        %v1300 = vld [vmem:[%s1292 + $0x38] sm:$0xff]
        %v1301 = vld [vmem:[%s1292 + $0x40] sm:$0xff]
        %v1302 = vld [vmem:[%s1292 + $0x48] sm:$0xff]
        %v1303 = vld [vmem:[%s1292 + $0x50] sm:$0xff]
        %v1304 = vld [vmem:[%s1292 + $0x58] sm:$0xff]
        %v1305 = vld [vmem:[%s1292 + $0x60] sm:$0xff]
        %v1306 = vld [vmem:[%s1292 + $0x68] sm:$0xff]
        %v1307 = vld [vmem:[%s1292 + $0x70] sm:$0xff]
        %v1308 = vld [vmem:[%s1292 + $0x78] sm:$0xff]
        %v1309 = vld [vmem:[%s1292 + $0x80] sm:$0xff]
        %v1310 = vld [vmem:[%s1292 + $0x88] sm:$0xff]
        %v1311 = vld [vmem:[%s1292 + $0x90] sm:$0xff]
        %v1312 = vld [vmem:[%s1292 + $0x98] sm:$0xff]
        %v1313 = vld [vmem:[%s1292 + $0xa0] sm:$0xff]
        %v1314 = vld [vmem:[%s1292 + $0xa8] sm:$0xff]
        %v1315 = vld [vmem:[%s1292 + $0xb0] sm:$0xff]
        %v1316 = vld [vmem:[%s1292 + $0xb8] sm:$0xff]
        %v1317 = vld [vmem:[%s1292 + $0xc0] sm:$0xff]
        %v1318 = vld [vmem:[%s1292 + $0xc8] sm:$0xff]
        %v1319 = vld [vmem:[%s1292 + $0xd0] sm:$0xff]
        %v1320 = vld [vmem:[%s1292 + $0xd8] sm:$0xff]
        %v1321 = vld [vmem:[%s1292 + $0xe0] sm:$0xff]
        %v1322 = vld [vmem:[%s1292 + $0xe8] sm:$0xff]
        %v1323 = vld [vmem:[%s1292 + $0xf0] sm:$0xff]
        %v1324 = vld [vmem:[%s1292 + $0xf8] sm:$0xff]
        %1325 = vmatprep.subr.mxu0 0.0
        %1326 = vmatpush1.msra.mxu0 %v1293
        %1327 = vmatprep.subr.mxu0 0.0
        %1328 = vmatpush1.msra.mxu0 %v1294
        %1329 = vmatprep.subr.mxu0 0.0
        %1330 = vmatpush1.msra.mxu0 %v1295
        %1331 = vmatprep.subr.mxu0 0.0
        %1332 = vmatpush1.msra.mxu0 %v1296
        %1333 = vmatprep.subr.mxu0 0.0
        %1334 = vmatpush1.msra.mxu0 %v1297
        %1335 = vmatprep.subr.mxu0 0.0
        %1336 = vmatpush1.msra.mxu0 %v1298
        %1337 = vmatprep.subr.mxu0 0.0
        %1338 = vmatpush1.msra.mxu0 %v1299
        %1339 = vmatprep.subr.mxu0 0.0
        %1340 = vmatpush1.msra.mxu0 %v1300
        %1341 = vmatprep.subr.mxu0 0.0
        %1342 = vmatpush1.msra.mxu0 %v1301
        %1343 = vmatprep.subr.mxu0 0.0
        %1344 = vmatpush1.msra.mxu0 %v1302
        %1345 = vmatprep.subr.mxu0 0.0
        %1346 = vmatpush1.msra.mxu0 %v1303
        %1347 = vmatprep.subr.mxu0 0.0
        %1348 = vmatpush1.msra.mxu0 %v1304
        %1349 = vmatprep.subr.mxu0 0.0
        %1350 = vmatpush1.msra.mxu0 %v1305
        %1351 = vmatprep.subr.mxu0 0.0
        %1352 = vmatpush1.msra.mxu0 %v1306
        %1353 = vmatprep.subr.mxu0 0.0
        %1354 = vmatpush1.msra.mxu0 %v1307
        %1355 = vmatprep.subr.mxu0 0.0
        %1356 = vmatpush1.msra.mxu0 %v1308
        %1357 = vmatprep.subr.mxu0 0.0
        %1358 = vmatpush1.msra.mxu0 %v1309
        %1359 = vmatprep.subr.mxu0 0.0
        %1360 = vmatpush1.msra.mxu0 %v1310
        %1361 = vmatprep.subr.mxu0 0.0
        %1362 = vmatpush1.msra.mxu0 %v1311
        %1363 = vmatprep.subr.mxu0 0.0
        %1364 = vmatpush1.msra.mxu0 %v1312
        %1365 = vmatprep.subr.mxu0 0.0
        %1366 = vmatpush1.msra.mxu0 %v1313
        %1367 = vmatprep.subr.mxu0 0.0
        %1368 = vmatpush1.msra.mxu0 %v1314
        %1369 = vmatprep.subr.mxu0 0.0
        %1370 = vmatpush1.msra.mxu0 %v1315
        %1371 = vmatprep.subr.mxu0 0.0
        %1372 = vmatpush1.msra.mxu0 %v1316
        %1373 = vmatprep.subr.mxu0 0.0
        %1374 = vmatpush1.msra.mxu0 %v1317
        %1375 = vmatprep.subr.mxu0 0.0
        %1376 = vmatpush1.msra.mxu0 %v1318
        %1377 = vmatprep.subr.mxu0 0.0
        %1378 = vmatpush1.msra.mxu0 %v1319
        %1379 = vmatprep.subr.mxu0 0.0
        %1380 = vmatpush1.msra.mxu0 %v1320
        %1381 = vmatprep.subr.mxu0 0.0
        %1382 = vmatpush1.msra.mxu0 %v1321
        %1383 = vmatprep.subr.mxu0 0.0
        %1384 = vmatpush1.msra.mxu0 %v1322
        %1385 = vmatprep.subr.mxu0 0.0
        %1386 = vmatpush1.msra.mxu0 %v1323
        %1387 = vmatprep.subr.mxu0 0.0
        %1388 = vmatpush1.msra.mxu0 %v1324
        %1389 = vmatprep.mubr.f32.mxu0 %v363
        %1390 = vmatmul.mubr.f32.gmra.mrb[0].mxu0 %v362
        %v1391 = vpop.f32.mrb[0].mxu0
        %v1392 = vadd.f32 0.0, %v1391
        %v1393 = vpop.f32.mrb[0].mxu0
        %1394 = vmatprep.mubr.f32.mxu0 %v1291
        %1395 = vmatmul.mubr.f32.gmra.mrb[0].mxu0 %v1290
        %v1396 = vpop.f32.mrb[0].mxu0
        %v1397 = vadd.f32 0.0, %v1396
        %v1398 = vpop.f32.mrb[0].mxu0
        %1399 = vdwg.mxu0
        %v1400 = vadd.f32 %v1288, %v1392
        %v1401 = vadd.f32 %v1289, %v1397
        %v1402 = vld [vmem:[%s277 + $0x10] sm:$0xfe]
        %v1403 = vld [vmem:[%s277 + $0x18] sm:$0xfe]
        %v1404 = vld [vmem:[%s277 + $0x20] sm:$0xff]
        %v1405 = vld [vmem:[%s277 + $0x28] sm:$0xff]
        %v1406 = vld [vmem:[%s277 + $0x30] sm:$0x1]
        %v1407 = vld [vmem:[%s277 + $0x38] sm:$0x1]
        %s1408 = scalar_lea.vmem [#allocation4], 2048
        %v1409 = vld [vmem:[%s1408] sm:$0xff]
        %v1410 = vld [vmem:[%s1408 + $0x8] sm:$0xff]
        %v1411 = vld [vmem:[%s1408 + $0x10] sm:$0xff]
        %v1412 = vld [vmem:[%s1408 + $0x18] sm:$0xff]
        %v1413 = vld [vmem:[%s1408 + $0x20] sm:$0xff]
        %v1414 = vld [vmem:[%s1408 + $0x28] sm:$0xff]
        %v1415 = vld [vmem:[%s1408 + $0x30] sm:$0xff]
        %v1416 = vld [vmem:[%s1408 + $0x38] sm:$0xff]
        %v1417 = vld [vmem:[%s1408 + $0x40] sm:$0xff]
        %v1418 = vld [vmem:[%s1408 + $0x48] sm:$0xff]
        %v1419 = vld [vmem:[%s1408 + $0x50] sm:$0xff]
        %v1420 = vld [vmem:[%s1408 + $0x58] sm:$0xff]
        %v1421 = vld [vmem:[%s1408 + $0x60] sm:$0xff]
        %v1422 = vld [vmem:[%s1408 + $0x68] sm:$0xff]
        %v1423 = vld [vmem:[%s1408 + $0x70] sm:$0xff]
        %v1424 = vld [vmem:[%s1408 + $0x78] sm:$0xff]
        %v1425 = vld [vmem:[%s1408 + $0x80] sm:$0xff]
        %v1426 = vld [vmem:[%s1408 + $0x88] sm:$0xff]
        %v1427 = vld [vmem:[%s1408 + $0x90] sm:$0xff]
        %v1428 = vld [vmem:[%s1408 + $0x98] sm:$0xff]
        %v1429 = vld [vmem:[%s1408 + $0xa0] sm:$0xff]
        %v1430 = vld [vmem:[%s1408 + $0xa8] sm:$0xff]
        %v1431 = vld [vmem:[%s1408 + $0xb0] sm:$0xff]
        %v1432 = vld [vmem:[%s1408 + $0xb8] sm:$0xff]
        %v1433 = vld [vmem:[%s1408 + $0xc0] sm:$0xff]
        %v1434 = vld [vmem:[%s1408 + $0xc8] sm:$0xff]
        %v1435 = vld [vmem:[%s1408 + $0xd0] sm:$0xff]
        %v1436 = vld [vmem:[%s1408 + $0xd8] sm:$0xff]
        %v1437 = vld [vmem:[%s1408 + $0xe0] sm:$0xff]
        %v1438 = vld [vmem:[%s1408 + $0xe8] sm:$0xff]
        %v1439 = vld [vmem:[%s1408 + $0xf0] sm:$0xff]
        %v1440 = vld [vmem:[%s1408 + $0xf8] sm:$0xff]
        %v1447 = vrot.slane %v1402, 1
        %v1448 = vrot.slane %v1404, 1
        %v1449 = vsel %vm535, %v1447, %v1448
        %v1450 = vrot.slane %v1403, 1
        %v1451 = vrot.slane %v1405, 1
        %v1452 = vsel %vm535, %v1450, %v1451
        %v1453 = vrot.slane %v1406, 1
        %v1454 = vsel %vm535, %v1448, %v1453
        %v1455 = vrot.slane %v1407, 1
        %v1456 = vsel %vm535, %v1451, %v1455
        %1461 = vmatprep.subr.mxu0 0.0
        %1462 = vmatpush1.msra.mxu0 %v1409
        %1463 = vmatprep.subr.mxu0 0.0
        %1464 = vmatpush1.msra.mxu0 %v1410
        %1465 = vmatprep.subr.mxu0 0.0
        %1466 = vmatpush1.msra.mxu0 %v1411
        %1467 = vmatprep.subr.mxu0 0.0
        %1468 = vmatpush1.msra.mxu0 %v1412
        %1469 = vmatprep.subr.mxu0 0.0
        %1470 = vmatpush1.msra.mxu0 %v1413
        %1471 = vmatprep.subr.mxu0 0.0
        %1472 = vmatpush1.msra.mxu0 %v1414
        %1473 = vmatprep.subr.mxu0 0.0
        %1474 = vmatpush1.msra.mxu0 %v1415
        %1475 = vmatprep.subr.mxu0 0.0
        %1476 = vmatpush1.msra.mxu0 %v1416
        %1477 = vmatprep.subr.mxu0 0.0
        %1478 = vmatpush1.msra.mxu0 %v1417
        %1479 = vmatprep.subr.mxu0 0.0
        %1480 = vmatpush1.msra.mxu0 %v1418
        %1481 = vmatprep.subr.mxu0 0.0
        %1482 = vmatpush1.msra.mxu0 %v1419
        %1483 = vmatprep.subr.mxu0 0.0
        %1484 = vmatpush1.msra.mxu0 %v1420
        %1485 = vmatprep.subr.mxu0 0.0
        %1486 = vmatpush1.msra.mxu0 %v1421
        %1487 = vmatprep.subr.mxu0 0.0
        %1488 = vmatpush1.msra.mxu0 %v1422
        %1489 = vmatprep.subr.mxu0 0.0
        %1490 = vmatpush1.msra.mxu0 %v1423
        %1491 = vmatprep.subr.mxu0 0.0
        %1492 = vmatpush1.msra.mxu0 %v1424
        %1493 = vmatprep.subr.mxu0 0.0
        %1494 = vmatpush1.msra.mxu0 %v1425
        %1495 = vmatprep.subr.mxu0 0.0
        %1496 = vmatpush1.msra.mxu0 %v1426
        %1497 = vmatprep.subr.mxu0 0.0
        %1498 = vmatpush1.msra.mxu0 %v1427
        %1499 = vmatprep.subr.mxu0 0.0
        %1500 = vmatpush1.msra.mxu0 %v1428
        %1501 = vmatprep.subr.mxu0 0.0
        %1502 = vmatpush1.msra.mxu0 %v1429
        %1503 = vmatprep.subr.mxu0 0.0
        %1504 = vmatpush1.msra.mxu0 %v1430
        %1505 = vmatprep.subr.mxu0 0.0
        %1506 = vmatpush1.msra.mxu0 %v1431
        %1507 = vmatprep.subr.mxu0 0.0
        %1508 = vmatpush1.msra.mxu0 %v1432
        %1509 = vmatprep.subr.mxu0 0.0
        %1510 = vmatpush1.msra.mxu0 %v1433
        %1511 = vmatprep.subr.mxu0 0.0
        %1512 = vmatpush1.msra.mxu0 %v1434
        %1513 = vmatprep.subr.mxu0 0.0
        %1514 = vmatpush1.msra.mxu0 %v1435
        %1515 = vmatprep.subr.mxu0 0.0
        %1516 = vmatpush1.msra.mxu0 %v1436
        %1517 = vmatprep.subr.mxu0 0.0
        %1518 = vmatpush1.msra.mxu0 %v1437
        %1519 = vmatprep.subr.mxu0 0.0
        %1520 = vmatpush1.msra.mxu0 %v1438
        %1521 = vmatprep.subr.mxu0 0.0
        %1522 = vmatpush1.msra.mxu0 %v1439
        %1523 = vmatprep.subr.mxu0 0.0
        %1524 = vmatpush1.msra.mxu0 %v1440
        %1525 = vmatprep.mubr.f32.mxu0 %v1452
        %1526 = vmatmul.mubr.f32.gmra.mrb[0].mxu0 %v1449
        %v1527 = vpop.f32.mrb[0].mxu0
        %v1528 = vadd.f32 0.0, %v1527
        %v1529 = vpop.f32.mrb[0].mxu0
        %1530 = vmatprep.mubr.f32.mxu0 %v1456
        %1531 = vmatmul.mubr.f32.gmra.mrb[0].mxu0 %v1454
        %v1532 = vpop.f32.mrb[0].mxu0
        %v1533 = vadd.f32 0.0, %v1532
        %v1534 = vpop.f32.mrb[0].mxu0
        %1535 = vdwg.mxu0
        %v1536 = vadd.f32 %v1400, %v1528
        %v1537 = vadd.f32 %v1401, %v1533
        %v1538 = vld [vmem:[%s277 + $0x10] sm:$0xfc]
        %v1539 = vld [vmem:[%s277 + $0x18] sm:$0xfc]
        %v1540 = vld [vmem:[%s277 + $0x30] sm:$0x3]
        %v1541 = vld [vmem:[%s277 + $0x38] sm:$0x3]
        %s1542 = scalar_lea.vmem [#allocation4], 2304
        %v1543 = vld [vmem:[%s1542] sm:$0xff]
        %v1544 = vld [vmem:[%s1542 + $0x8] sm:$0xff]
        %v1545 = vld [vmem:[%s1542 + $0x10] sm:$0xff]
        %v1546 = vld [vmem:[%s1542 + $0x18] sm:$0xff]
        %v1547 = vld [vmem:[%s1542 + $0x20] sm:$0xff]
        %v1548 = vld [vmem:[%s1542 + $0x28] sm:$0xff]
        %v1549 = vld [vmem:[%s1542 + $0x30] sm:$0xff]
        %v1550 = vld [vmem:[%s1542 + $0x38] sm:$0xff]
        %v1551 = vld [vmem:[%s1542 + $0x40] sm:$0xff]
        %v1552 = vld [vmem:[%s1542 + $0x48] sm:$0xff]
        %v1553 = vld [vmem:[%s1542 + $0x50] sm:$0xff]
        %v1554 = vld [vmem:[%s1542 + $0x58] sm:$0xff]
        %v1555 = vld [vmem:[%s1542 + $0x60] sm:$0xff]
        %v1556 = vld [vmem:[%s1542 + $0x68] sm:$0xff]
        %v1557 = vld [vmem:[%s1542 + $0x70] sm:$0xff]
        %v1558 = vld [vmem:[%s1542 + $0x78] sm:$0xff]
        %v1559 = vld [vmem:[%s1542 + $0x80] sm:$0xff]
        %v1560 = vld [vmem:[%s1542 + $0x88] sm:$0xff]
        %v1561 = vld [vmem:[%s1542 + $0x90] sm:$0xff]
        %v1562 = vld [vmem:[%s1542 + $0x98] sm:$0xff]
        %v1563 = vld [vmem:[%s1542 + $0xa0] sm:$0xff]
        %v1564 = vld [vmem:[%s1542 + $0xa8] sm:$0xff]
        %v1565 = vld [vmem:[%s1542 + $0xb0] sm:$0xff]
        %v1566 = vld [vmem:[%s1542 + $0xb8] sm:$0xff]
        %v1567 = vld [vmem:[%s1542 + $0xc0] sm:$0xff]
        %v1568 = vld [vmem:[%s1542 + $0xc8] sm:$0xff]
        %v1569 = vld [vmem:[%s1542 + $0xd0] sm:$0xff]
        %v1570 = vld [vmem:[%s1542 + $0xd8] sm:$0xff]
        %v1571 = vld [vmem:[%s1542 + $0xe0] sm:$0xff]
        %v1572 = vld [vmem:[%s1542 + $0xe8] sm:$0xff]
        %v1573 = vld [vmem:[%s1542 + $0xf0] sm:$0xff]
        %v1574 = vld [vmem:[%s1542 + $0xf8] sm:$0xff]
        %v1579 = vrot.slane %v1538, 2
        %v1580 = vrot.slane %v1404, 2
        %v1581 = vsel %vm441, %v1579, %v1580
        %v1582 = vrot.slane %v1539, 2
        %v1583 = vrot.slane %v1405, 2
        %v1584 = vsel %vm441, %v1582, %v1583
        %v1585 = vrot.slane %v1540, 2
        %v1586 = vsel %vm441, %v1580, %v1585
        %v1587 = vrot.slane %v1541, 2
        %v1588 = vsel %vm441, %v1583, %v1587
        %1593 = vmatprep.subr.mxu0 0.0
        %1594 = vmatpush1.msra.mxu0 %v1543
        %1595 = vmatprep.subr.mxu0 0.0
        %1596 = vmatpush1.msra.mxu0 %v1544
        %1597 = vmatprep.subr.mxu0 0.0
        %1598 = vmatpush1.msra.mxu0 %v1545
        %1599 = vmatprep.subr.mxu0 0.0
        %1600 = vmatpush1.msra.mxu0 %v1546
        %1601 = vmatprep.subr.mxu0 0.0
        %1602 = vmatpush1.msra.mxu0 %v1547
        %1603 = vmatprep.subr.mxu0 0.0
        %1604 = vmatpush1.msra.mxu0 %v1548
        %1605 = vmatprep.subr.mxu0 0.0
        %1606 = vmatpush1.msra.mxu0 %v1549
        %1607 = vmatprep.subr.mxu0 0.0
        %1608 = vmatpush1.msra.mxu0 %v1550
        %1609 = vmatprep.subr.mxu0 0.0
        %1610 = vmatpush1.msra.mxu0 %v1551
        %1611 = vmatprep.subr.mxu0 0.0
        %1612 = vmatpush1.msra.mxu0 %v1552
        %1613 = vmatprep.subr.mxu0 0.0
        %1614 = vmatpush1.msra.mxu0 %v1553
        %1615 = vmatprep.subr.mxu0 0.0
        %1616 = vmatpush1.msra.mxu0 %v1554
        %1617 = vmatprep.subr.mxu0 0.0
        %1618 = vmatpush1.msra.mxu0 %v1555
        %1619 = vmatprep.subr.mxu0 0.0
        %1620 = vmatpush1.msra.mxu0 %v1556
        %1621 = vmatprep.subr.mxu0 0.0
        %1622 = vmatpush1.msra.mxu0 %v1557
        %1623 = vmatprep.subr.mxu0 0.0
        %1624 = vmatpush1.msra.mxu0 %v1558
        %1625 = vmatprep.subr.mxu0 0.0
        %1626 = vmatpush1.msra.mxu0 %v1559
        %1627 = vmatprep.subr.mxu0 0.0
        %1628 = vmatpush1.msra.mxu0 %v1560
        %1629 = vmatprep.subr.mxu0 0.0
        %1630 = vmatpush1.msra.mxu0 %v1561
        %1631 = vmatprep.subr.mxu0 0.0
        %1632 = vmatpush1.msra.mxu0 %v1562
        %1633 = vmatprep.subr.mxu0 0.0
        %1634 = vmatpush1.msra.mxu0 %v1563
        %1635 = vmatprep.subr.mxu0 0.0
        %1636 = vmatpush1.msra.mxu0 %v1564
        %1637 = vmatprep.subr.mxu0 0.0
        %1638 = vmatpush1.msra.mxu0 %v1565
        %1639 = vmatprep.subr.mxu0 0.0
        %1640 = vmatpush1.msra.mxu0 %v1566
        %1641 = vmatprep.subr.mxu0 0.0
        %1642 = vmatpush1.msra.mxu0 %v1567
        %1643 = vmatprep.subr.mxu0 0.0
        %1644 = vmatpush1.msra.mxu0 %v1568
        %1645 = vmatprep.subr.mxu0 0.0
        %1646 = vmatpush1.msra.mxu0 %v1569
        %1647 = vmatprep.subr.mxu0 0.0
        %1648 = vmatpush1.msra.mxu0 %v1570
        %1649 = vmatprep.subr.mxu0 0.0
        %1650 = vmatpush1.msra.mxu0 %v1571
        %1651 = vmatprep.subr.mxu0 0.0
        %1652 = vmatpush1.msra.mxu0 %v1572
        %1653 = vmatprep.subr.mxu0 0.0
        %1654 = vmatpush1.msra.mxu0 %v1573
        %1655 = vmatprep.subr.mxu0 0.0
        %1656 = vmatpush1.msra.mxu0 %v1574
        %1657 = vmatprep.mubr.f32.mxu0 %v1584
        %1658 = vmatmul.mubr.f32.gmra.mrb[0].mxu0 %v1581
        %v1659 = vpop.f32.mrb[0].mxu0
        %v1660 = vadd.f32 0.0, %v1659
        %v1661 = vpop.f32.mrb[0].mxu0
        %1662 = vmatprep.mubr.f32.mxu0 %v1588
        %1663 = vmatmul.mubr.f32.gmra.mrb[0].mxu0 %v1586
        %v1664 = vpop.f32.mrb[0].mxu0
        %v1665 = vadd.f32 0.0, %v1664
        %v1666 = vpop.f32.mrb[0].mxu0
        %1667 = vdwg.mxu0
        %v1668 = vadd.f32 %v1536, %v1660
        %v1669 = vadd.f32 %v1537, %v1665
        %v1670 = vld [vmem:[%s277 + $0x10] sm:$0xf8]
        %v1671 = vld [vmem:[%s277 + $0x18] sm:$0xf8]
        %v1672 = vld [vmem:[%s277 + $0x30] sm:$0x7]
        %v1673 = vld [vmem:[%s277 + $0x38] sm:$0x7]
        %s1674 = scalar_lea.vmem [#allocation4], 2560
        %v1675 = vld [vmem:[%s1674] sm:$0xff]
        %v1676 = vld [vmem:[%s1674 + $0x8] sm:$0xff]
        %v1677 = vld [vmem:[%s1674 + $0x10] sm:$0xff]
        %v1678 = vld [vmem:[%s1674 + $0x18] sm:$0xff]
        %v1679 = vld [vmem:[%s1674 + $0x20] sm:$0xff]
        %v1680 = vld [vmem:[%s1674 + $0x28] sm:$0xff]
        %v1681 = vld [vmem:[%s1674 + $0x30] sm:$0xff]
        %v1682 = vld [vmem:[%s1674 + $0x38] sm:$0xff]
        %v1683 = vld [vmem:[%s1674 + $0x40] sm:$0xff]
        %v1684 = vld [vmem:[%s1674 + $0x48] sm:$0xff]
        %v1685 = vld [vmem:[%s1674 + $0x50] sm:$0xff]
        %v1686 = vld [vmem:[%s1674 + $0x58] sm:$0xff]
        %v1687 = vld [vmem:[%s1674 + $0x60] sm:$0xff]
        %v1688 = vld [vmem:[%s1674 + $0x68] sm:$0xff]
        %v1689 = vld [vmem:[%s1674 + $0x70] sm:$0xff]
        %v1690 = vld [vmem:[%s1674 + $0x78] sm:$0xff]
        %v1691 = vld [vmem:[%s1674 + $0x80] sm:$0xff]
        %v1692 = vld [vmem:[%s1674 + $0x88] sm:$0xff]
        %v1693 = vld [vmem:[%s1674 + $0x90] sm:$0xff]
        %v1694 = vld [vmem:[%s1674 + $0x98] sm:$0xff]
        %v1695 = vld [vmem:[%s1674 + $0xa0] sm:$0xff]
        %v1696 = vld [vmem:[%s1674 + $0xa8] sm:$0xff]
        %v1697 = vld [vmem:[%s1674 + $0xb0] sm:$0xff]
        %v1698 = vld [vmem:[%s1674 + $0xb8] sm:$0xff]
        %v1699 = vld [vmem:[%s1674 + $0xc0] sm:$0xff]
        %v1700 = vld [vmem:[%s1674 + $0xc8] sm:$0xff]
        %v1701 = vld [vmem:[%s1674 + $0xd0] sm:$0xff]
        %v1702 = vld [vmem:[%s1674 + $0xd8] sm:$0xff]
        %v1703 = vld [vmem:[%s1674 + $0xe0] sm:$0xff]
        %v1704 = vld [vmem:[%s1674 + $0xe8] sm:$0xff]
        %v1705 = vld [vmem:[%s1674 + $0xf0] sm:$0xff]
        %v1706 = vld [vmem:[%s1674 + $0xf8] sm:$0xff]
        %v1711 = vrot.slane %v1670, 3
        %v1712 = vrot.slane %v1404, 3
        %v1713 = vsel %vm666, %v1711, %v1712
        %v1714 = vrot.slane %v1671, 3
        %v1715 = vrot.slane %v1405, 3
        %v1716 = vsel %vm666, %v1714, %v1715
        %v1717 = vrot.slane %v1672, 3
        %v1718 = vsel %vm666, %v1712, %v1717
        %v1719 = vrot.slane %v1673, 3
        %v1720 = vsel %vm666, %v1715, %v1719
        %1725 = vmatprep.subr.mxu0 0.0
        %1726 = vmatpush1.msra.mxu0 %v1675
        %1727 = vmatprep.subr.mxu0 0.0
        %1728 = vmatpush1.msra.mxu0 %v1676
        %1729 = vmatprep.subr.mxu0 0.0
        %1730 = vmatpush1.msra.mxu0 %v1677
        %1731 = vmatprep.subr.mxu0 0.0
        %1732 = vmatpush1.msra.mxu0 %v1678
        %1733 = vmatprep.subr.mxu0 0.0
        %1734 = vmatpush1.msra.mxu0 %v1679
        %1735 = vmatprep.subr.mxu0 0.0
        %1736 = vmatpush1.msra.mxu0 %v1680
        %1737 = vmatprep.subr.mxu0 0.0
        %1738 = vmatpush1.msra.mxu0 %v1681
        %1739 = vmatprep.subr.mxu0 0.0
        %1740 = vmatpush1.msra.mxu0 %v1682
        %1741 = vmatprep.subr.mxu0 0.0
        %1742 = vmatpush1.msra.mxu0 %v1683
        %1743 = vmatprep.subr.mxu0 0.0
        %1744 = vmatpush1.msra.mxu0 %v1684
        %1745 = vmatprep.subr.mxu0 0.0
        %1746 = vmatpush1.msra.mxu0 %v1685
        %1747 = vmatprep.subr.mxu0 0.0
        %1748 = vmatpush1.msra.mxu0 %v1686
        %1749 = vmatprep.subr.mxu0 0.0
        %1750 = vmatpush1.msra.mxu0 %v1687
        %1751 = vmatprep.subr.mxu0 0.0
        %1752 = vmatpush1.msra.mxu0 %v1688
        %1753 = vmatprep.subr.mxu0 0.0
        %1754 = vmatpush1.msra.mxu0 %v1689
        %1755 = vmatprep.subr.mxu0 0.0
        %1756 = vmatpush1.msra.mxu0 %v1690
        %1757 = vmatprep.subr.mxu0 0.0
        %1758 = vmatpush1.msra.mxu0 %v1691
        %1759 = vmatprep.subr.mxu0 0.0
        %1760 = vmatpush1.msra.mxu0 %v1692
        %1761 = vmatprep.subr.mxu0 0.0
        %1762 = vmatpush1.msra.mxu0 %v1693
        %1763 = vmatprep.subr.mxu0 0.0
        %1764 = vmatpush1.msra.mxu0 %v1694
        %1765 = vmatprep.subr.mxu0 0.0
        %1766 = vmatpush1.msra.mxu0 %v1695
        %1767 = vmatprep.subr.mxu0 0.0
        %1768 = vmatpush1.msra.mxu0 %v1696
        %1769 = vmatprep.subr.mxu0 0.0
        %1770 = vmatpush1.msra.mxu0 %v1697
        %1771 = vmatprep.subr.mxu0 0.0
        %1772 = vmatpush1.msra.mxu0 %v1698
        %1773 = vmatprep.subr.mxu0 0.0
        %1774 = vmatpush1.msra.mxu0 %v1699
        %1775 = vmatprep.subr.mxu0 0.0
        %1776 = vmatpush1.msra.mxu0 %v1700
        %1777 = vmatprep.subr.mxu0 0.0
        %1778 = vmatpush1.msra.mxu0 %v1701
        %1779 = vmatprep.subr.mxu0 0.0
        %1780 = vmatpush1.msra.mxu0 %v1702
        %1781 = vmatprep.subr.mxu0 0.0
        %1782 = vmatpush1.msra.mxu0 %v1703
        %1783 = vmatprep.subr.mxu0 0.0
        %1784 = vmatpush1.msra.mxu0 %v1704
        %1785 = vmatprep.subr.mxu0 0.0
        %1786 = vmatpush1.msra.mxu0 %v1705
        %1787 = vmatprep.subr.mxu0 0.0
        %1788 = vmatpush1.msra.mxu0 %v1706
        %1789 = vmatprep.mubr.f32.mxu0 %v1716
        %1790 = vmatmul.mubr.f32.gmra.mrb[0].mxu0 %v1713
        %v1791 = vpop.f32.mrb[0].mxu0
        %v1792 = vadd.f32 0.0, %v1791
        %v1793 = vpop.f32.mrb[0].mxu0
        %1794 = vmatprep.mubr.f32.mxu0 %v1720
        %1795 = vmatmul.mubr.f32.gmra.mrb[0].mxu0 %v1718
        %v1796 = vpop.f32.mrb[0].mxu0
        %v1797 = vadd.f32 0.0, %v1796
        %v1798 = vpop.f32.mrb[0].mxu0
        %1799 = vdwg.mxu0
        %v1800 = vadd.f32 %v1668, %v1792
        %v1801 = vadd.f32 %v1669, %v1797
        %v1802 = vld [vmem:[%s277 + $0x10] sm:$0xf0]
        %v1803 = vld [vmem:[%s277 + $0x18] sm:$0xf0]
        %v1804 = vld [vmem:[%s277 + $0x30] sm:$0xf]
        %v1805 = vld [vmem:[%s277 + $0x38] sm:$0xf]
        %s1806 = scalar_lea.vmem [#allocation4], 2816
        %v1807 = vld [vmem:[%s1806] sm:$0xff]
        %v1808 = vld [vmem:[%s1806 + $0x8] sm:$0xff]
        %v1809 = vld [vmem:[%s1806 + $0x10] sm:$0xff]
        %v1810 = vld [vmem:[%s1806 + $0x18] sm:$0xff]
        %v1811 = vld [vmem:[%s1806 + $0x20] sm:$0xff]
        %v1812 = vld [vmem:[%s1806 + $0x28] sm:$0xff]
        %v1813 = vld [vmem:[%s1806 + $0x30] sm:$0xff]
        %v1814 = vld [vmem:[%s1806 + $0x38] sm:$0xff]
        %v1815 = vld [vmem:[%s1806 + $0x40] sm:$0xff]
        %v1816 = vld [vmem:[%s1806 + $0x48] sm:$0xff]
        %v1817 = vld [vmem:[%s1806 + $0x50] sm:$0xff]
        %v1818 = vld [vmem:[%s1806 + $0x58] sm:$0xff]
        %v1819 = vld [vmem:[%s1806 + $0x60] sm:$0xff]
        %v1820 = vld [vmem:[%s1806 + $0x68] sm:$0xff]
        %v1821 = vld [vmem:[%s1806 + $0x70] sm:$0xff]
        %v1822 = vld [vmem:[%s1806 + $0x78] sm:$0xff]
        %v1823 = vld [vmem:[%s1806 + $0x80] sm:$0xff]
        %v1824 = vld [vmem:[%s1806 + $0x88] sm:$0xff]
        %v1825 = vld [vmem:[%s1806 + $0x90] sm:$0xff]
        %v1826 = vld [vmem:[%s1806 + $0x98] sm:$0xff]
        %v1827 = vld [vmem:[%s1806 + $0xa0] sm:$0xff]
        %v1828 = vld [vmem:[%s1806 + $0xa8] sm:$0xff]
        %v1829 = vld [vmem:[%s1806 + $0xb0] sm:$0xff]
        %v1830 = vld [vmem:[%s1806 + $0xb8] sm:$0xff]
        %v1831 = vld [vmem:[%s1806 + $0xc0] sm:$0xff]
        %v1832 = vld [vmem:[%s1806 + $0xc8] sm:$0xff]
        %v1833 = vld [vmem:[%s1806 + $0xd0] sm:$0xff]
        %v1834 = vld [vmem:[%s1806 + $0xd8] sm:$0xff]
        %v1835 = vld [vmem:[%s1806 + $0xe0] sm:$0xff]
        %v1836 = vld [vmem:[%s1806 + $0xe8] sm:$0xff]
        %v1837 = vld [vmem:[%s1806 + $0xf0] sm:$0xff]
        %v1838 = vld [vmem:[%s1806 + $0xf8] sm:$0xff]
        %v1843 = vrot.slane %v1802, 4
        %v1844 = vrot.slane %v1404, 4
        %v1845 = vsel %vm799, %v1843, %v1844
        %v1846 = vrot.slane %v1803, 4
        %v1847 = vrot.slane %v1405, 4
        %v1848 = vsel %vm799, %v1846, %v1847
        %v1849 = vrot.slane %v1804, 4
        %v1850 = vsel %vm799, %v1844, %v1849
        %v1851 = vrot.slane %v1805, 4
        %v1852 = vsel %vm799, %v1847, %v1851
        %1857 = vmatprep.subr.mxu0 0.0
        %1858 = vmatpush1.msra.mxu0 %v1807
        %1859 = vmatprep.subr.mxu0 0.0
        %1860 = vmatpush1.msra.mxu0 %v1808
        %1861 = vmatprep.subr.mxu0 0.0
        %1862 = vmatpush1.msra.mxu0 %v1809
        %1863 = vmatprep.subr.mxu0 0.0
        %1864 = vmatpush1.msra.mxu0 %v1810
        %1865 = vmatprep.subr.mxu0 0.0
        %1866 = vmatpush1.msra.mxu0 %v1811
        %1867 = vmatprep.subr.mxu0 0.0
        %1868 = vmatpush1.msra.mxu0 %v1812
        %1869 = vmatprep.subr.mxu0 0.0
        %1870 = vmatpush1.msra.mxu0 %v1813
        %1871 = vmatprep.subr.mxu0 0.0
        %1872 = vmatpush1.msra.mxu0 %v1814
        %1873 = vmatprep.subr.mxu0 0.0
        %1874 = vmatpush1.msra.mxu0 %v1815
        %1875 = vmatprep.subr.mxu0 0.0
        %1876 = vmatpush1.msra.mxu0 %v1816
        %1877 = vmatprep.subr.mxu0 0.0
        %1878 = vmatpush1.msra.mxu0 %v1817
        %1879 = vmatprep.subr.mxu0 0.0
        %1880 = vmatpush1.msra.mxu0 %v1818
        %1881 = vmatprep.subr.mxu0 0.0
        %1882 = vmatpush1.msra.mxu0 %v1819
        %1883 = vmatprep.subr.mxu0 0.0
        %1884 = vmatpush1.msra.mxu0 %v1820
        %1885 = vmatprep.subr.mxu0 0.0
        %1886 = vmatpush1.msra.mxu0 %v1821
        %1887 = vmatprep.subr.mxu0 0.0
        %1888 = vmatpush1.msra.mxu0 %v1822
        %1889 = vmatprep.subr.mxu0 0.0
        %1890 = vmatpush1.msra.mxu0 %v1823
        %1891 = vmatprep.subr.mxu0 0.0
        %1892 = vmatpush1.msra.mxu0 %v1824
        %1893 = vmatprep.subr.mxu0 0.0
        %1894 = vmatpush1.msra.mxu0 %v1825
        %1895 = vmatprep.subr.mxu0 0.0
        %1896 = vmatpush1.msra.mxu0 %v1826
        %1897 = vmatprep.subr.mxu0 0.0
        %1898 = vmatpush1.msra.mxu0 %v1827
        %1899 = vmatprep.subr.mxu0 0.0
        %1900 = vmatpush1.msra.mxu0 %v1828
        %1901 = vmatprep.subr.mxu0 0.0
        %1902 = vmatpush1.msra.mxu0 %v1829
        %1903 = vmatprep.subr.mxu0 0.0
        %1904 = vmatpush1.msra.mxu0 %v1830
        %1905 = vmatprep.subr.mxu0 0.0
        %1906 = vmatpush1.msra.mxu0 %v1831
        %1907 = vmatprep.subr.mxu0 0.0
        %1908 = vmatpush1.msra.mxu0 %v1832
        %1909 = vmatprep.subr.mxu0 0.0
        %1910 = vmatpush1.msra.mxu0 %v1833
        %1911 = vmatprep.subr.mxu0 0.0
        %1912 = vmatpush1.msra.mxu0 %v1834
        %1913 = vmatprep.subr.mxu0 0.0
        %1914 = vmatpush1.msra.mxu0 %v1835
        %1915 = vmatprep.subr.mxu0 0.0
        %1916 = vmatpush1.msra.mxu0 %v1836
        %1917 = vmatprep.subr.mxu0 0.0
        %1918 = vmatpush1.msra.mxu0 %v1837
        %1919 = vmatprep.subr.mxu0 0.0
        %1920 = vmatpush1.msra.mxu0 %v1838
        %1921 = vmatprep.mubr.f32.mxu0 %v1848
        %1922 = vmatmul.mubr.f32.gmra.mrb[0].mxu0 %v1845
        %v1923 = vpop.f32.mrb[0].mxu0
        %v1924 = vadd.f32 0.0, %v1923
        %v1925 = vpop.f32.mrb[0].mxu0
        %1926 = vmatprep.mubr.f32.mxu0 %v1852
        %1927 = vmatmul.mubr.f32.gmra.mrb[0].mxu0 %v1850
        %v1928 = vpop.f32.mrb[0].mxu0
        %v1929 = vadd.f32 0.0, %v1928
        %v1930 = vpop.f32.mrb[0].mxu0
        %1931 = vdwg.mxu0
        %v1932 = vadd.f32 %v1800, %v1924
        %v1933 = vadd.f32 %v1801, %v1929
        %v1934 = vld [vmem:[%s277 + $0x10] sm:$0xe0]
        %v1935 = vld [vmem:[%s277 + $0x18] sm:$0xe0]
        %v1936 = vld [vmem:[%s277 + $0x30] sm:$0x1f]
        %v1937 = vld [vmem:[%s277 + $0x38] sm:$0x1f]
        %s1938 = scalar_lea.vmem [#allocation4], 3072
        %v1939 = vld [vmem:[%s1938] sm:$0xff]
        %v1940 = vld [vmem:[%s1938 + $0x8] sm:$0xff]
        %v1941 = vld [vmem:[%s1938 + $0x10] sm:$0xff]
        %v1942 = vld [vmem:[%s1938 + $0x18] sm:$0xff]
        %v1943 = vld [vmem:[%s1938 + $0x20] sm:$0xff]
        %v1944 = vld [vmem:[%s1938 + $0x28] sm:$0xff]
        %v1945 = vld [vmem:[%s1938 + $0x30] sm:$0xff]
        %v1946 = vld [vmem:[%s1938 + $0x38] sm:$0xff]
        %v1947 = vld [vmem:[%s1938 + $0x40] sm:$0xff]
        %v1948 = vld [vmem:[%s1938 + $0x48] sm:$0xff]
        %v1949 = vld [vmem:[%s1938 + $0x50] sm:$0xff]
        %v1950 = vld [vmem:[%s1938 + $0x58] sm:$0xff]
        %v1951 = vld [vmem:[%s1938 + $0x60] sm:$0xff]
        %v1952 = vld [vmem:[%s1938 + $0x68] sm:$0xff]
        %v1953 = vld [vmem:[%s1938 + $0x70] sm:$0xff]
        %v1954 = vld [vmem:[%s1938 + $0x78] sm:$0xff]
        %v1955 = vld [vmem:[%s1938 + $0x80] sm:$0xff]
        %v1956 = vld [vmem:[%s1938 + $0x88] sm:$0xff]
        %v1957 = vld [vmem:[%s1938 + $0x90] sm:$0xff]
        %v1958 = vld [vmem:[%s1938 + $0x98] sm:$0xff]
        %v1959 = vld [vmem:[%s1938 + $0xa0] sm:$0xff]
        %v1960 = vld [vmem:[%s1938 + $0xa8] sm:$0xff]
        %v1961 = vld [vmem:[%s1938 + $0xb0] sm:$0xff]
        %v1962 = vld [vmem:[%s1938 + $0xb8] sm:$0xff]
        %v1963 = vld [vmem:[%s1938 + $0xc0] sm:$0xff]
        %v1964 = vld [vmem:[%s1938 + $0xc8] sm:$0xff]
        %v1965 = vld [vmem:[%s1938 + $0xd0] sm:$0xff]
        %v1966 = vld [vmem:[%s1938 + $0xd8] sm:$0xff]
        %v1967 = vld [vmem:[%s1938 + $0xe0] sm:$0xff]
        %v1968 = vld [vmem:[%s1938 + $0xe8] sm:$0xff]
        %v1969 = vld [vmem:[%s1938 + $0xf0] sm:$0xff]
        %v1970 = vld [vmem:[%s1938 + $0xf8] sm:$0xff]
        %v1975 = vrot.slane %v1934, 5
        %v1976 = vrot.slane %v1404, 5
        %v1977 = vsel %vm932, %v1975, %v1976
        %v1978 = vrot.slane %v1935, 5
        %v1979 = vrot.slane %v1405, 5
        %v1980 = vsel %vm932, %v1978, %v1979
        %v1981 = vrot.slane %v1936, 5
        %v1982 = vsel %vm932, %v1976, %v1981
        %v1983 = vrot.slane %v1937, 5
        %v1984 = vsel %vm932, %v1979, %v1983
        %1989 = vmatprep.subr.mxu0 0.0
        %1990 = vmatpush1.msra.mxu0 %v1939
        %1991 = vmatprep.subr.mxu0 0.0
        %1992 = vmatpush1.msra.mxu0 %v1940
        %1993 = vmatprep.subr.mxu0 0.0
        %1994 = vmatpush1.msra.mxu0 %v1941
        %1995 = vmatprep.subr.mxu0 0.0
        %1996 = vmatpush1.msra.mxu0 %v1942
        %1997 = vmatprep.subr.mxu0 0.0
        %1998 = vmatpush1.msra.mxu0 %v1943
        %1999 = vmatprep.subr.mxu0 0.0
        %2000 = vmatpush1.msra.mxu0 %v1944
        %2001 = vmatprep.subr.mxu0 0.0
        %2002 = vmatpush1.msra.mxu0 %v1945
        %2003 = vmatprep.subr.mxu0 0.0
        %2004 = vmatpush1.msra.mxu0 %v1946
        %2005 = vmatprep.subr.mxu0 0.0
        %2006 = vmatpush1.msra.mxu0 %v1947
        %2007 = vmatprep.subr.mxu0 0.0
        %2008 = vmatpush1.msra.mxu0 %v1948
        %2009 = vmatprep.subr.mxu0 0.0
        %2010 = vmatpush1.msra.mxu0 %v1949
        %2011 = vmatprep.subr.mxu0 0.0
        %2012 = vmatpush1.msra.mxu0 %v1950
        %2013 = vmatprep.subr.mxu0 0.0
        %2014 = vmatpush1.msra.mxu0 %v1951
        %2015 = vmatprep.subr.mxu0 0.0
        %2016 = vmatpush1.msra.mxu0 %v1952
        %2017 = vmatprep.subr.mxu0 0.0
        %2018 = vmatpush1.msra.mxu0 %v1953
        %2019 = vmatprep.subr.mxu0 0.0
        %2020 = vmatpush1.msra.mxu0 %v1954
        %2021 = vmatprep.subr.mxu0 0.0
        %2022 = vmatpush1.msra.mxu0 %v1955
        %2023 = vmatprep.subr.mxu0 0.0
        %2024 = vmatpush1.msra.mxu0 %v1956
        %2025 = vmatprep.subr.mxu0 0.0
        %2026 = vmatpush1.msra.mxu0 %v1957
        %2027 = vmatprep.subr.mxu0 0.0
        %2028 = vmatpush1.msra.mxu0 %v1958
        %2029 = vmatprep.subr.mxu0 0.0
        %2030 = vmatpush1.msra.mxu0 %v1959
        %2031 = vmatprep.subr.mxu0 0.0
        %2032 = vmatpush1.msra.mxu0 %v1960
        %2033 = vmatprep.subr.mxu0 0.0
        %2034 = vmatpush1.msra.mxu0 %v1961
        %2035 = vmatprep.subr.mxu0 0.0
        %2036 = vmatpush1.msra.mxu0 %v1962
        %2037 = vmatprep.subr.mxu0 0.0
        %2038 = vmatpush1.msra.mxu0 %v1963
        %2039 = vmatprep.subr.mxu0 0.0
        %2040 = vmatpush1.msra.mxu0 %v1964
        %2041 = vmatprep.subr.mxu0 0.0
        %2042 = vmatpush1.msra.mxu0 %v1965
        %2043 = vmatprep.subr.mxu0 0.0
        %2044 = vmatpush1.msra.mxu0 %v1966
        %2045 = vmatprep.subr.mxu0 0.0
        %2046 = vmatpush1.msra.mxu0 %v1967
        %2047 = vmatprep.subr.mxu0 0.0
        %2048 = vmatpush1.msra.mxu0 %v1968
        %2049 = vmatprep.subr.mxu0 0.0
        %2050 = vmatpush1.msra.mxu0 %v1969
        %2051 = vmatprep.subr.mxu0 0.0
        %2052 = vmatpush1.msra.mxu0 %v1970
        %2053 = vmatprep.mubr.f32.mxu0 %v1980
        %2054 = vmatmul.mubr.f32.gmra.mrb[0].mxu0 %v1977
        %v2055 = vpop.f32.mrb[0].mxu0
        %v2056 = vadd.f32 0.0, %v2055
        %v2057 = vpop.f32.mrb[0].mxu0
        %2058 = vmatprep.mubr.f32.mxu0 %v1984
        %2059 = vmatmul.mubr.f32.gmra.mrb[0].mxu0 %v1982
        %v2060 = vpop.f32.mrb[0].mxu0
        %v2061 = vadd.f32 0.0, %v2060
        %v2062 = vpop.f32.mrb[0].mxu0
        %2063 = vdwg.mxu0
        %v2064 = vadd.f32 %v1932, %v2056
        %v2065 = vadd.f32 %v1933, %v2061
        %v2066 = vld [vmem:[%s277 + $0x10] sm:$0xc0]
        %v2067 = vld [vmem:[%s277 + $0x18] sm:$0xc0]
        %v2068 = vld [vmem:[%s277 + $0x30] sm:$0x3f]
        %v2069 = vld [vmem:[%s277 + $0x38] sm:$0x3f]
        %s2070 = scalar_lea.vmem [#allocation4], 3328
        %v2071 = vld [vmem:[%s2070] sm:$0xff]
        %v2072 = vld [vmem:[%s2070 + $0x8] sm:$0xff]
        %v2073 = vld [vmem:[%s2070 + $0x10] sm:$0xff]
        %v2074 = vld [vmem:[%s2070 + $0x18] sm:$0xff]
        %v2075 = vld [vmem:[%s2070 + $0x20] sm:$0xff]
        %v2076 = vld [vmem:[%s2070 + $0x28] sm:$0xff]
        %v2077 = vld [vmem:[%s2070 + $0x30] sm:$0xff]
        %v2078 = vld [vmem:[%s2070 + $0x38] sm:$0xff]
        %v2079 = vld [vmem:[%s2070 + $0x40] sm:$0xff]
        %v2080 = vld [vmem:[%s2070 + $0x48] sm:$0xff]
        %v2081 = vld [vmem:[%s2070 + $0x50] sm:$0xff]
        %v2082 = vld [vmem:[%s2070 + $0x58] sm:$0xff]
        %v2083 = vld [vmem:[%s2070 + $0x60] sm:$0xff]
        %v2084 = vld [vmem:[%s2070 + $0x68] sm:$0xff]
        %v2085 = vld [vmem:[%s2070 + $0x70] sm:$0xff]
        %v2086 = vld [vmem:[%s2070 + $0x78] sm:$0xff]
        %v2087 = vld [vmem:[%s2070 + $0x80] sm:$0xff]
        %v2088 = vld [vmem:[%s2070 + $0x88] sm:$0xff]
        %v2089 = vld [vmem:[%s2070 + $0x90] sm:$0xff]
        %v2090 = vld [vmem:[%s2070 + $0x98] sm:$0xff]
        %v2091 = vld [vmem:[%s2070 + $0xa0] sm:$0xff]
        %v2092 = vld [vmem:[%s2070 + $0xa8] sm:$0xff]
        %v2093 = vld [vmem:[%s2070 + $0xb0] sm:$0xff]
        %v2094 = vld [vmem:[%s2070 + $0xb8] sm:$0xff]
        %v2095 = vld [vmem:[%s2070 + $0xc0] sm:$0xff]
        %v2096 = vld [vmem:[%s2070 + $0xc8] sm:$0xff]
        %v2097 = vld [vmem:[%s2070 + $0xd0] sm:$0xff]
        %v2098 = vld [vmem:[%s2070 + $0xd8] sm:$0xff]
        %v2099 = vld [vmem:[%s2070 + $0xe0] sm:$0xff]
        %v2100 = vld [vmem:[%s2070 + $0xe8] sm:$0xff]
        %v2101 = vld [vmem:[%s2070 + $0xf0] sm:$0xff]
        %v2102 = vld [vmem:[%s2070 + $0xf8] sm:$0xff]
        %v2107 = vrot.slane %v2066, 6
        %v2108 = vrot.slane %v1404, 6
        %v2109 = vsel %vm1065, %v2107, %v2108
        %v2110 = vrot.slane %v2067, 6
        %v2111 = vrot.slane %v1405, 6
        %v2112 = vsel %vm1065, %v2110, %v2111
        %v2113 = vrot.slane %v2068, 6
        %v2114 = vsel %vm1065, %v2108, %v2113
        %v2115 = vrot.slane %v2069, 6
        %v2116 = vsel %vm1065, %v2111, %v2115
        %2121 = vmatprep.subr.mxu0 0.0
        %2122 = vmatpush1.msra.mxu0 %v2071
        %2123 = vmatprep.subr.mxu0 0.0
        %2124 = vmatpush1.msra.mxu0 %v2072
        %2125 = vmatprep.subr.mxu0 0.0
        %2126 = vmatpush1.msra.mxu0 %v2073
        %2127 = vmatprep.subr.mxu0 0.0
        %2128 = vmatpush1.msra.mxu0 %v2074
        %2129 = vmatprep.subr.mxu0 0.0
        %2130 = vmatpush1.msra.mxu0 %v2075
        %2131 = vmatprep.subr.mxu0 0.0
        %2132 = vmatpush1.msra.mxu0 %v2076
        %2133 = vmatprep.subr.mxu0 0.0
        %2134 = vmatpush1.msra.mxu0 %v2077
        %2135 = vmatprep.subr.mxu0 0.0
        %2136 = vmatpush1.msra.mxu0 %v2078
        %2137 = vmatprep.subr.mxu0 0.0
        %2138 = vmatpush1.msra.mxu0 %v2079
        %2139 = vmatprep.subr.mxu0 0.0
        %2140 = vmatpush1.msra.mxu0 %v2080
        %2141 = vmatprep.subr.mxu0 0.0
        %2142 = vmatpush1.msra.mxu0 %v2081
        %2143 = vmatprep.subr.mxu0 0.0
        %2144 = vmatpush1.msra.mxu0 %v2082
        %2145 = vmatprep.subr.mxu0 0.0
        %2146 = vmatpush1.msra.mxu0 %v2083
        %2147 = vmatprep.subr.mxu0 0.0
        %2148 = vmatpush1.msra.mxu0 %v2084
        %2149 = vmatprep.subr.mxu0 0.0
        %2150 = vmatpush1.msra.mxu0 %v2085
        %2151 = vmatprep.subr.mxu0 0.0
        %2152 = vmatpush1.msra.mxu0 %v2086
        %2153 = vmatprep.subr.mxu0 0.0
        %2154 = vmatpush1.msra.mxu0 %v2087
        %2155 = vmatprep.subr.mxu0 0.0
        %2156 = vmatpush1.msra.mxu0 %v2088
        %2157 = vmatprep.subr.mxu0 0.0
        %2158 = vmatpush1.msra.mxu0 %v2089
        %2159 = vmatprep.subr.mxu0 0.0
        %2160 = vmatpush1.msra.mxu0 %v2090
        %2161 = vmatprep.subr.mxu0 0.0
        %2162 = vmatpush1.msra.mxu0 %v2091
        %2163 = vmatprep.subr.mxu0 0.0
        %2164 = vmatpush1.msra.mxu0 %v2092
        %2165 = vmatprep.subr.mxu0 0.0
        %2166 = vmatpush1.msra.mxu0 %v2093
        %2167 = vmatprep.subr.mxu0 0.0
        %2168 = vmatpush1.msra.mxu0 %v2094
        %2169 = vmatprep.subr.mxu0 0.0
        %2170 = vmatpush1.msra.mxu0 %v2095
        %2171 = vmatprep.subr.mxu0 0.0
        %2172 = vmatpush1.msra.mxu0 %v2096
        %2173 = vmatprep.subr.mxu0 0.0
        %2174 = vmatpush1.msra.mxu0 %v2097
        %2175 = vmatprep.subr.mxu0 0.0
        %2176 = vmatpush1.msra.mxu0 %v2098
        %2177 = vmatprep.subr.mxu0 0.0
        %2178 = vmatpush1.msra.mxu0 %v2099
        %2179 = vmatprep.subr.mxu0 0.0
        %2180 = vmatpush1.msra.mxu0 %v2100
        %2181 = vmatprep.subr.mxu0 0.0
        %2182 = vmatpush1.msra.mxu0 %v2101
        %2183 = vmatprep.subr.mxu0 0.0
        %2184 = vmatpush1.msra.mxu0 %v2102
        %2185 = vmatprep.mubr.f32.mxu0 %v2112
        %2186 = vmatmul.mubr.f32.gmra.mrb[0].mxu0 %v2109
        %v2187 = vpop.f32.mrb[0].mxu0
        %v2188 = vadd.f32 0.0, %v2187
        %v2189 = vpop.f32.mrb[0].mxu0
        %2190 = vmatprep.mubr.f32.mxu0 %v2116
        %2191 = vmatmul.mubr.f32.gmra.mrb[0].mxu0 %v2114
        %v2192 = vpop.f32.mrb[0].mxu0
        %v2193 = vadd.f32 0.0, %v2192
        %v2194 = vpop.f32.mrb[0].mxu0
        %2195 = vdwg.mxu0
        %v2196 = vadd.f32 %v2064, %v2188
        %v2197 = vadd.f32 %v2065, %v2193
        %v2198 = vld [vmem:[%s277 + $0x10] sm:$0x80]
        %v2199 = vld [vmem:[%s277 + $0x18] sm:$0x80]
        %v2200 = vld [vmem:[%s277 + $0x30] sm:$0x7f]
        %v2201 = vld [vmem:[%s277 + $0x38] sm:$0x7f]
        %s2202 = scalar_lea.vmem [#allocation4], 3584
        %v2203 = vld [vmem:[%s2202] sm:$0xff]
        %v2204 = vld [vmem:[%s2202 + $0x8] sm:$0xff]
        %v2205 = vld [vmem:[%s2202 + $0x10] sm:$0xff]
        %v2206 = vld [vmem:[%s2202 + $0x18] sm:$0xff]
        %v2207 = vld [vmem:[%s2202 + $0x20] sm:$0xff]
        %v2208 = vld [vmem:[%s2202 + $0x28] sm:$0xff]
        %v2209 = vld [vmem:[%s2202 + $0x30] sm:$0xff]
        %v2210 = vld [vmem:[%s2202 + $0x38] sm:$0xff]
        %v2211 = vld [vmem:[%s2202 + $0x40] sm:$0xff]
        %v2212 = vld [vmem:[%s2202 + $0x48] sm:$0xff]
        %v2213 = vld [vmem:[%s2202 + $0x50] sm:$0xff]
        %v2214 = vld [vmem:[%s2202 + $0x58] sm:$0xff]
        %v2215 = vld [vmem:[%s2202 + $0x60] sm:$0xff]
        %v2216 = vld [vmem:[%s2202 + $0x68] sm:$0xff]
        %v2217 = vld [vmem:[%s2202 + $0x70] sm:$0xff]
        %v2218 = vld [vmem:[%s2202 + $0x78] sm:$0xff]
        %v2219 = vld [vmem:[%s2202 + $0x80] sm:$0xff]
        %v2220 = vld [vmem:[%s2202 + $0x88] sm:$0xff]
        %v2221 = vld [vmem:[%s2202 + $0x90] sm:$0xff]
        %v2222 = vld [vmem:[%s2202 + $0x98] sm:$0xff]
        %v2223 = vld [vmem:[%s2202 + $0xa0] sm:$0xff]
        %v2224 = vld [vmem:[%s2202 + $0xa8] sm:$0xff]
        %v2225 = vld [vmem:[%s2202 + $0xb0] sm:$0xff]
        %v2226 = vld [vmem:[%s2202 + $0xb8] sm:$0xff]
        %v2227 = vld [vmem:[%s2202 + $0xc0] sm:$0xff]
        %v2228 = vld [vmem:[%s2202 + $0xc8] sm:$0xff]
        %v2229 = vld [vmem:[%s2202 + $0xd0] sm:$0xff]
        %v2230 = vld [vmem:[%s2202 + $0xd8] sm:$0xff]
        %v2231 = vld [vmem:[%s2202 + $0xe0] sm:$0xff]
        %v2232 = vld [vmem:[%s2202 + $0xe8] sm:$0xff]
        %v2233 = vld [vmem:[%s2202 + $0xf0] sm:$0xff]
        %v2234 = vld [vmem:[%s2202 + $0xf8] sm:$0xff]
        %v2239 = vrot.slane %v2198, 7
        %v2240 = vrot.slane %v1404, 7
        %v2241 = vsel %vm1198, %v2239, %v2240
        %v2242 = vrot.slane %v2199, 7
        %v2243 = vrot.slane %v1405, 7
        %v2244 = vsel %vm1198, %v2242, %v2243
        %v2245 = vrot.slane %v2200, 7
        %v2246 = vsel %vm1198, %v2240, %v2245
        %v2247 = vrot.slane %v2201, 7
        %v2248 = vsel %vm1198, %v2243, %v2247
        %2253 = vmatprep.subr.mxu0 0.0
        %2254 = vmatpush1.msra.mxu0 %v2203
        %2255 = vmatprep.subr.mxu0 0.0
        %2256 = vmatpush1.msra.mxu0 %v2204
        %2257 = vmatprep.subr.mxu0 0.0
        %2258 = vmatpush1.msra.mxu0 %v2205
        %2259 = vmatprep.subr.mxu0 0.0
        %2260 = vmatpush1.msra.mxu0 %v2206
        %2261 = vmatprep.subr.mxu0 0.0
        %2262 = vmatpush1.msra.mxu0 %v2207
        %2263 = vmatprep.subr.mxu0 0.0
        %2264 = vmatpush1.msra.mxu0 %v2208
        %2265 = vmatprep.subr.mxu0 0.0
        %2266 = vmatpush1.msra.mxu0 %v2209
        %2267 = vmatprep.subr.mxu0 0.0
        %2268 = vmatpush1.msra.mxu0 %v2210
        %2269 = vmatprep.subr.mxu0 0.0
        %2270 = vmatpush1.msra.mxu0 %v2211
        %2271 = vmatprep.subr.mxu0 0.0
        %2272 = vmatpush1.msra.mxu0 %v2212
        %2273 = vmatprep.subr.mxu0 0.0
        %2274 = vmatpush1.msra.mxu0 %v2213
        %2275 = vmatprep.subr.mxu0 0.0
        %2276 = vmatpush1.msra.mxu0 %v2214
        %2277 = vmatprep.subr.mxu0 0.0
        %2278 = vmatpush1.msra.mxu0 %v2215
        %2279 = vmatprep.subr.mxu0 0.0
        %2280 = vmatpush1.msra.mxu0 %v2216
        %2281 = vmatprep.subr.mxu0 0.0
        %2282 = vmatpush1.msra.mxu0 %v2217
        %2283 = vmatprep.subr.mxu0 0.0
        %2284 = vmatpush1.msra.mxu0 %v2218
        %2285 = vmatprep.subr.mxu0 0.0
        %2286 = vmatpush1.msra.mxu0 %v2219
        %2287 = vmatprep.subr.mxu0 0.0
        %2288 = vmatpush1.msra.mxu0 %v2220
        %2289 = vmatprep.subr.mxu0 0.0
        %2290 = vmatpush1.msra.mxu0 %v2221
        %2291 = vmatprep.subr.mxu0 0.0
        %2292 = vmatpush1.msra.mxu0 %v2222
        %2293 = vmatprep.subr.mxu0 0.0
        %2294 = vmatpush1.msra.mxu0 %v2223
        %2295 = vmatprep.subr.mxu0 0.0
        %2296 = vmatpush1.msra.mxu0 %v2224
        %2297 = vmatprep.subr.mxu0 0.0
        %2298 = vmatpush1.msra.mxu0 %v2225
        %2299 = vmatprep.subr.mxu0 0.0
        %2300 = vmatpush1.msra.mxu0 %v2226
        %2301 = vmatprep.subr.mxu0 0.0
        %2302 = vmatpush1.msra.mxu0 %v2227
        %2303 = vmatprep.subr.mxu0 0.0
        %2304 = vmatpush1.msra.mxu0 %v2228
        %2305 = vmatprep.subr.mxu0 0.0
        %2306 = vmatpush1.msra.mxu0 %v2229
        %2307 = vmatprep.subr.mxu0 0.0
        %2308 = vmatpush1.msra.mxu0 %v2230
        %2309 = vmatprep.subr.mxu0 0.0
        %2310 = vmatpush1.msra.mxu0 %v2231
        %2311 = vmatprep.subr.mxu0 0.0
        %2312 = vmatpush1.msra.mxu0 %v2232
        %2313 = vmatprep.subr.mxu0 0.0
        %2314 = vmatpush1.msra.mxu0 %v2233
        %2315 = vmatprep.subr.mxu0 0.0
        %2316 = vmatpush1.msra.mxu0 %v2234
        %2317 = vmatprep.mubr.f32.mxu0 %v2244
        %2318 = vmatmul.mubr.f32.gmra.mrb[0].mxu0 %v2241
        %v2319 = vpop.f32.mrb[0].mxu0
        %v2320 = vadd.f32 0.0, %v2319
        %v2321 = vpop.f32.mrb[0].mxu0
        %2322 = vmatprep.mubr.f32.mxu0 %v2248
        %2323 = vmatmul.mubr.f32.gmra.mrb[0].mxu0 %v2246
        %v2324 = vpop.f32.mrb[0].mxu0
        %v2325 = vadd.f32 0.0, %v2324
        %v2326 = vpop.f32.mrb[0].mxu0
        %2327 = vdwg.mxu0
        %v2328 = vadd.f32 %v2196, %v2320
        %v2329 = vadd.f32 %v2197, %v2325
        %2330 = vst [vmem:[%s190] sm:$0xff] %v2328
        %2331 = vst [vmem:[%s190 + $0x8] sm:$0xff] %v2329
        %v2332 = vlaneseq
        %v2333 = vshrl.u32 %v2332, 7
        %v2334 = vadd.s32 %v2333, 8
        %v2335 = vlaneseq
        %v2336 = vand.u32 %v2335, 127
        %s2337 = ssub.s32 16, %s273
        %v2338 = vstv %s2337
        %vm2339 = vcmp.lt.s32.totalorder %v2333, %v2338
        %vm2340 = vcmp.lt.s32.totalorder %v2334, %v2338
        %s2341 = ssub.s32 16, %s274
        %v2342 = vstv %s2341
        %vm2343 = vcmp.lt.s32.totalorder %v2336, %v2342
        %vm2344 = vmand %vm2339, %vm2343
        %vm2345 = vmand %vm2340, %vm2343
        %vm2346 = vcmp.lt.f32.partialorder %v2328, 0.6
        %vm2347 = vcmp.lt.f32.partialorder %v2329, 0.6
        %vm2348 = vmand %vm2344, %vm2346
        %vm2349 = vmand %vm2345, %vm2347
        %v2350 = vsel %vm2348, %v2328, -inf
        %v2351 = vsel %vm2349, %v2329, -inf
        %v2352 = vmax.f32 %v2350, %v2351
        %2353 = vmax.xlane.f32.xlu0 %v2352
        %v2354 = vpop.xlane.xlu0 %2353
        %v2355 = vrot.slane %v2354, 4
        %v2356 = vmax.f32 %v2354, %v2355
        %v2357 = vrot.slane %v2356, 2
        %v2358 = vmax.f32 %v2356, %v2357
        %v2359 = vrot.slane %v2358, 1
        %v2360 = vmax.f32 %v2358, %v2359
        %s2361 = vtos %v2360
        %v2362 = vstv %s2361
        %2363 = vst [vmem:[%s198] sm:$0x1] %v2362
        %s2364 = smul.u32 2, %s22
        %p2365 = scmp.lt.s32.totalorder %s21, 1
        %s2366 = scalar_select %p2365, %s21, 1
        %p2367 = scmp.lt.s32.totalorder %s2364, 1
        %s2368 = scalar_select %p2367, %s2364, 1
        %p2369 = scmp.lt.s32.totalorder %s23, 0
        %s2370 = scalar_select %p2369, %s23, 0
        %s2371 = sadd.s32 %s2370, %s2368
        %s2372 = smul.addr %s2366, 2
        %s2373 = sadd.s32 %s2371, %s2372
        %s2374 = smul.addr %s2373, 8
        %s2375 = scalar_lea.vmem %s2, %s2374
        %s2376 = sadd.s32 %s22, %s23
        %p2377 = scmp.lt.s32.totalorder %s21, 1
        %s2378 = scalar_select %p2377, %s21, 1
        %p2379 = scmp.lt.s32.totalorder %s2376, 0
        %s2380 = scalar_select %p2379, %s2376, 0
        %s2381 = sadd.s32 %s2380, %s2378
        %s2382 = scalar_lea.vmem %s3, %s2381
        // Predicated region
        $region105: #{soft_erosion.1} parent=23 // pred_check
          %p2383 = pneg %p78
        $region106: #{soft_erosion.1} parent=23 // pred_check_branch
          %2385 = sbr.rel (%p2383) target = $region108
        $region107: #{soft_erosion.1} parent=23 // pred_region
          %s2386 = smul.u32 2, %s22
        $region108: #{soft_erosion.1} parent=23 // pred_fallthru
          _
        // Predicated region
        $region109: #{soft_erosion.1} parent=23 // pred_check
          %p2387 = pneg %p108
        $region110: #{soft_erosion.1} parent=23 // pred_check_branch
          %2389 = sbr.rel (%p2387) target = $region112
        $region111: #{soft_erosion.1} parent=23 // pred_region
          %s2390 = sadd.s32 %s22, %s23
        $region112: #{soft_erosion.1} parent=23 // pred_fallthru
          _
      $region24: #{soft_erosion.1} parent=5 // pred_fallthru
        _
      %p2391 = scmp.le.s32.totalorder 2, %s11
      // Predicated region
      $region113: #{soft_erosion.1} parent=5 // pred_check
        %p2392 = pneg %p2391
      $region114: #{soft_erosion.1} parent=5 // pred_check_branch
        %2394 = sbr.rel (%p2392) target = $region116
      $region115: #{soft_erosion.1} parent=5 // pred_region
        %s2395 = ssub.s32 %s11, 2
        // Predicated region
        $region117: #{soft_erosion.1} parent=115 // pred_check
          %p2396 = pneg %p84
        $region118: #{soft_erosion.1} parent=115 // pred_check_branch
          %2398 = sbr.rel (%p2396) target = $region120
        $region119: #{soft_erosion.1} parent=115 // pred_region
          %s2399 = smul.u32 2, %s25
          %p2400 = scmp.lt.s32.totalorder %s24, 1
          %s2401 = scalar_select %p2400, %s24, 1
          %p2402 = scmp.lt.s32.totalorder %s2399, 1
          %s2403 = scalar_select %p2402, %s2399, 1
          %p2404 = scmp.lt.s32.totalorder %s26, 0
          %s2405 = scalar_select %p2404, %s26, 0
          %s2406 = sadd.s32 %s2405, %s2403
          %s2407 = smul.addr %s2401, 2
          %s2408 = sadd.s32 %s2406, %s2407
          %s2409 = smul.addr %s2408, 8
          %s2410 = scalar_lea.vmem %s2, %s2409
        $region120: #{soft_erosion.1} parent=115 // pred_fallthru
          _
        // Predicated region
        $region121: #{soft_erosion.1} parent=115 // pred_check
          %p2411 = pneg %p114
        $region122: #{soft_erosion.1} parent=115 // pred_check_branch
          %2413 = sbr.rel (%p2411) target = $region124
        $region123: #{soft_erosion.1} parent=115 // pred_region
          %s2414 = sadd.s32 %s25, %s26
          %p2415 = scmp.lt.s32.totalorder %s24, 1
          %s2416 = scalar_select %p2415, %s24, 1
          %p2417 = scmp.lt.s32.totalorder %s2414, 0
          %s2418 = scalar_select %p2417, %s2414, 0
          %s2419 = sadd.s32 %s2418, %s2416
          %s2420 = scalar_lea.vmem %s3, %s2419
        $region124: #{soft_erosion.1} parent=115 // pred_fallthru
          _
      $region116: #{soft_erosion.1} parent=5 // pred_fallthru
        _
    $region6: #{soft_erosion.1} parent=1 // loop_footer
      %s15 = sadd.s32 1, %s11
    $region7: #{soft_erosion.1} parent=1 // loop_footer_branch
      %10 = sbr.rel target = $region3
    $region8: #{soft_erosion.1} parent=1 // loop_exit
      _
    %2421 = vsyncpa [#allocation5], 1
    %s2422 = scalar_lea.sflag [#allocation5], 1
    %2423 = vsyncpa %s2422, 1
  %2424 = vsyncmov [#allocation3]
  %s2425 = vpop.sfrf %2424
  %p2426 = scmp.eq.s32.totalorder %s2425, 0
  %p2427 = pneg %p2426
  %2429 = shalt.err (%p2427)
  %s2430 = scalar_lea.sflag [#allocation3], 1
  %2431 = vsyncmov %s2430
  %s2432 = vpop.sfrf %2431
  %p2433 = scmp.eq.s32.totalorder %s2432, 0
  %p2434 = pneg %p2433
  %2436 = shalt.err (%p2434)

</llo_original>
